<compile_context>
chip_gen: v7x
topology: tpu7x:2x2x1
jax: 0.10.0
libtpu: 0.0.40
codegen_flags: <defaults>
</compile_context>

<pallas_src>
import functools

import jax
import jax.numpy as jnp
from jax.experimental import pallas as pl
from jax.experimental.pallas import tpu as pltpu

_EPS = 1e-5  # nn.BatchNorm2d default eps


def _ceil_to(v, m):
    return ((v + m - 1) // m) * m


def _pick_tile_rows(ho, wq, ci8, co8, budget_bytes=4 << 20):
    """Largest divisor of `ho` (pooled rows per tile) whose blocks fit a VMEM budget."""
    per_col = 4 * ci8 * 2 + co8 * (2 + 4 + 4) + 8  # x(bf16) + pooled(bf16) + out(f32) + acc(f32)
    max_cols = max(2 * wq, budget_bytes // per_col)
    best = 1
    for tho in range(1, ho + 1):
        if ho % tho == 0 and (tho + 1) * wq <= max_cols:
            best = tho
    return best


def _conv_pool_stats_kernel(x_ref, w_ref, b_ref, mask_ref,
                            pool_ref, sum_ref, ssq_ref, acc_ref, *, wq, ci8):
    """Pass 1: 3x3 conv (bf16 MXU, in-kernel im2col over parity planes) + 2x2 avg pool
    + per-tile BN batch-stat partials.

    x_ref    : (4*Ci8, Lin) bf16   4 parity planes stacked in sublanes; flattened
                                   (plane_row, plane_col) in lanes, row stride = wq.
    w_ref    : (9, Co8, Ci8) bf16  conv weights, tap-major leading dim (kh*3 + kw).
    b_ref    : (Co8, 1) f32        conv bias.
    mask_ref : (1, Lout) f32       1.0 on valid pooled positions, 0.0 on pad/garbage lanes.
    pool_ref : (Co8, Lout) bf16    pooled (pre-BN) conv output for this tile.
    sum_ref  : (Co8, 1) f32        per-tile sum of the bias-free pre-pool conv output.
    ssq_ref  : (Co8, 1) f32        per-tile sum of squares (bias-free).
    acc_ref  : (Co8, Lout) f32     scratch pooled-sum accumulator.
    """
    co8, l_out = acc_ref.shape
    x = x_ref[...]
    mask = mask_ref[...]

    # In-kernel im2col: the 16 distinct shifted parity-plane slabs, hoisted out of the
    # pool-offset / tap loops.  Static lane-offset slices (no HBM patch materialization).
    slabs = {}
    for a in (0, 1):
        for b in (0, 1):
            xs = x[:, a * wq + b: a * wq + b + l_out]           # (4*Ci8, Lout)
            for q in range(4):
                slabs[(q, a, b)] = xs[q * ci8:(q + 1) * ci8, :]  # (Ci8, Lout), aligned

    ssq = jnp.zeros((co8, 1), jnp.float32)
    for p, (dh, dw) in enumerate(((0, 0), (0, 1), (1, 0), (1, 1))):  # 2x2 pool offsets
        y = jnp.zeros((co8, l_out), jnp.float32)
        for kh in range(3):
            for kw in range(3):
                rp, cp = dh + kh, dw + kw
                slab = slabs[((rp % 2) * 2 + (cp % 2), rp // 2, cp // 2)]
                # bf16 x bf16 MXU matmul, f32 accumulation.
                y = y + jnp.dot(w_ref[kh * 3 + kw], slab,
                                preferred_element_type=jnp.float32)
        if p == 0:
            acc_ref[...] = y
        else:
            acc_ref[...] += y
        ssq = ssq + jnp.sum((y * y) * mask, axis=1, keepdims=True)

    acc = acc_ref[...]
    # Per-channel sum hoisted out of the pool-offset loop: a single lane (XLU) reduction.
    sum_ref[...] = jnp.sum(acc * mask, axis=1, keepdims=True)
    ssq_ref[...] = ssq
    # Bias added once at the end (stats are kept bias-free -> less cancellation in E[y^2]-E[y]^2).
    pool_ref[...] = (acc * 0.25 + b_ref[...]).astype(pool_ref.dtype)


def _bn_relu_kernel(pool_ref, scale_ref, shift_ref, o_ref):
    """Pass 2: training-mode BN affine (precomputed scale/shift) + ReLU. Pure elementwise."""
    y = pool_ref[...].astype(jnp.float32) * scale_ref[...] + shift_ref[...]
    o_ref[...] = jnp.maximum(y, 0.0)


@jax.jit
def conv_block_bbox(x_nchw, w_oihw, bias, gamma, beta):
    """PyTorch-equivalent forward.  x: NCHW, w: OIHW (out_c, in_c, 3, 3)."""
    N, Cin, H, W = x_nchw.shape
    Cout = w_oihw.shape[0]
    assert H % 2 == 0 and W % 2 == 0
    Ho, Wo = H // 2, W // 2
    Wq = Wo + 1                           # parity-plane width (incl. 1-col halo)
    Ci8 = _ceil_to(Cin, 8)
    Co8 = _ceil_to(Cout, 8)

    THo = _pick_tile_rows(Ho, Wq, Ci8, Co8)   # pooled rows per tile
    JH = Ho // THo
    Lout = _ceil_to(THo * Wq, 128)            # pooled lane columns carried per tile
    Lin = _ceil_to(Lout + Wq + 1, 128)        # input plane columns (covers max slab shift)

    # ---- layout plumbing: pad + space-to-depth permute (no im2col blow-up), bf16 ----
    xp = jnp.pad(x_nchw.astype(jnp.float32),
                 ((0, 0), (0, Ci8 - Cin), (1, 1), (1, 1)))           # (N, Ci8, H+2, W+2)
    xq = xp.reshape(N, Ci8, Ho + 1, 2, Wq, 2).transpose(0, 3, 5, 1, 2, 4)
    planes = xq.reshape(N, 4 * Ci8, Ho + 1, Wq)                      # plane q = pr*2 + pc
    if JH == 1:
        tiles = planes[:, None]
    else:  # 1-plane-row halo per row tile (duplication factor 1/THo)
        tiles = jnp.stack(
            [planes[:, :, j * THo: j * THo + THo + 1, :] for j in range(JH)], axis=1)
    tiles = tiles.reshape(N, JH, 4 * Ci8, (THo + 1) * Wq)
    tiles = jnp.pad(tiles, ((0, 0), (0, 0), (0, 0), (0, Lin - (THo + 1) * Wq)))
    tiles = tiles.astype(jnp.bfloat16)

    w_k = jnp.pad(w_oihw.astype(jnp.float32),
                  ((0, Co8 - Cout), (0, Ci8 - Cin), (0, 0), (0, 0)))
    w_k = w_k.transpose(2, 3, 0, 1).reshape(9, Co8, Ci8).astype(jnp.bfloat16)

    def _col(v):
        return jnp.pad(v.astype(jnp.float32), (0, Co8 - Cout)).reshape(Co8, 1)

    b_k, g_k, bt_k = _col(bias), _col(gamma), _col(beta)

    cols = jnp.arange(Lout)
    mask = ((cols < THo * Wq) & (cols % Wq < Wo)).astype(jnp.float32).reshape(1, Lout)

    # ---- pass 1: conv (MXU) + 2x2 avg pool + per-tile BN stat partials ----
    kern1 = functools.partial(_conv_pool_stats_kernel, wq=Wq, ci8=Ci8)
    pooled, psum, pssq = pl.pallas_call(
        kern1,
        grid=(N, JH),
        in_specs=[
            pl.BlockSpec((None, None, 4 * Ci8, Lin), lambda n, j: (n, j, 0, 0)),
            pl.BlockSpec((9, Co8, Ci8), lambda n, j: (0, 0, 0)),
            pl.BlockSpec((Co8, 1), lambda n, j: (0, 0)),
            pl.BlockSpec((1, Lout), lambda n, j: (0, 0)),
        ],
        out_specs=(
            pl.BlockSpec((None, None, Co8, Lout), lambda n, j: (n, j, 0, 0)),
            pl.BlockSpec((None, None, Co8, 1), lambda n, j: (n, j, 0, 0)),
            pl.BlockSpec((None, None, Co8, 1), lambda n, j: (n, j, 0, 0)),
        ),
        out_shape=(
            jax.ShapeDtypeStruct((N, JH, Co8, Lout), jnp.bfloat16),
            jax.ShapeDtypeStruct((N, JH, Co8, 1), jnp.float32),
            jax.ShapeDtypeStruct((N, JH, Co8, 1), jnp.float32),
        ),
        scratch_shapes=[pltpu.VMEM((Co8, Lout), jnp.float32)],
        compiler_params=pltpu.CompilerParams(
            dimension_semantics=("parallel", "parallel")),  # per-tile partial stats
    )(tiles, w_k, b_k, mask)

    # ---- tiny BN stat reduction + scale/shift, once, in plain JAX ----
    count = float(N * H * W)
    mean0 = jnp.sum(psum, axis=(0, 1)) / count                       # bias-free mean
    var = jnp.maximum(jnp.sum(pssq, axis=(0, 1)) / count - mean0 * mean0, 0.0)
    mean = mean0 + b_k
    scale = g_k * jax.lax.rsqrt(var + _EPS)
    shift = bt_k - mean * scale
    # (Avg-pool commutes with the per-channel BN affine, so BN applied after the pool is
    #  mathematically identical to the PyTorch conv->BN->pool ordering.)

    # ---- pass 2: BN affine + ReLU (independent tiles -> megacore on v7x) ----
    out4 = pl.pallas_call(
        _bn_relu_kernel,
        grid=(N, JH),
        in_specs=[
            pl.BlockSpec((None, None, Co8, Lout), lambda n, j: (n, j, 0, 0)),
            pl.BlockSpec((Co8, 1), lambda n, j: (0, 0)),
            pl.BlockSpec((Co8, 1), lambda n, j: (0, 0)),
        ],
        out_specs=pl.BlockSpec((None, None, Co8, Lout), lambda n, j: (n, j, 0, 0)),
        out_shape=jax.ShapeDtypeStruct((N, JH, Co8, Lout), jnp.float32),
        compiler_params=pltpu.CompilerParams(
            dimension_semantics=("parallel", "parallel")),
    )(pooled, scale, shift)

    # ---- unpad / re-layout to NCHW (single small XLA pass over the final output) ----
    out = out4[:, :, :Cout, :THo * Wq].reshape(N, JH, Cout, THo, Wq)[..., :Wo]
    return out.transpose(0, 2, 1, 3, 4).reshape(N, Cout, Ho, Wo)


def _reference(x, w, b, gamma, beta):
    """Pure-JAX reference mirroring the PyTorch forward (training-mode BN)."""
    y = jax.lax.conv_general_dilated(
        x, w, window_strides=(1, 1), padding=((1, 1), (1, 1)),
        dimension_numbers=("NCHW", "OIHW", "NCHW"),
        precision=jax.lax.Precision.HIGHEST)
    y = y + b[None, :, None, None]
    mean = jnp.mean(y, axis=(0, 2, 3), keepdims=True)
    var = jnp.mean((y - mean) ** 2, axis=(0, 2, 3), keepdims=True)
    y = (y - mean) * jax.lax.rsqrt(var + _EPS)
    y = y * gamma[None, :, None, None] + beta[None, :, None, None]
    N, C, H, W = y.shape
    y = y.reshape(N, C, H // 2, 2, W // 2, 2).mean(axis=(3, 5))
    return jnp.maximum(y, 0.0)


if __name__ == "__main__":
    N, Cin, H, W, Cout = 2, 4, 16, 16, 8

    key = jax.random.PRNGKey(0)
    kx, kw, kb = jax.random.split(key, 3)

    x = jax.random.normal(kx, (N, Cin, H, W), dtype=jnp.float32)

    # Deterministic synthetic parameters (shapes match nn.Conv2d(in_c, out_c, 3, padding=1)
    # and nn.BatchNorm2d(out_c) right after __init__).
    fan_in = Cin * 3 * 3
    bound = 1.0 / (fan_in ** 0.5)
    w = jax.random.uniform(kw, (Cout, Cin, 3, 3), jnp.float32, -bound, bound)
    b = jax.random.uniform(kb, (Cout,), jnp.float32, -bound, bound)
    gamma = jnp.ones((Cout,), jnp.float32)   # BN weight init
    beta = jnp.zeros((Cout,), jnp.float32)   # BN bias init

    out = conv_block_bbox(x, w, b, gamma, beta)
    out = jax.block_until_ready(out)

    ref = _reference(x, w, b, gamma, beta)
    assert out.shape == (N, Cout, H // 2, W // 2), out.shape
    # Tolerance absorbs bf16 MXU operands + bf16 pooled intermediate vs. the f32 reference.
    err = float(jnp.max(jnp.abs(out - ref)))
    assert jnp.allclose(out, ref, rtol=2e-2, atol=2e-2), err

    print("KERNEL_OK")
</pallas_src>

<mosaic_0001>
module attributes {stable_mosaic.version = 11 : i64} {
  func.func @_bn_relu_kernel(%arg0: i32, %arg1: i32, %arg2: memref<1x1x8x128xbf16, #tpu.memory_space<vmem>>, %arg3: memref<8x1xf32, #tpu.memory_space<vmem>>, %arg4: memref<8x1xf32, #tpu.memory_space<vmem>>, %arg5: memref<1x1x8x128xf32, #tpu.memory_space<vmem>>) attributes {dimension_semantics = [#tpu.dimension_semantics<parallel>, #tpu.dimension_semantics<parallel>], iteration_bounds = array<i64: 2, 1>, scalar_prefetch = 0 : i64, scratch_operands = 0 : i64, tpu.core_type = #tpu.core_type<tc>, window_params = [{transform_indices = @transform_0, window_bounds = array<i64: 1, 1, 8, 128>}, {pipeline_mode = #tpu.pipeline_mode<synchronous>, transform_indices = @transform_1, window_bounds = array<i64: 8, 1>}, {pipeline_mode = #tpu.pipeline_mode<synchronous>, transform_indices = @transform_2, window_bounds = array<i64: 8, 1>}, {transform_indices = @transform_3, window_bounds = array<i64: 1, 1, 8, 128>}]} {
    %c0 = arith.constant 0 : index
    %c0_0 = arith.constant 0 : index
    %c0_1 = arith.constant 0 : index
    %c0_2 = arith.constant 0 : index
    %0 = vector.load %arg2[%c0, %c0_0, %c0_1, %c0_2] : memref<1x1x8x128xbf16, #tpu.memory_space<vmem>>, vector<1x1x8x128xbf16>
    %1 = vector.shape_cast %0 : vector<1x1x8x128xbf16> to vector<8x128xbf16>
    %2 = arith.extf %1 : vector<8x128xbf16> to vector<8x128xf32>
    %c0_3 = arith.constant 0 : index
    %c0_4 = arith.constant 0 : index
    %3 = vector.load %arg3[%c0_3, %c0_4] : memref<8x1xf32, #tpu.memory_space<vmem>>, vector<8x1xf32>
    %4 = vector.broadcast %3 : vector<8x1xf32> to vector<8x128xf32>
    %5 = arith.mulf %2, %4 : vector<8x128xf32>
    %c0_5 = arith.constant 0 : index
    %c0_6 = arith.constant 0 : index
    %6 = vector.load %arg4[%c0_5, %c0_6] : memref<8x1xf32, #tpu.memory_space<vmem>>, vector<8x1xf32>
    %7 = vector.broadcast %6 : vector<8x1xf32> to vector<8x128xf32>
    %8 = arith.addf %5, %7 : vector<8x128xf32>
    %cst = arith.constant 0.000000e+00 : f32
    %9 = vector.broadcast %cst : f32 to vector<8x128xf32>
    %10 = arith.maximumf %8, %9 : vector<8x128xf32>
    %c0_7 = arith.constant 0 : index
    %c0_8 = arith.constant 0 : index
    %c0_9 = arith.constant 0 : index
    %c0_10 = arith.constant 0 : index
    %11 = vector.load %arg5[%c0_7, %c0_8, %c0_9, %c0_10] : memref<1x1x8x128xf32, #tpu.memory_space<vmem>>, vector<1x1x8x128xf32>
    %12 = vector.shape_cast %11 : vector<1x1x8x128xf32> to vector<8x128xf32>
    %13 = vector.shape_cast %10 : vector<8x128xf32> to vector<1x1x8x128xf32>
    tpu.vector_store %arg5[%c0_7, %c0_8, %c0_9, %c0_10], %13 {strides = array<i32>} : memref<1x1x8x128xf32, #tpu.memory_space<vmem>>, vector<1x1x8x128xf32>,
    return
  }
  func.func @transform_0(%arg0: i32, %arg1: i32) -> (i32, i32, i32, i32) {
    %c0_i32 = arith.constant 0 : i32
    %c0_i32_0 = arith.constant 0 : i32
    %c0_i32_1 = arith.constant 0 : i32
    return %arg0, %arg1, %c0_i32, %c0_i32_0 : i32, i32, i32, i32
  }
  func.func @transform_1(%arg0: i32, %arg1: i32) -> (i32, i32) {
    %c0_i32 = arith.constant 0 : i32
    %c0_i32_0 = arith.constant 0 : i32
    %c0_i32_1 = arith.constant 0 : i32
    return %c0_i32, %c0_i32_0 : i32, i32
  }
  func.func @transform_2(%arg0: i32, %arg1: i32) -> (i32, i32) {
    %c0_i32 = arith.constant 0 : i32
    %c0_i32_0 = arith.constant 0 : i32
    %c0_i32_1 = arith.constant 0 : i32
    return %c0_i32, %c0_i32_0 : i32, i32
  }
  func.func @transform_3(%arg0: i32, %arg1: i32) -> (i32, i32, i32, i32) {
    %c0_i32 = arith.constant 0 : i32
    %c0_i32_0 = arith.constant 0 : i32
    %c0_i32_1 = arith.constant 0 : i32
    return %arg0, %arg1, %c0_i32, %c0_i32_0 : i32, i32, i32, i32
  }
}

module attributes {stable_mosaic.version = 11 : i64} {
  func.func @_conv_pool_stats_kernel(%arg0: i32, %arg1: i32, %arg2: memref<1x1x32x256xbf16, #tpu.memory_space<vmem>>, %arg3: memref<9x8x8xbf16, #tpu.memory_space<vmem>>, %arg4: memref<8x1xf32, #tpu.memory_space<vmem>>, %arg5: memref<1x128xf32, #tpu.memory_space<vmem>>, %arg6: memref<1x1x8x128xbf16, #tpu.memory_space<vmem>>, %arg7: memref<1x1x8x1xf32, #tpu.memory_space<vmem>>, %arg8: memref<1x1x8x1xf32, #tpu.memory_space<vmem>>, %arg9: memref<8x128xf32, #tpu.memory_space<vmem>>) attributes {dimension_semantics = [#tpu.dimension_semantics<parallel>, #tpu.dimension_semantics<parallel>], iteration_bounds = array<i64: 2, 1>, scalar_prefetch = 0 : i64, scratch_operands = 1 : i64, tpu.core_type = #tpu.core_type<tc>, window_params = [{transform_indices = @transform_0, window_bounds = array<i64: 1, 1, 32, 256>}, {pipeline_mode = #tpu.pipeline_mode<synchronous>, transform_indices = @transform_1, window_bounds = array<i64: 9, 8, 8>}, {pipeline_mode = #tpu.pipeline_mode<synchronous>, transform_indices = @transform_2, window_bounds = array<i64: 8, 1>}, {pipeline_mode = #tpu.pipeline_mode<synchronous>, transform_indices = @transform_3, window_bounds = array<i64: 1, 128>}, {transform_indices = @transform_4, window_bounds = array<i64: 1, 1, 8, 128>}, {transform_indices = @transform_5, window_bounds = array<i64: 1, 1, 8, 1>}, {transform_indices = @transform_6, window_bounds = array<i64: 1, 1, 8, 1>}]} {
    %c0 = arith.constant 0 : index
    %c0_0 = arith.constant 0 : index
    %c0_1 = arith.constant 0 : index
    %c0_2 = arith.constant 0 : index
    %0 = vector.load %arg2[%c0, %c0_0, %c0_1, %c0_2] : memref<1x1x32x256xbf16, #tpu.memory_space<vmem>>, vector<1x1x32x256xbf16>
    %1 = vector.shape_cast %0 : vector<1x1x32x256xbf16> to vector<32x256xbf16>
    %c0_3 = arith.constant 0 : index
    %c0_4 = arith.constant 0 : index
    %2 = vector.load %arg5[%c0_3, %c0_4] : memref<1x128xf32, #tpu.memory_space<vmem>>, vector<1x128xf32>
    %3 = vector.extract_strided_slice %1 {offsets = [0, 0], sizes = [32, 128], strides = [1, 1]} : vector<32x256xbf16> to vector<32x128xbf16>
    %4 = vector.extract_strided_slice %3 {offsets = [0, 0], sizes = [8, 128], strides = [1, 1]} : vector<32x128xbf16> to vector<8x128xbf16>
    %5 = vector.extract_strided_slice %3 {offsets = [8, 0], sizes = [8, 128], strides = [1, 1]} : vector<32x128xbf16> to vector<8x128xbf16>
    %6 = vector.extract_strided_slice %3 {offsets = [16, 0], sizes = [8, 128], strides = [1, 1]} : vector<32x128xbf16> to vector<8x128xbf16>
    %7 = vector.extract_strided_slice %3 {offsets = [24, 0], sizes = [8, 128], strides = [1, 1]} : vector<32x128xbf16> to vector<8x128xbf16>
    %8 = vector.extract_strided_slice %1 {offsets = [0, 1], sizes = [32, 128], strides = [1, 1]} : vector<32x256xbf16> to vector<32x128xbf16>
    %9 = vector.extract_strided_slice %8 {offsets = [0, 0], sizes = [8, 128], strides = [1, 1]} : vector<32x128xbf16> to vector<8x128xbf16>
    %10 = vector.extract_strided_slice %8 {offsets = [8, 0], sizes = [8, 128], strides = [1, 1]} : vector<32x128xbf16> to vector<8x128xbf16>
    %11 = vector.extract_strided_slice %8 {offsets = [16, 0], sizes = [8, 128], strides = [1, 1]} : vector<32x128xbf16> to vector<8x128xbf16>
    %12 = vector.extract_strided_slice %8 {offsets = [24, 0], sizes = [8, 128], strides = [1, 1]} : vector<32x128xbf16> to vector<8x128xbf16>
    %13 = vector.extract_strided_slice %1 {offsets = [0, 9], sizes = [32, 128], strides = [1, 1]} : vector<32x256xbf16> to vector<32x128xbf16>
    %14 = vector.extract_strided_slice %13 {offsets = [0, 0], sizes = [8, 128], strides = [1, 1]} : vector<32x128xbf16> to vector<8x128xbf16>
    %15 = vector.extract_strided_slice %13 {offsets = [8, 0], sizes = [8, 128], strides = [1, 1]} : vector<32x128xbf16> to vector<8x128xbf16>
    %16 = vector.extract_strided_slice %13 {offsets = [16, 0], sizes = [8, 128], strides = [1, 1]} : vector<32x128xbf16> to vector<8x128xbf16>
    %17 = vector.extract_strided_slice %13 {offsets = [24, 0], sizes = [8, 128], strides = [1, 1]} : vector<32x128xbf16> to vector<8x128xbf16>
    %18 = vector.extract_strided_slice %1 {offsets = [0, 10], sizes = [32, 128], strides = [1, 1]} : vector<32x256xbf16> to vector<32x128xbf16>
    %19 = vector.extract_strided_slice %18 {offsets = [0, 0], sizes = [8, 128], strides = [1, 1]} : vector<32x128xbf16> to vector<8x128xbf16>
    %20 = vector.extract_strided_slice %18 {offsets = [8, 0], sizes = [8, 128], strides = [1, 1]} : vector<32x128xbf16> to vector<8x128xbf16>
    %21 = vector.extract_strided_slice %18 {offsets = [16, 0], sizes = [8, 128], strides = [1, 1]} : vector<32x128xbf16> to vector<8x128xbf16>
    %22 = vector.extract_strided_slice %18 {offsets = [24, 0], sizes = [8, 128], strides = [1, 1]} : vector<32x128xbf16> to vector<8x128xbf16>
    %cst = arith.constant 0.000000e+00 : f32
    %23 = vector.broadcast %cst : f32 to vector<8x1xf32>
    %cst_5 = arith.constant 0.000000e+00 : f32
    %24 = vector.broadcast %cst_5 : f32 to vector<8x128xf32>
    %c0_6 = arith.constant 0 : index
    %c0_7 = arith.constant 0 : index
    %c0_8 = arith.constant 0 : index
    %25 = vector.load %arg3[%c0_6, %c0_7, %c0_8] : memref<9x8x8xbf16, #tpu.memory_space<vmem>>, vector<1x8x8xbf16>
    %26 = vector.shape_cast %25 : vector<1x8x8xbf16> to vector<8x8xbf16>
    %cst_9 = arith.constant dense<0.000000e+00> : vector<8x128xf32>
    %27 = tpu.matmul %26, %4, %cst_9 {dimension_numbers = #tpu.dot_dimension_numbers<[1], [0], [0], [1], [0, 0, 1, 1], [], []>} : vector<8x8xbf16>, vector<8x128xbf16>, vector<8x128xf32> -> vector<8x128xf32>
    %28 = arith.addf %24, %27 : vector<8x128xf32>
    %c1 = arith.constant 1 : index
    %c0_10 = arith.constant 0 : index
    %c0_11 = arith.constant 0 : index
    %29 = vector.load %arg3[%c1, %c0_10, %c0_11] : memref<9x8x8xbf16, #tpu.memory_space<vmem>>, vector<1x8x8xbf16>
    %30 = vector.shape_cast %29 : vector<1x8x8xbf16> to vector<8x8xbf16>
    %cst_12 = arith.constant dense<0.000000e+00> : vector<8x128xf32>
    %31 = tpu.matmul %30, %5, %cst_12 {dimension_numbers = #tpu.dot_dimension_numbers<[1], [0], [0], [1], [0, 0, 1, 1], [], []>} : vector<8x8xbf16>, vector<8x128xbf16>, vector<8x128xf32> -> vector<8x128xf32>
    %32 = arith.addf %28, %31 : vector<8x128xf32>
    %c2 = arith.constant 2 : index
    %c0_13 = arith.constant 0 : index
    %c0_14 = arith.constant 0 : index
    %33 = vector.load %arg3[%c2, %c0_13, %c0_14] : memref<9x8x8xbf16, #tpu.memory_space<vmem>>, vector<1x8x8xbf16>
    %34 = vector.shape_cast %33 : vector<1x8x8xbf16> to vector<8x8xbf16>
    %cst_15 = arith.constant dense<0.000000e+00> : vector<8x128xf32>
    %35 = tpu.matmul %34, %9, %cst_15 {dimension_numbers = #tpu.dot_dimension_numbers<[1], [0], [0], [1], [0, 0, 1, 1], [], []>} : vector<8x8xbf16>, vector<8x128xbf16>, vector<8x128xf32> -> vector<8x128xf32>
    %36 = arith.addf %32, %35 : vector<8x128xf32>
    %c3 = arith.constant 3 : index
    %c0_16 = arith.constant 0 : index
    %c0_17 = arith.constant 0 : index
    %37 = vector.load %arg3[%c3, %c0_16, %c0_17] : memref<9x8x8xbf16, #tpu.memory_space<vmem>>, vector<1x8x8xbf16>
    %38 = vector.shape_cast %37 : vector<1x8x8xbf16> to vector<8x8xbf16>
    %cst_18 = arith.constant dense<0.000000e+00> : vector<8x128xf32>
    %39 = tpu.matmul %38, %6, %cst_18 {dimension_numbers = #tpu.dot_dimension_numbers<[1], [0], [0], [1], [0, 0, 1, 1], [], []>} : vector<8x8xbf16>, vector<8x128xbf16>, vector<8x128xf32> -> vector<8x128xf32>
    %40 = arith.addf %36, %39 : vector<8x128xf32>
    %c4 = arith.constant 4 : index
    %c0_19 = arith.constant 0 : index
    %c0_20 = arith.constant 0 : index
    %41 = vector.load %arg3[%c4, %c0_19, %c0_20] : memref<9x8x8xbf16, #tpu.memory_space<vmem>>, vector<1x8x8xbf16>
    %42 = vector.shape_cast %41 : vector<1x8x8xbf16> to vector<8x8xbf16>
    %cst_21 = arith.constant dense<0.000000e+00> : vector<8x128xf32>
    %43 = tpu.matmul %42, %7, %cst_21 {dimension_numbers = #tpu.dot_dimension_numbers<[1], [0], [0], [1], [0, 0, 1, 1], [], []>} : vector<8x8xbf16>, vector<8x128xbf16>, vector<8x128xf32> -> vector<8x128xf32>
    %44 = arith.addf %40, %43 : vector<8x128xf32>
    %c5 = arith.constant 5 : index
    %c0_22 = arith.constant 0 : index
    %c0_23 = arith.constant 0 : index
    %45 = vector.load %arg3[%c5, %c0_22, %c0_23] : memref<9x8x8xbf16, #tpu.memory_space<vmem>>, vector<1x8x8xbf16>
    %46 = vector.shape_cast %45 : vector<1x8x8xbf16> to vector<8x8xbf16>
    %cst_24 = arith.constant dense<0.000000e+00> : vector<8x128xf32>
    %47 = tpu.matmul %46, %11, %cst_24 {dimension_numbers = #tpu.dot_dimension_numbers<[1], [0], [0], [1], [0, 0, 1, 1], [], []>} : vector<8x8xbf16>, vector<8x128xbf16>, vector<8x128xf32> -> vector<8x128xf32>
    %48 = arith.addf %44, %47 : vector<8x128xf32>
    %c6 = arith.constant 6 : index
    %c0_25 = arith.constant 0 : index
    %c0_26 = arith.constant 0 : index
    %49 = vector.load %arg3[%c6, %c0_25, %c0_26] : memref<9x8x8xbf16, #tpu.memory_space<vmem>>, vector<1x8x8xbf16>
    %50 = vector.shape_cast %49 : vector<1x8x8xbf16> to vector<8x8xbf16>
    %cst_27 = arith.constant dense<0.000000e+00> : vector<8x128xf32>
    %51 = tpu.matmul %50, %14, %cst_27 {dimension_numbers = #tpu.dot_dimension_numbers<[1], [0], [0], [1], [0, 0, 1, 1], [], []>} : vector<8x8xbf16>, vector<8x128xbf16>, vector<8x128xf32> -> vector<8x128xf32>
    %52 = arith.addf %48, %51 : vector<8x128xf32>
    %c7 = arith.constant 7 : index
    %c0_28 = arith.constant 0 : index
    %c0_29 = arith.constant 0 : index
    %53 = vector.load %arg3[%c7, %c0_28, %c0_29] : memref<9x8x8xbf16, #tpu.memory_space<vmem>>, vector<1x8x8xbf16>
    %54 = vector.shape_cast %53 : vector<1x8x8xbf16> to vector<8x8xbf16>
    %cst_30 = arith.constant dense<0.000000e+00> : vector<8x128xf32>
    %55 = tpu.matmul %54, %15, %cst_30 {dimension_numbers = #tpu.dot_dimension_numbers<[1], [0], [0], [1], [0, 0, 1, 1], [], []>} : vector<8x8xbf16>, vector<8x128xbf16>, vector<8x128xf32> -> vector<8x128xf32>
    %56 = arith.addf %52, %55 : vector<8x128xf32>
    %c8 = arith.constant 8 : index
    %c0_31 = arith.constant 0 : index
    %c0_32 = arith.constant 0 : index
    %57 = vector.load %arg3[%c8, %c0_31, %c0_32] : memref<9x8x8xbf16, #tpu.memory_space<vmem>>, vector<1x8x8xbf16>
    %58 = vector.shape_cast %57 : vector<1x8x8xbf16> to vector<8x8xbf16>
    %cst_33 = arith.constant dense<0.000000e+00> : vector<8x128xf32>
    %59 = tpu.matmul %58, %19, %cst_33 {dimension_numbers = #tpu.dot_dimension_numbers<[1], [0], [0], [1], [0, 0, 1, 1], [], []>} : vector<8x8xbf16>, vector<8x128xbf16>, vector<8x128xf32> -> vector<8x128xf32>
    %60 = arith.addf %56, %59 : vector<8x128xf32>
    %c0_34 = arith.constant 0 : index
    %c0_35 = arith.constant 0 : index
    %61 = vector.load %arg9[%c0_34, %c0_35] : memref<8x128xf32, #tpu.memory_space<vmem>>, vector<8x128xf32>
    tpu.vector_store %arg9[%c0_34, %c0_35], %60 {strides = array<i32>} : memref<8x128xf32, #tpu.memory_space<vmem>>, vector<8x128xf32>,
    %62 = arith.mulf %60, %60 : vector<8x128xf32>
    %63 = vector.broadcast %2 : vector<1x128xf32> to vector<8x128xf32>
    %64 = arith.mulf %62, %63 : vector<8x128xf32>
    %cst_36 = arith.constant dense<0.000000e+00> : vector<8xf32>
    %65 = vector.multi_reduction <add>, %64, %cst_36 [1] : vector<8x128xf32> to vector<8xf32>
    %66 = vector.shape_cast %65 : vector<8xf32> to vector<8x1xf32>
    %67 = arith.addf %23, %66 : vector<8x1xf32>
    %cst_37 = arith.constant 0.000000e+00 : f32
    %68 = vector.broadcast %cst_37 : f32 to vector<8x128xf32>
    %c0_38 = arith.constant 0 : index
    %c0_39 = arith.constant 0 : index
    %c0_40 = arith.constant 0 : index
    %69 = vector.load %arg3[%c0_38, %c0_39, %c0_40] : memref<9x8x8xbf16, #tpu.memory_space<vmem>>, vector<1x8x8xbf16>
    %70 = vector.shape_cast %69 : vector<1x8x8xbf16> to vector<8x8xbf16>
    %cst_41 = arith.constant dense<0.000000e+00> : vector<8x128xf32>
    %71 = tpu.matmul %70, %5, %cst_41 {dimension_numbers = #tpu.dot_dimension_numbers<[1], [0], [0], [1], [0, 0, 1, 1], [], []>} : vector<8x8xbf16>, vector<8x128xbf16>, vector<8x128xf32> -> vector<8x128xf32>
    %72 = arith.addf %68, %71 : vector<8x128xf32>
    %c1_42 = arith.constant 1 : index
    %c0_43 = arith.constant 0 : index
    %c0_44 = arith.constant 0 : index
    %73 = vector.load %arg3[%c1_42, %c0_43, %c0_44] : memref<9x8x8xbf16, #tpu.memory_space<vmem>>, vector<1x8x8xbf16>
    %74 = vector.shape_cast %73 : vector<1x8x8xbf16> to vector<8x8xbf16>
    %cst_45 = arith.constant dense<0.000000e+00> : vector<8x128xf32>
    %75 = tpu.matmul %74, %9, %cst_45 {dimension_numbers = #tpu.dot_dimension_numbers<[1], [0], [0], [1], [0, 0, 1, 1], [], []>} : vector<8x8xbf16>, vector<8x128xbf16>, vector<8x128xf32> -> vector<8x128xf32>
    %76 = arith.addf %72, %75 : vector<8x128xf32>
    %c2_46 = arith.constant 2 : index
    %c0_47 = arith.constant 0 : index
    %c0_48 = arith.constant 0 : index
    %77 = vector.load %arg3[%c2_46, %c0_47, %c0_48] : memref<9x8x8xbf16, #tpu.memory_space<vmem>>, vector<1x8x8xbf16>
    %78 = vector.shape_cast %77 : vector<1x8x8xbf16> to vector<8x8xbf16>
    %cst_49 = arith.constant dense<0.000000e+00> : vector<8x128xf32>
    %79 = tpu.matmul %78, %10, %cst_49 {dimension_numbers = #tpu.dot_dimension_numbers<[1], [0], [0], [1], [0, 0, 1, 1], [], []>} : vector<8x8xbf16>, vector<8x128xbf16>, vector<8x128xf32> -> vector<8x128xf32>
    %80 = arith.addf %76, %79 : vector<8x128xf32>
    %c3_50 = arith.constant 3 : index
    %c0_51 = arith.constant 0 : index
    %c0_52 = arith.constant 0 : index
    %81 = vector.load %arg3[%c3_50, %c0_51, %c0_52] : memref<9x8x8xbf16, #tpu.memory_space<vmem>>, vector<1x8x8xbf16>
    %82 = vector.shape_cast %81 : vector<1x8x8xbf16> to vector<8x8xbf16>
    %cst_53 = arith.constant dense<0.000000e+00> : vector<8x128xf32>
    %83 = tpu.matmul %82, %7, %cst_53 {dimension_numbers = #tpu.dot_dimension_numbers<[1], [0], [0], [1], [0, 0, 1, 1], [], []>} : vector<8x8xbf16>, vector<8x128xbf16>, vector<8x128xf32> -> vector<8x128xf32>
    %84 = arith.addf %80, %83 : vector<8x128xf32>
    %c4_54 = arith.constant 4 : index
    %c0_55 = arith.constant 0 : index
    %c0_56 = arith.constant 0 : index
    %85 = vector.load %arg3[%c4_54, %c0_55, %c0_56] : memref<9x8x8xbf16, #tpu.memory_space<vmem>>, vector<1x8x8xbf16>
    %86 = vector.shape_cast %85 : vector<1x8x8xbf16> to vector<8x8xbf16>
    %cst_57 = arith.constant dense<0.000000e+00> : vector<8x128xf32>
    %87 = tpu.matmul %86, %11, %cst_57 {dimension_numbers = #tpu.dot_dimension_numbers<[1], [0], [0], [1], [0, 0, 1, 1], [], []>} : vector<8x8xbf16>, vector<8x128xbf16>, vector<8x128xf32> -> vector<8x128xf32>
    %88 = arith.addf %84, %87 : vector<8x128xf32>
    %c5_58 = arith.constant 5 : index
    %c0_59 = arith.constant 0 : index
    %c0_60 = arith.constant 0 : index
    %89 = vector.load %arg3[%c5_58, %c0_59, %c0_60] : memref<9x8x8xbf16, #tpu.memory_space<vmem>>, vector<1x8x8xbf16>
    %90 = vector.shape_cast %89 : vector<1x8x8xbf16> to vector<8x8xbf16>
    %cst_61 = arith.constant dense<0.000000e+00> : vector<8x128xf32>
    %91 = tpu.matmul %90, %12, %cst_61 {dimension_numbers = #tpu.dot_dimension_numbers<[1], [0], [0], [1], [0, 0, 1, 1], [], []>} : vector<8x8xbf16>, vector<8x128xbf16>, vector<8x128xf32> -> vector<8x128xf32>
    %92 = arith.addf %88, %91 : vector<8x128xf32>
    %c6_62 = arith.constant 6 : index
    %c0_63 = arith.constant 0 : index
    %c0_64 = arith.constant 0 : index
    %93 = vector.load %arg3[%c6_62, %c0_63, %c0_64] : memref<9x8x8xbf16, #tpu.memory_space<vmem>>, vector<1x8x8xbf16>
    %94 = vector.shape_cast %93 : vector<1x8x8xbf16> to vector<8x8xbf16>
    %cst_65 = arith.constant dense<0.000000e+00> : vector<8x128xf32>
    %95 = tpu.matmul %94, %15, %cst_65 {dimension_numbers = #tpu.dot_dimension_numbers<[1], [0], [0], [1], [0, 0, 1, 1], [], []>} : vector<8x8xbf16>, vector<8x128xbf16>, vector<8x128xf32> -> vector<8x128xf32>
    %96 = arith.addf %92, %95 : vector<8x128xf32>
    %c7_66 = arith.constant 7 : index
    %c0_67 = arith.constant 0 : index
    %c0_68 = arith.constant 0 : index
    %97 = vector.load %arg3[%c7_66, %c0_67, %c0_68] : memref<9x8x8xbf16, #tpu.memory_space<vmem>>, vector<1x8x8xbf16>
    %98 = vector.shape_cast %97 : vector<1x8x8xbf16> to vector<8x8xbf16>
    %cst_69 = arith.constant dense<0.000000e+00> : vector<8x128xf32>
    %99 = tpu.matmul %98, %19, %cst_69 {dimension_numbers = #tpu.dot_dimension_numbers<[1], [0], [0], [1], [0, 0, 1, 1], [], []>} : vector<8x8xbf16>, vector<8x128xbf16>, vector<8x128xf32> -> vector<8x128xf32>
    %100 = arith.addf %96, %99 : vector<8x128xf32>
    %c8_70 = arith.constant 8 : index
    %c0_71 = arith.constant 0 : index
    %c0_72 = arith.constant 0 : index
    %101 = vector.load %arg3[%c8_70, %c0_71, %c0_72] : memref<9x8x8xbf16, #tpu.memory_space<vmem>>, vector<1x8x8xbf16>
    %102 = vector.shape_cast %101 : vector<1x8x8xbf16> to vector<8x8xbf16>
    %cst_73 = arith.constant dense<0.000000e+00> : vector<8x128xf32>
    %103 = tpu.matmul %102, %20, %cst_73 {dimension_numbers = #tpu.dot_dimension_numbers<[1], [0], [0], [1], [0, 0, 1, 1], [], []>} : vector<8x8xbf16>, vector<8x128xbf16>, vector<8x128xf32> -> vector<8x128xf32>
    %104 = arith.addf %100, %103 : vector<8x128xf32>
    %c0_74 = arith.constant 0 : index
    %c0_75 = arith.constant 0 : index
    %105 = vector.load %arg9[%c0_74, %c0_75] : memref<8x128xf32, #tpu.memory_space<vmem>>, vector<8x128xf32>
    %106 = arith.addf %105, %104 : vector<8x128xf32>
    %c0_76 = arith.constant 0 : index
    %c0_77 = arith.constant 0 : index
    %107 = vector.load %arg9[%c0_76, %c0_77] : memref<8x128xf32, #tpu.memory_space<vmem>>, vector<8x128xf32>
    tpu.vector_store %arg9[%c0_76, %c0_77], %106 {strides = array<i32>} : memref<8x128xf32, #tpu.memory_space<vmem>>, vector<8x128xf32>,
    %108 = arith.mulf %104, %104 : vector<8x128xf32>
    %109 = vector.broadcast %2 : vector<1x128xf32> to vector<8x128xf32>
    %110 = arith.mulf %108, %109 : vector<8x128xf32>
    %cst_78 = arith.constant dense<0.000000e+00> : vector<8xf32>
    %111 = vector.multi_reduction <add>, %110, %cst_78 [1] : vector<8x128xf32> to vector<8xf32>
    %112 = vector.shape_cast %111 : vector<8xf32> to vector<8x1xf32>
    %113 = arith.addf %67, %112 : vector<8x1xf32>
    %cst_79 = arith.constant 0.000000e+00 : f32
    %114 = vector.broadcast %cst_79 : f32 to vector<8x128xf32>
    %c0_80 = arith.constant 0 : index
    %c0_81 = arith.constant 0 : index
    %c0_82 = arith.constant 0 : index
    %115 = vector.load %arg3[%c0_80, %c0_81, %c0_82] : memref<9x8x8xbf16, #tpu.memory_space<vmem>>, vector<1x8x8xbf16>
    %116 = vector.shape_cast %115 : vector<1x8x8xbf16> to vector<8x8xbf16>
    %cst_83 = arith.constant dense<0.000000e+00> : vector<8x128xf32>
    %117 = tpu.matmul %116, %6, %cst_83 {dimension_numbers = #tpu.dot_dimension_numbers<[1], [0], [0], [1], [0, 0, 1, 1], [], []>} : vector<8x8xbf16>, vector<8x128xbf16>, vector<8x128xf32> -> vector<8x128xf32>
    %118 = arith.addf %114, %117 : vector<8x128xf32>
    %c1_84 = arith.constant 1 : index
    %c0_85 = arith.constant 0 : index
    %c0_86 = arith.constant 0 : index
    %119 = vector.load %arg3[%c1_84, %c0_85, %c0_86] : memref<9x8x8xbf16, #tpu.memory_space<vmem>>, vector<1x8x8xbf16>
    %120 = vector.shape_cast %119 : vector<1x8x8xbf16> to vector<8x8xbf16>
    %cst_87 = arith.constant dense<0.000000e+00> : vector<8x128xf32>
    %121 = tpu.matmul %120, %7, %cst_87 {dimension_numbers = #tpu.dot_dimension_numbers<[1], [0], [0], [1], [0, 0, 1, 1], [], []>} : vector<8x8xbf16>, vector<8x128xbf16>, vector<8x128xf32> -> vector<8x128xf32>
    %122 = arith.addf %118, %121 : vector<8x128xf32>
    %c2_88 = arith.constant 2 : index
    %c0_89 = arith.constant 0 : index
    %c0_90 = arith.constant 0 : index
    %123 = vector.load %arg3[%c2_88, %c0_89, %c0_90] : memref<9x8x8xbf16, #tpu.memory_space<vmem>>, vector<1x8x8xbf16>
    %124 = vector.shape_cast %123 : vector<1x8x8xbf16> to vector<8x8xbf16>
    %cst_91 = arith.constant dense<0.000000e+00> : vector<8x128xf32>
    %125 = tpu.matmul %124, %11, %cst_91 {dimension_numbers = #tpu.dot_dimension_numbers<[1], [0], [0], [1], [0, 0, 1, 1], [], []>} : vector<8x8xbf16>, vector<8x128xbf16>, vector<8x128xf32> -> vector<8x128xf32>
    %126 = arith.addf %122, %125 : vector<8x128xf32>
    %c3_92 = arith.constant 3 : index
    %c0_93 = arith.constant 0 : index
    %c0_94 = arith.constant 0 : index
    %127 = vector.load %arg3[%c3_92, %c0_93, %c0_94] : memref<9x8x8xbf16, #tpu.memory_space<vmem>>, vector<1x8x8xbf16>
    %128 = vector.shape_cast %127 : vector<1x8x8xbf16> to vector<8x8xbf16>
    %cst_95 = arith.constant dense<0.000000e+00> : vector<8x128xf32>
    %129 = tpu.matmul %128, %14, %cst_95 {dimension_numbers = #tpu.dot_dimension_numbers<[1], [0], [0], [1], [0, 0, 1, 1], [], []>} : vector<8x8xbf16>, vector<8x128xbf16>, vector<8x128xf32> -> vector<8x128xf32>
    %130 = arith.addf %126, %129 : vector<8x128xf32>
    %c4_96 = arith.constant 4 : index
    %c0_97 = arith.constant 0 : index
    %c0_98 = arith.constant 0 : index
    %131 = vector.load %arg3[%c4_96, %c0_97, %c0_98] : memref<9x8x8xbf16, #tpu.memory_space<vmem>>, vector<1x8x8xbf16>
    %132 = vector.shape_cast %131 : vector<1x8x8xbf16> to vector<8x8xbf16>
    %cst_99 = arith.constant dense<0.000000e+00> : vector<8x128xf32>
    %133 = tpu.matmul %132, %15, %cst_99 {dimension_numbers = #tpu.dot_dimension_numbers<[1], [0], [0], [1], [0, 0, 1, 1], [], []>} : vector<8x8xbf16>, vector<8x128xbf16>, vector<8x128xf32> -> vector<8x128xf32>
    %134 = arith.addf %130, %133 : vector<8x128xf32>
    %c5_100 = arith.constant 5 : index
    %c0_101 = arith.constant 0 : index
    %c0_102 = arith.constant 0 : index
    %135 = vector.load %arg3[%c5_100, %c0_101, %c0_102] : memref<9x8x8xbf16, #tpu.memory_space<vmem>>, vector<1x8x8xbf16>
    %136 = vector.shape_cast %135 : vector<1x8x8xbf16> to vector<8x8xbf16>
    %cst_103 = arith.constant dense<0.000000e+00> : vector<8x128xf32>
    %137 = tpu.matmul %136, %19, %cst_103 {dimension_numbers = #tpu.dot_dimension_numbers<[1], [0], [0], [1], [0, 0, 1, 1], [], []>} : vector<8x8xbf16>, vector<8x128xbf16>, vector<8x128xf32> -> vector<8x128xf32>
    %138 = arith.addf %134, %137 : vector<8x128xf32>
    %c6_104 = arith.constant 6 : index
    %c0_105 = arith.constant 0 : index
    %c0_106 = arith.constant 0 : index
    %139 = vector.load %arg3[%c6_104, %c0_105, %c0_106] : memref<9x8x8xbf16, #tpu.memory_space<vmem>>, vector<1x8x8xbf16>
    %140 = vector.shape_cast %139 : vector<1x8x8xbf16> to vector<8x8xbf16>
    %cst_107 = arith.constant dense<0.000000e+00> : vector<8x128xf32>
    %141 = tpu.matmul %140, %16, %cst_107 {dimension_numbers = #tpu.dot_dimension_numbers<[1], [0], [0], [1], [0, 0, 1, 1], [], []>} : vector<8x8xbf16>, vector<8x128xbf16>, vector<8x128xf32> -> vector<8x128xf32>
    %142 = arith.addf %138, %141 : vector<8x128xf32>
    %c7_108 = arith.constant 7 : index
    %c0_109 = arith.constant 0 : index
    %c0_110 = arith.constant 0 : index
    %143 = vector.load %arg3[%c7_108, %c0_109, %c0_110] : memref<9x8x8xbf16, #tpu.memory_space<vmem>>, vector<1x8x8xbf16>
    %144 = vector.shape_cast %143 : vector<1x8x8xbf16> to vector<8x8xbf16>
    %cst_111 = arith.constant dense<0.000000e+00> : vector<8x128xf32>
    %145 = tpu.matmul %144, %17, %cst_111 {dimension_numbers = #tpu.dot_dimension_numbers<[1], [0], [0], [1], [0, 0, 1, 1], [], []>} : vector<8x8xbf16>, vector<8x128xbf16>, vector<8x128xf32> -> vector<8x128xf32>
    %146 = arith.addf %142, %145 : vector<8x128xf32>
    %c8_112 = arith.constant 8 : index
    %c0_113 = arith.constant 0 : index
    %c0_114 = arith.constant 0 : index
    %147 = vector.load %arg3[%c8_112, %c0_113, %c0_114] : memref<9x8x8xbf16, #tpu.memory_space<vmem>>, vector<1x8x8xbf16>
    %148 = vector.shape_cast %147 : vector<1x8x8xbf16> to vector<8x8xbf16>
    %cst_115 = arith.constant dense<0.000000e+00> : vector<8x128xf32>
    %149 = tpu.matmul %148, %21, %cst_115 {dimension_numbers = #tpu.dot_dimension_numbers<[1], [0], [0], [1], [0, 0, 1, 1], [], []>} : vector<8x8xbf16>, vector<8x128xbf16>, vector<8x128xf32> -> vector<8x128xf32>
    %150 = arith.addf %146, %149 : vector<8x128xf32>
    %c0_116 = arith.constant 0 : index
    %c0_117 = arith.constant 0 : index
    %151 = vector.load %arg9[%c0_116, %c0_117] : memref<8x128xf32, #tpu.memory_space<vmem>>, vector<8x128xf32>
    %152 = arith.addf %151, %150 : vector<8x128xf32>
    %c0_118 = arith.constant 0 : index
    %c0_119 = arith.constant 0 : index
    %153 = vector.load %arg9[%c0_118, %c0_119] : memref<8x128xf32, #tpu.memory_space<vmem>>, vector<8x128xf32>
    tpu.vector_store %arg9[%c0_118, %c0_119], %152 {strides = array<i32>} : memref<8x128xf32, #tpu.memory_space<vmem>>, vector<8x128xf32>,
    %154 = arith.mulf %150, %150 : vector<8x128xf32>
    %155 = vector.broadcast %2 : vector<1x128xf32> to vector<8x128xf32>
    %156 = arith.mulf %154, %155 : vector<8x128xf32>
    %cst_120 = arith.constant dense<0.000000e+00> : vector<8xf32>
    %157 = vector.multi_reduction <add>, %156, %cst_120 [1] : vector<8x128xf32> to vector<8xf32>
    %158 = vector.shape_cast %157 : vector<8xf32> to vector<8x1xf32>
    %159 = arith.addf %113, %158 : vector<8x1xf32>
    %cst_121 = arith.constant 0.000000e+00 : f32
    %160 = vector.broadcast %cst_121 : f32 to vector<8x128xf32>
    %c0_122 = arith.constant 0 : index
    %c0_123 = arith.constant 0 : index
    %c0_124 = arith.constant 0 : index
    %161 = vector.load %arg3[%c0_122, %c0_123, %c0_124] : memref<9x8x8xbf16, #tpu.memory_space<vmem>>, vector<1x8x8xbf16>
    %162 = vector.shape_cast %161 : vector<1x8x8xbf16> to vector<8x8xbf16>
    %cst_125 = arith.constant dense<0.000000e+00> : vector<8x128xf32>
    %163 = tpu.matmul %162, %7, %cst_125 {dimension_numbers = #tpu.dot_dimension_numbers<[1], [0], [0], [1], [0, 0, 1, 1], [], []>} : vector<8x8xbf16>, vector<8x128xbf16>, vector<8x128xf32> -> vector<8x128xf32>
    %164 = arith.addf %160, %163 : vector<8x128xf32>
    %c1_126 = arith.constant 1 : index
    %c0_127 = arith.constant 0 : index
    %c0_128 = arith.constant 0 : index
    %165 = vector.load %arg3[%c1_126, %c0_127, %c0_128] : memref<9x8x8xbf16, #tpu.memory_space<vmem>>, vector<1x8x8xbf16>
    %166 = vector.shape_cast %165 : vector<1x8x8xbf16> to vector<8x8xbf16>
    %cst_129 = arith.constant dense<0.000000e+00> : vector<8x128xf32>
    %167 = tpu.matmul %166, %11, %cst_129 {dimension_numbers = #tpu.dot_dimension_numbers<[1], [0], [0], [1], [0, 0, 1, 1], [], []>} : vector<8x8xbf16>, vector<8x128xbf16>, vector<8x128xf32> -> vector<8x128xf32>
    %168 = arith.addf %164, %167 : vector<8x128xf32>
    %c2_130 = arith.constant 2 : index
    %c0_131 = arith.constant 0 : index
    %c0_132 = arith.constant 0 : index
    %169 = vector.load %arg3[%c2_130, %c0_131, %c0_132] : memref<9x8x8xbf16, #tpu.memory_space<vmem>>, vector<1x8x8xbf16>
    %170 = vector.shape_cast %169 : vector<1x8x8xbf16> to vector<8x8xbf16>
    %cst_133 = arith.constant dense<0.000000e+00> : vector<8x128xf32>
    %171 = tpu.matmul %170, %12, %cst_133 {dimension_numbers = #tpu.dot_dimension_numbers<[1], [0], [0], [1], [0, 0, 1, 1], [], []>} : vector<8x8xbf16>, vector<8x128xbf16>, vector<8x128xf32> -> vector<8x128xf32>
    %172 = arith.addf %168, %171 : vector<8x128xf32>
    %c3_134 = arith.constant 3 : index
    %c0_135 = arith.constant 0 : index
    %c0_136 = arith.constant 0 : index
    %173 = vector.load %arg3[%c3_134, %c0_135, %c0_136] : memref<9x8x8xbf16, #tpu.memory_space<vmem>>, vector<1x8x8xbf16>
    %174 = vector.shape_cast %173 : vector<1x8x8xbf16> to vector<8x8xbf16>
    %cst_137 = arith.constant dense<0.000000e+00> : vector<8x128xf32>
    %175 = tpu.matmul %174, %15, %cst_137 {dimension_numbers = #tpu.dot_dimension_numbers<[1], [0], [0], [1], [0, 0, 1, 1], [], []>} : vector<8x8xbf16>, vector<8x128xbf16>, vector<8x128xf32> -> vector<8x128xf32>
    %176 = arith.addf %172, %175 : vector<8x128xf32>
    %c4_138 = arith.constant 4 : index
    %c0_139 = arith.constant 0 : index
    %c0_140 = arith.constant 0 : index
    %177 = vector.load %arg3[%c4_138, %c0_139, %c0_140] : memref<9x8x8xbf16, #tpu.memory_space<vmem>>, vector<1x8x8xbf16>
    %178 = vector.shape_cast %177 : vector<1x8x8xbf16> to vector<8x8xbf16>
    %cst_141 = arith.constant dense<0.000000e+00> : vector<8x128xf32>
    %179 = tpu.matmul %178, %19, %cst_141 {dimension_numbers = #tpu.dot_dimension_numbers<[1], [0], [0], [1], [0, 0, 1, 1], [], []>} : vector<8x8xbf16>, vector<8x128xbf16>, vector<8x128xf32> -> vector<8x128xf32>
    %180 = arith.addf %176, %179 : vector<8x128xf32>
    %c5_142 = arith.constant 5 : index
    %c0_143 = arith.constant 0 : index
    %c0_144 = arith.constant 0 : index
    %181 = vector.load %arg3[%c5_142, %c0_143, %c0_144] : memref<9x8x8xbf16, #tpu.memory_space<vmem>>, vector<1x8x8xbf16>
    %182 = vector.shape_cast %181 : vector<1x8x8xbf16> to vector<8x8xbf16>
    %cst_145 = arith.constant dense<0.000000e+00> : vector<8x128xf32>
    %183 = tpu.matmul %182, %20, %cst_145 {dimension_numbers = #tpu.dot_dimension_numbers<[1], [0], [0], [1], [0, 0, 1, 1], [], []>} : vector<8x8xbf16>, vector<8x128xbf16>, vector<8x128xf32> -> vector<8x128xf32>
    %184 = arith.addf %180, %183 : vector<8x128xf32>
    %c6_146 = arith.constant 6 : index
    %c0_147 = arith.constant 0 : index
    %c0_148 = arith.constant 0 : index
    %185 = vector.load %arg3[%c6_146, %c0_147, %c0_148] : memref<9x8x8xbf16, #tpu.memory_space<vmem>>, vector<1x8x8xbf16>
    %186 = vector.shape_cast %185 : vector<1x8x8xbf16> to vector<8x8xbf16>
    %cst_149 = arith.constant dense<0.000000e+00> : vector<8x128xf32>
    %187 = tpu.matmul %186, %17, %cst_149 {dimension_numbers = #tpu.dot_dimension_numbers<[1], [0], [0], [1], [0, 0, 1, 1], [], []>} : vector<8x8xbf16>, vector<8x128xbf16>, vector<8x128xf32> -> vector<8x128xf32>
    %188 = arith.addf %184, %187 : vector<8x128xf32>
    %c7_150 = arith.constant 7 : index
    %c0_151 = arith.constant 0 : index
    %c0_152 = arith.constant 0 : index
    %189 = vector.load %arg3[%c7_150, %c0_151, %c0_152] : memref<9x8x8xbf16, #tpu.memory_space<vmem>>, vector<1x8x8xbf16>
    %190 = vector.shape_cast %189 : vector<1x8x8xbf16> to vector<8x8xbf16>
    %cst_153 = arith.constant dense<0.000000e+00> : vector<8x128xf32>
    %191 = tpu.matmul %190, %21, %cst_153 {dimension_numbers = #tpu.dot_dimension_numbers<[1], [0], [0], [1], [0, 0, 1, 1], [], []>} : vector<8x8xbf16>, vector<8x128xbf16>, vector<8x128xf32> -> vector<8x128xf32>
    %192 = arith.addf %188, %191 : vector<8x128xf32>
    %c8_154 = arith.constant 8 : index
    %c0_155 = arith.constant 0 : index
    %c0_156 = arith.constant 0 : index
    %193 = vector.load %arg3[%c8_154, %c0_155, %c0_156] : memref<9x8x8xbf16, #tpu.memory_space<vmem>>, vector<1x8x8xbf16>
    %194 = vector.shape_cast %193 : vector<1x8x8xbf16> to vector<8x8xbf16>
    %cst_157 = arith.constant dense<0.000000e+00> : vector<8x128xf32>
    %195 = tpu.matmul %194, %22, %cst_157 {dimension_numbers = #tpu.dot_dimension_numbers<[1], [0], [0], [1], [0, 0, 1, 1], [], []>} : vector<8x8xbf16>, vector<8x128xbf16>, vector<8x128xf32> -> vector<8x128xf32>
    %196 = arith.addf %192, %195 : vector<8x128xf32>
    %c0_158 = arith.constant 0 : index
    %c0_159 = arith.constant 0 : index
    %197 = vector.load %arg9[%c0_158, %c0_159] : memref<8x128xf32, #tpu.memory_space<vmem>>, vector<8x128xf32>
    %198 = arith.addf %197, %196 : vector<8x128xf32>
    %c0_160 = arith.constant 0 : index
    %c0_161 = arith.constant 0 : index
    %199 = vector.load %arg9[%c0_160, %c0_161] : memref<8x128xf32, #tpu.memory_space<vmem>>, vector<8x128xf32>
    tpu.vector_store %arg9[%c0_160, %c0_161], %198 {strides = array<i32>} : memref<8x128xf32, #tpu.memory_space<vmem>>, vector<8x128xf32>,
    %200 = arith.mulf %196, %196 : vector<8x128xf32>
    %201 = vector.broadcast %2 : vector<1x128xf32> to vector<8x128xf32>
    %202 = arith.mulf %200, %201 : vector<8x128xf32>
    %cst_162 = arith.constant dense<0.000000e+00> : vector<8xf32>
    %203 = vector.multi_reduction <add>, %202, %cst_162 [1] : vector<8x128xf32> to vector<8xf32>
    %204 = vector.shape_cast %203 : vector<8xf32> to vector<8x1xf32>
    %205 = arith.addf %159, %204 : vector<8x1xf32>
    %c0_163 = arith.constant 0 : index
    %c0_164 = arith.constant 0 : index
    %206 = vector.load %arg9[%c0_163, %c0_164] : memref<8x128xf32, #tpu.memory_space<vmem>>, vector<8x128xf32>
    %207 = vector.broadcast %2 : vector<1x128xf32> to vector<8x128xf32>
    %208 = arith.mulf %206, %207 : vector<8x128xf32>
    %cst_165 = arith.constant dense<0.000000e+00> : vector<8xf32>
    %209 = vector.multi_reduction <add>, %208, %cst_165 [1] : vector<8x128xf32> to vector<8xf32>
    %210 = vector.shape_cast %209 : vector<8xf32> to vector<8x1xf32>
    %c0_166 = arith.constant 0 : index
    %c0_167 = arith.constant 0 : index
    %c0_168 = arith.constant 0 : index
    %c0_169 = arith.constant 0 : index
    %211 = vector.load %arg7[%c0_166, %c0_167, %c0_168, %c0_169] : memref<1x1x8x1xf32, #tpu.memory_space<vmem>>, vector<1x1x8x1xf32>
    %212 = vector.shape_cast %211 : vector<1x1x8x1xf32> to vector<8x1xf32>
    %213 = vector.shape_cast %210 : vector<8x1xf32> to vector<1x1x8x1xf32>
    tpu.vector_store %arg7[%c0_166, %c0_167, %c0_168, %c0_169], %213 {strides = array<i32>} : memref<1x1x8x1xf32, #tpu.memory_space<vmem>>, vector<1x1x8x1xf32>,
    %c0_170 = arith.constant 0 : index
    %c0_171 = arith.constant 0 : index
    %c0_172 = arith.constant 0 : index
    %c0_173 = arith.constant 0 : index
    %214 = vector.load %arg8[%c0_170, %c0_171, %c0_172, %c0_173] : memref<1x1x8x1xf32, #tpu.memory_space<vmem>>, vector<1x1x8x1xf32>
    %215 = vector.shape_cast %214 : vector<1x1x8x1xf32> to vector<8x1xf32>
    %216 = vector.shape_cast %205 : vector<8x1xf32> to vector<1x1x8x1xf32>
    tpu.vector_store %arg8[%c0_170, %c0_171, %c0_172, %c0_173], %216 {strides = array<i32>} : memref<1x1x8x1xf32, #tpu.memory_space<vmem>>, vector<1x1x8x1xf32>,
    %cst_174 = arith.constant 2.500000e-01 : f32
    %217 = vector.broadcast %cst_174 : f32 to vector<8x128xf32>
    %218 = arith.mulf %206, %217 : vector<8x128xf32>
    %c0_175 = arith.constant 0 : index
    %c0_176 = arith.constant 0 : index
    %219 = vector.load %arg4[%c0_175, %c0_176] : memref<8x1xf32, #tpu.memory_space<vmem>>, vector<8x1xf32>
    %220 = vector.broadcast %219 : vector<8x1xf32> to vector<8x128xf32>
    %221 = arith.addf %218, %220 : vector<8x128xf32>
    %222 = arith.truncf %221 : vector<8x128xf32> to vector<8x128xbf16>
    %c0_177 = arith.constant 0 : index
    %c0_178 = arith.constant 0 : index
    %c0_179 = arith.constant 0 : index
    %c0_180 = arith.constant 0 : index
    %223 = vector.load %arg6[%c0_177, %c0_178, %c0_179, %c0_180] : memref<1x1x8x128xbf16, #tpu.memory_space<vmem>>, vector<1x1x8x128xbf16>
    %224 = vector.shape_cast %223 : vector<1x1x8x128xbf16> to vector<8x128xbf16>
    %225 = vector.shape_cast %222 : vector<8x128xbf16> to vector<1x1x8x128xbf16>
    tpu.vector_store %arg6[%c0_177, %c0_178, %c0_179, %c0_180], %225 {strides = array<i32>} : memref<1x1x8x128xbf16, #tpu.memory_space<vmem>>, vector<1x1x8x128xbf16>,
    return
  }
  func.func @transform_0(%arg0: i32, %arg1: i32) -> (i32, i32, i32, i32) {
    %c0_i32 = arith.constant 0 : i32
    %c0_i32_0 = arith.constant 0 : i32
    %c0_i32_1 = arith.constant 0 : i32
    return %arg0, %arg1, %c0_i32, %c0_i32_0 : i32, i32, i32, i32
  }
  func.func @transform_1(%arg0: i32, %arg1: i32) -> (i32, i32, i32) {
    %c0_i32 = arith.constant 0 : i32
    %c0_i32_0 = arith.constant 0 : i32
    %c0_i32_1 = arith.constant 0 : i32
    %c0_i32_2 = arith.constant 0 : i32
    return %c0_i32, %c0_i32_0, %c0_i32_1 : i32, i32, i32
  }
  func.func @transform_2(%arg0: i32, %arg1: i32) -> (i32, i32) {
    %c0_i32 = arith.constant 0 : i32
    %c0_i32_0 = arith.constant 0 : i32
    %c0_i32_1 = arith.constant 0 : i32
    return %c0_i32, %c0_i32_0 : i32, i32
  }
  func.func @transform_3(%arg0: i32, %arg1: i32) -> (i32, i32) {
    %c0_i32 = arith.constant 0 : i32
    %c0_i32_0 = arith.constant 0 : i32
    %c0_i32_1 = arith.constant 0 : i32
    return %c0_i32, %c0_i32_0 : i32, i32
  }
  func.func @transform_4(%arg0: i32, %arg1: i32) -> (i32, i32, i32, i32) {
    %c0_i32 = arith.constant 0 : i32
    %c0_i32_0 = arith.constant 0 : i32
    %c0_i32_1 = arith.constant 0 : i32
    return %arg0, %arg1, %c0_i32, %c0_i32_0 : i32, i32, i32, i32
  }
  func.func @transform_5(%arg0: i32, %arg1: i32) -> (i32, i32, i32, i32) {
    %c0_i32 = arith.constant 0 : i32
    %c0_i32_0 = arith.constant 0 : i32
    %c0_i32_1 = arith.constant 0 : i32
    return %arg0, %arg1, %c0_i32, %c0_i32_0 : i32, i32, i32, i32
  }
  func.func @transform_6(%arg0: i32, %arg1: i32) -> (i32, i32, i32, i32) {
    %c0_i32 = arith.constant 0 : i32
    %c0_i32_0 = arith.constant 0 : i32
    %c0_i32_1 = arith.constant 0 : i32
    return %arg0, %arg1, %c0_i32, %c0_i32_0 : i32, i32, i32, i32
  }
}

</mosaic_0001>

<llo_original>
// kernel: conv_block_bbox.3
$region0: #{conv_block_bbox.3}
  #allocation0 [shape = 'u32[]', space=smem, size = 0x4, offset = 0x4, fixed_abs, tag = 'smem constant byte address 0x4 - core index']
  #allocation1 [shape = 'u32[144,128]{1,0:T(1,128)}', space=vmem, size = 0x12000, scoped, tag = 'internal scratch']
  %s0 = inlined_call_operand.vmem [shape: bf16[2,1,8,128], index: 0, kind: input, shape index: {}]
  %s1 = inlined_call_operand.vmem [shape: f32[8,1], index: 1, kind: input, shape index: {}]
  %s2 = inlined_call_operand.vmem [shape: f32[8,1], index: 2, kind: input, shape index: {}]
  %s3 = inlined_call_operand.vmem [shape: f32[2,1,8,128], index: 3, kind: output, shape index: {}]
  %s4 = sld [smem:[#allocation0]]
  $region45: #{conv_block_bbox.3} parent=0
    _
  %s6 = ssub.s32 1, %s4
  %s7 = scalar_select 0, %s6, %s4
  loop: start=0, step=1, limit=4
  $region2: #{conv_block_bbox.3} parent=0 // loop_pre_header
    _
  $region3: #{conv_block_bbox.3} parent=0 // loop_header
    %s9 = sphi 0, %s13
    %p10 = scmp.ge.s32.totalorder %s9, 4
    %s16 = sphi 0, %s28
    %s17 = sphi 0, %s24
    %s18 = sphi 0, %s16
    %s19 = sphi 0, %s17
    %s20 = sphi 0, %s18
    %s21 = sphi 0, %s19
    %s33 = sphi 0, %s35
    %s36 = sphi 0, %s33
    %s37 = sphi 0, %s36
    %s53 = sphi 0, %s37
    %s57 = sphi 0, %s57
    %s59 = sphi 0, %s57
    %s60 = sphi 0, %s59
    %s74 = sphi 0, %s60
    %s78 = sphi 0, %s78
    %s80 = sphi 0, %s78
    %s81 = sphi 0, %s80
    %s95 = sphi 0, %s81
    %s103 = sphi 0, %s105
    %s106 = sphi 0, %s103
    %s107 = sphi 0, %s106
    %s123 = sphi 0, %s107
  $region4: #{conv_block_bbox.3} parent=0 // loop_header_branch
    %12 = sbr.rel (%p10) target = $region8
  $region5: #{conv_block_bbox.3} parent=0 // loop_body
    %s14 = ssub.s32 %s9, 1
    %s15 = ssub.s32 %s9, 2
    %s22 = sadd.s32 1, %s17
    %p23 = scmp.ge.s32.totalorder %s22, 1
    %s24 = scalar_select %p23, 0, %s22
    %s25 = sadd.s32 1, %s16
    %s26 = scalar_select %p23, %s25, %s16
    %p27 = scmp.ge.s32.totalorder %s26, 2
    %s28 = scalar_select %p27, 0, %s26
    %s29 = ssub.s32 %s16, %s28
    %s30 = ssub.s32 %s17, %s24
    %s31 = sor.u32 %s29, %s30
    %p32 = scmp.eq.s32.totalorder %s31, 0
    %s34 = sadd.s32 %s33, 1
    %s35 = scalar_select %p32, %s33, %s34
    %p38 = pneg %p32
    %p39 = scmp.eq.s32.totalorder %s9, 1
    %p40 = por %p38, %p39
    %p41 = scmp.ne.s32.totalorder %s33, %s36
    %p42 = scmp.eq.s32.totalorder %s9, 0
    %p43 = por %p41, %p42
    %p44 = scmp.ne.s32.totalorder %s33, %s36
    %p45 = scmp.eq.s32.totalorder %s14, 1
    %p46 = por %p44, %p45
    %p47 = scmp.ne.s32.totalorder %s36, %s37
    %p48 = scmp.eq.s32.totalorder %s14, 0
    %p49 = por %p47, %p48
    %p50 = scmp.ne.s32.totalorder %s36, %s37
    %p51 = scmp.eq.s32.totalorder %s15, 1
    %p52 = por %p50, %p51
    %p54 = scmp.ne.s32.totalorder %s37, %s53
    %p55 = scmp.eq.s32.totalorder %s15, 0
    %p56 = por %p54, %p55
    %s58 = sadd.s32 %s57, 1
    %p61 = scmp.eq.s32.totalorder %s9, 1
    %p62 = scmp.ne.s32.totalorder %s57, %s59
    %p63 = scmp.eq.s32.totalorder %s9, 0
    %p64 = por %p62, %p63
    %p65 = scmp.ne.s32.totalorder %s57, %s59
    %p66 = scmp.eq.s32.totalorder %s14, 1
    %p67 = por %p65, %p66
    %p68 = scmp.ne.s32.totalorder %s59, %s60
    %p69 = scmp.eq.s32.totalorder %s14, 0
    %p70 = por %p68, %p69
    %p71 = scmp.ne.s32.totalorder %s59, %s60
    %p72 = scmp.eq.s32.totalorder %s15, 1
    %p73 = por %p71, %p72
    %p75 = scmp.ne.s32.totalorder %s60, %s74
    %p76 = scmp.eq.s32.totalorder %s15, 0
    %p77 = por %p75, %p76
    %s79 = sadd.s32 %s78, 1
    %p82 = scmp.eq.s32.totalorder %s9, 1
    %p83 = scmp.ne.s32.totalorder %s78, %s80
    %p84 = scmp.eq.s32.totalorder %s9, 0
    %p85 = por %p83, %p84
    %p86 = scmp.ne.s32.totalorder %s78, %s80
    %p87 = scmp.eq.s32.totalorder %s14, 1
    %p88 = por %p86, %p87
    %p89 = scmp.ne.s32.totalorder %s80, %s81
    %p90 = scmp.eq.s32.totalorder %s14, 0
    %p91 = por %p89, %p90
    %p92 = scmp.ne.s32.totalorder %s80, %s81
    %p93 = scmp.eq.s32.totalorder %s15, 1
    %p94 = por %p92, %p93
    %p96 = scmp.ne.s32.totalorder %s81, %s95
    %p97 = scmp.eq.s32.totalorder %s15, 0
    %p98 = por %p96, %p97
    %s99 = ssub.s32 %s16, %s28
    %s100 = ssub.s32 %s17, %s24
    %s101 = sor.u32 %s99, %s100
    %p102 = scmp.eq.s32.totalorder %s101, 0
    %s104 = sadd.s32 %s103, 1
    %s105 = scalar_select %p102, %s103, %s104
    %p108 = pneg %p102
    %p109 = scmp.eq.s32.totalorder %s9, 1
    %p110 = por %p108, %p109
    %p111 = scmp.ne.s32.totalorder %s103, %s106
    %p112 = scmp.eq.s32.totalorder %s9, 0
    %p113 = por %p111, %p112
    %p114 = scmp.ne.s32.totalorder %s103, %s106
    %p115 = scmp.eq.s32.totalorder %s14, 1
    %p116 = por %p114, %p115
    %p117 = scmp.ne.s32.totalorder %s106, %s107
    %p118 = scmp.eq.s32.totalorder %s14, 0
    %p119 = por %p117, %p118
    %p120 = scmp.ne.s32.totalorder %s106, %s107
    %p121 = scmp.eq.s32.totalorder %s15, 1
    %p122 = por %p120, %p121
    %p124 = scmp.ne.s32.totalorder %s107, %s123
    %p125 = scmp.eq.s32.totalorder %s15, 0
    %p126 = por %p124, %p125
    %p127 = scmp.le.s32.totalorder 1, %s9
    %p128 = scmp.lt.s32.totalorder %s9, 3
    %p129 = pnand %p127, %p128
    %p130 = pneg %p129
    // Predicated region
    $region9: #{conv_block_bbox.3} parent=5 // pred_check
      _
    $region10: #{conv_block_bbox.3} parent=5 // pred_check_branch
      %132 = sbr.rel (%p129) target = $region12
    $region11: #{conv_block_bbox.3} parent=5 // pred_region
      %s133 = ssub.s32 %s9, 1
      // Predicated region
      $region13: #{conv_block_bbox.3} parent=11 // pred_check
        %p134 = pneg %p70
      $region14: #{conv_block_bbox.3} parent=11 // pred_check_branch
        %136 = sbr.rel (%p134) target = $region16
      $region15: #{conv_block_bbox.3} parent=11 // pred_region
        _
      $region16: #{conv_block_bbox.3} parent=11 // pred_fallthru
        _
      // Predicated region
      $region17: #{conv_block_bbox.3} parent=11 // pred_check
        %p137 = pneg %p91
      $region18: #{conv_block_bbox.3} parent=11 // pred_check_branch
        %139 = sbr.rel (%p137) target = $region20
      $region19: #{conv_block_bbox.3} parent=11 // pred_region
        _
      $region20: #{conv_block_bbox.3} parent=11 // pred_fallthru
        _
    $region12: #{conv_block_bbox.3} parent=5 // pred_fallthru
      _
    %p140 = scmp.lt.s32.totalorder %s9, 2
    // Predicated region
    $region21: #{conv_block_bbox.3} parent=5 // pred_check
      %p141 = pneg %p140
    $region22: #{conv_block_bbox.3} parent=5 // pred_check_branch
      %143 = sbr.rel (%p141) target = $region24
    $region23: #{conv_block_bbox.3} parent=5 // pred_region
      // Predicated region
      $region25: #{conv_block_bbox.3} parent=23 // pred_check
        %p144 = pneg %p43
      $region26: #{conv_block_bbox.3} parent=23 // pred_check_branch
        %146 = sbr.rel (%p144) target = $region28
      $region27: #{conv_block_bbox.3} parent=23 // pred_region
        %p147 = scmp.lt.s32.totalorder %s16, 1
        %s148 = scalar_select %p147, %s16, 1
        %p149 = scmp.lt.s32.totalorder %s17, 0
        %s150 = scalar_select %p149, %s17, 0
        %s151 = sadd.s32 %s150, %s148
        %s152 = smul.addr %s151, 4
        %s153 = scalar_lea.vmem %s0, %s152
      $region28: #{conv_block_bbox.3} parent=23 // pred_fallthru
        _
    $region24: #{conv_block_bbox.3} parent=5 // pred_fallthru
      _
    %p154 = scmp.le.s32.totalorder 1, %s9
    %p155 = scmp.lt.s32.totalorder %s9, 3
    %p156 = pnand %p154, %p155
    %p157 = pneg %p156
    // Predicated region
    $region29: #{conv_block_bbox.3} parent=5 // pred_check
      _
    $region30: #{conv_block_bbox.3} parent=5 // pred_check_branch
      %159 = sbr.rel (%p156) target = $region32
    $region31: #{conv_block_bbox.3} parent=5 // pred_region
      %s160 = ssub.s32 %s9, 1
      %p161 = scmp.lt.s32.totalorder %s18, 1
      %s162 = scalar_select %p161, %s18, 1
      %p163 = scmp.lt.s32.totalorder %s19, 0
      %s164 = scalar_select %p163, %s19, 0
      %s165 = sadd.s32 %s164, %s162
      %s166 = smul.addr %s165, 4
      %s167 = scalar_lea.vmem %s0, %s166
      %p168 = pneg %p49
      %p169 = pneg %p46
      %p170 = pneg %p70
      %p171 = pneg %p67
      %p172 = pneg %p91
      %p173 = pneg %p88
      %p174 = pneg %p119
      %p175 = pneg %p116
      %p176 = scmp.lt.s32.totalorder %s18, 1
      %s177 = scalar_select %p176, %s18, 1
      %p178 = scmp.lt.s32.totalorder %s19, 0
      %s179 = scalar_select %p178, %s19, 0
      %s180 = sadd.s32 %s179, %s177
      %s181 = smul.addr %s180, 8
      %s182 = scalar_lea.vmem %s3, %s181
      %p183 = scmp.lt.s32.totalorder %s18, 1
      %s184 = scalar_select %p183, %s18, 1
      %p185 = scmp.lt.s32.totalorder %s19, 0
      %s186 = scalar_select %p185, %s19, 0
      %s187 = sadd.s32 %s186, %s184
      %s188 = smul.addr %s187, 4
      %s189 = scalar_lea.vmem %s0, %s188
      %p190 = scmp.lt.s32.totalorder %s18, 1
      %s191 = scalar_select %p190, %s18, 1
      %p192 = scmp.lt.s32.totalorder %s19, 0
      %s193 = scalar_select %p192, %s19, 0
      %s194 = sadd.s32 %s193, %s191
      %s195 = smul.addr %s194, 8
      %s196 = scalar_lea.vmem %s3, %s195
      %v197 = vld [vmem:[%s189] sm:$0xf]
      %v198 = vunpack.c.l.bf16 %v197
      %v199 = vld [vmem:[%s1] sm:$0xff]
      %201 = vset.pattern.permute.xlu0 0
      %202 = vperm.xlu0 %201, %v199
      %v203 = vpop.permute.xlu0 %202
      %v205 = vmul.f32 %v198, %v203
      %v206 = vld [vmem:[%s2] sm:$0xff]
      %208 = vset.pattern.permute.xlu0 0
      %209 = vperm.xlu0 %208, %v206
      %v210 = vpop.permute.xlu0 %209
      %v212 = vadd.f32 %v205, %v210
      %v213 = vmax.f32 %v212, 0.0
      %214 = vst [vmem:[%s196] sm:$0xff] %v213
      %p215 = scmp.lt.s32.totalorder %s18, 1
      %s216 = scalar_select %p215, %s18, 1
      %p217 = scmp.lt.s32.totalorder %s19, 0
      %s218 = scalar_select %p217, %s19, 0
      %s219 = sadd.s32 %s218, %s216
      %s220 = smul.addr %s219, 8
      %s221 = scalar_lea.vmem %s3, %s220
      // Predicated region
      $region33: #{conv_block_bbox.3} parent=31 // pred_check
        %p222 = pneg %p116
      $region34: #{conv_block_bbox.3} parent=31 // pred_check_branch
        %224 = sbr.rel (%p222) target = $region36
      $region35: #{conv_block_bbox.3} parent=31 // pred_region
        _
      $region36: #{conv_block_bbox.3} parent=31 // pred_fallthru
        _
    $region32: #{conv_block_bbox.3} parent=5 // pred_fallthru
      _
    %p225 = scmp.le.s32.totalorder 2, %s9
    // Predicated region
    $region37: #{conv_block_bbox.3} parent=5 // pred_check
      %p226 = pneg %p225
    $region38: #{conv_block_bbox.3} parent=5 // pred_check_branch
      %228 = sbr.rel (%p226) target = $region40
    $region39: #{conv_block_bbox.3} parent=5 // pred_region
      %s229 = ssub.s32 %s9, 2
      // Predicated region
      $region41: #{conv_block_bbox.3} parent=39 // pred_check
        %p230 = pneg %p122
      $region42: #{conv_block_bbox.3} parent=39 // pred_check_branch
        %232 = sbr.rel (%p230) target = $region44
      $region43: #{conv_block_bbox.3} parent=39 // pred_region
        %p233 = scmp.lt.s32.totalorder %s20, 1
        %s234 = scalar_select %p233, %s20, 1
        %p235 = scmp.lt.s32.totalorder %s21, 0
        %s236 = scalar_select %p235, %s21, 0
        %s237 = sadd.s32 %s236, %s234
        %s238 = smul.addr %s237, 8
        %s239 = scalar_lea.vmem %s3, %s238
      $region44: #{conv_block_bbox.3} parent=39 // pred_fallthru
        _
    $region40: #{conv_block_bbox.3} parent=5 // pred_fallthru
      _
  $region6: #{conv_block_bbox.3} parent=0 // loop_footer
    %s13 = sadd.s32 1, %s9
  $region7: #{conv_block_bbox.3} parent=0 // loop_footer_branch
    %8 = sbr.rel target = $region3
  $region8: #{conv_block_bbox.3} parent=0 // loop_exit
    _

// kernel: conv_block_bbox.2
$region0: #{conv_block_bbox.2}
  #allocation0 [shape = 'u32[]', space=smem, size = 0x4, offset = 0x4, fixed_abs, tag = 'smem constant byte address 0x4 - core index']
  #allocation1 [shape = 'u32[144,128]{1,0:T(1,128)}', space=vmem, size = 0x12000, scoped, tag = 'internal scratch']
  #allocation2 [shape = 'f32[8,128]{1,0:T(8,128)}', space=vmem, size = 0x1000, scoped, tag = 'scratch operand']
  %s0 = inlined_call_operand.vmem [shape: bf16[2,1,32,256], index: 0, kind: input, shape index: {}]
  %s1 = inlined_call_operand.vmem [shape: bf16[9,8,8], index: 1, kind: input, shape index: {}]
  %s2 = inlined_call_operand.vmem [shape: f32[8,1], index: 2, kind: input, shape index: {}]
  %s3 = inlined_call_operand.vmem [shape: f32[1,128], index: 3, kind: input, shape index: {}]
  %s4 = inlined_call_operand.vmem [shape: bf16[2,1,8,128], index: 4, kind: output, shape index: {0}]
  %s5 = inlined_call_operand.vmem [shape: f32[2,1,8,1], index: 5, kind: output, shape index: {1}]
  %s6 = inlined_call_operand.vmem [shape: f32[2,1,8,1], index: 6, kind: output, shape index: {2}]
  %7 = xla_tuple %s4, %s5, %s6
  %s8 = sld [smem:[#allocation0]]
  $region65: #{conv_block_bbox.2} parent=0
    _
  %s10 = ssub.s32 1, %s8
  %s11 = scalar_select 0, %s10, %s8
  loop: start=0, step=1, limit=4
  $region2: #{conv_block_bbox.2} parent=0 // loop_pre_header
    _
  $region3: #{conv_block_bbox.2} parent=0 // loop_header
    %s13 = sphi 0, %s17
    %p14 = scmp.ge.s32.totalorder %s13, 4
    %s20 = sphi 0, %s32
    %s21 = sphi 0, %s28
    %s22 = sphi 0, %s20
    %s23 = sphi 0, %s21
    %s24 = sphi 0, %s22
    %s25 = sphi 0, %s23
    %s37 = sphi 0, %s39
    %s40 = sphi 0, %s37
    %s41 = sphi 0, %s40
    %s57 = sphi 0, %s41
    %s61 = sphi 0, %s61
    %s63 = sphi 0, %s61
    %s64 = sphi 0, %s63
    %s78 = sphi 0, %s64
    %s82 = sphi 0, %s82
    %s84 = sphi 0, %s82
    %s85 = sphi 0, %s84
    %s99 = sphi 0, %s85
    %s103 = sphi 0, %s103
    %s105 = sphi 0, %s103
    %s106 = sphi 0, %s105
    %s120 = sphi 0, %s106
    %s128 = sphi 0, %s130
    %s131 = sphi 0, %s128
    %s132 = sphi 0, %s131
    %s148 = sphi 0, %s132
    %s156 = sphi 0, %s158
    %s159 = sphi 0, %s156
    %s160 = sphi 0, %s159
    %s176 = sphi 0, %s160
    %s184 = sphi 0, %s186
    %s187 = sphi 0, %s184
    %s188 = sphi 0, %s187
    %s204 = sphi 0, %s188
  $region4: #{conv_block_bbox.2} parent=0 // loop_header_branch
    %16 = sbr.rel (%p14) target = $region8
  $region5: #{conv_block_bbox.2} parent=0 // loop_body
    %s18 = ssub.s32 %s13, 1
    %s19 = ssub.s32 %s13, 2
    %s26 = sadd.s32 1, %s21
    %p27 = scmp.ge.s32.totalorder %s26, 1
    %s28 = scalar_select %p27, 0, %s26
    %s29 = sadd.s32 1, %s20
    %s30 = scalar_select %p27, %s29, %s20
    %p31 = scmp.ge.s32.totalorder %s30, 2
    %s32 = scalar_select %p31, 0, %s30
    %s33 = ssub.s32 %s20, %s32
    %s34 = ssub.s32 %s21, %s28
    %s35 = sor.u32 %s33, %s34
    %p36 = scmp.eq.s32.totalorder %s35, 0
    %s38 = sadd.s32 %s37, 1
    %s39 = scalar_select %p36, %s37, %s38
    %p42 = pneg %p36
    %p43 = scmp.eq.s32.totalorder %s13, 1
    %p44 = por %p42, %p43
    %p45 = scmp.ne.s32.totalorder %s37, %s40
    %p46 = scmp.eq.s32.totalorder %s13, 0
    %p47 = por %p45, %p46
    %p48 = scmp.ne.s32.totalorder %s37, %s40
    %p49 = scmp.eq.s32.totalorder %s18, 1
    %p50 = por %p48, %p49
    %p51 = scmp.ne.s32.totalorder %s40, %s41
    %p52 = scmp.eq.s32.totalorder %s18, 0
    %p53 = por %p51, %p52
    %p54 = scmp.ne.s32.totalorder %s40, %s41
    %p55 = scmp.eq.s32.totalorder %s19, 1
    %p56 = por %p54, %p55
    %p58 = scmp.ne.s32.totalorder %s41, %s57
    %p59 = scmp.eq.s32.totalorder %s19, 0
    %p60 = por %p58, %p59
    %s62 = sadd.s32 %s61, 1
    %p65 = scmp.eq.s32.totalorder %s13, 1
    %p66 = scmp.ne.s32.totalorder %s61, %s63
    %p67 = scmp.eq.s32.totalorder %s13, 0
    %p68 = por %p66, %p67
    %p69 = scmp.ne.s32.totalorder %s61, %s63
    %p70 = scmp.eq.s32.totalorder %s18, 1
    %p71 = por %p69, %p70
    %p72 = scmp.ne.s32.totalorder %s63, %s64
    %p73 = scmp.eq.s32.totalorder %s18, 0
    %p74 = por %p72, %p73
    %p75 = scmp.ne.s32.totalorder %s63, %s64
    %p76 = scmp.eq.s32.totalorder %s19, 1
    %p77 = por %p75, %p76
    %p79 = scmp.ne.s32.totalorder %s64, %s78
    %p80 = scmp.eq.s32.totalorder %s19, 0
    %p81 = por %p79, %p80
    %s83 = sadd.s32 %s82, 1
    %p86 = scmp.eq.s32.totalorder %s13, 1
    %p87 = scmp.ne.s32.totalorder %s82, %s84
    %p88 = scmp.eq.s32.totalorder %s13, 0
    %p89 = por %p87, %p88
    %p90 = scmp.ne.s32.totalorder %s82, %s84
    %p91 = scmp.eq.s32.totalorder %s18, 1
    %p92 = por %p90, %p91
    %p93 = scmp.ne.s32.totalorder %s84, %s85
    %p94 = scmp.eq.s32.totalorder %s18, 0
    %p95 = por %p93, %p94
    %p96 = scmp.ne.s32.totalorder %s84, %s85
    %p97 = scmp.eq.s32.totalorder %s19, 1
    %p98 = por %p96, %p97
    %p100 = scmp.ne.s32.totalorder %s85, %s99
    %p101 = scmp.eq.s32.totalorder %s19, 0
    %p102 = por %p100, %p101
    %s104 = sadd.s32 %s103, 1
    %p107 = scmp.eq.s32.totalorder %s13, 1
    %p108 = scmp.ne.s32.totalorder %s103, %s105
    %p109 = scmp.eq.s32.totalorder %s13, 0
    %p110 = por %p108, %p109
    %p111 = scmp.ne.s32.totalorder %s103, %s105
    %p112 = scmp.eq.s32.totalorder %s18, 1
    %p113 = por %p111, %p112
    %p114 = scmp.ne.s32.totalorder %s105, %s106
    %p115 = scmp.eq.s32.totalorder %s18, 0
    %p116 = por %p114, %p115
    %p117 = scmp.ne.s32.totalorder %s105, %s106
    %p118 = scmp.eq.s32.totalorder %s19, 1
    %p119 = por %p117, %p118
    %p121 = scmp.ne.s32.totalorder %s106, %s120
    %p122 = scmp.eq.s32.totalorder %s19, 0
    %p123 = por %p121, %p122
    %s124 = ssub.s32 %s20, %s32
    %s125 = ssub.s32 %s21, %s28
    %s126 = sor.u32 %s124, %s125
    %p127 = scmp.eq.s32.totalorder %s126, 0
    %s129 = sadd.s32 %s128, 1
    %s130 = scalar_select %p127, %s128, %s129
    %p133 = pneg %p127
    %p134 = scmp.eq.s32.totalorder %s13, 1
    %p135 = por %p133, %p134
    %p136 = scmp.ne.s32.totalorder %s128, %s131
    %p137 = scmp.eq.s32.totalorder %s13, 0
    %p138 = por %p136, %p137
    %p139 = scmp.ne.s32.totalorder %s128, %s131
    %p140 = scmp.eq.s32.totalorder %s18, 1
    %p141 = por %p139, %p140
    %p142 = scmp.ne.s32.totalorder %s131, %s132
    %p143 = scmp.eq.s32.totalorder %s18, 0
    %p144 = por %p142, %p143
    %p145 = scmp.ne.s32.totalorder %s131, %s132
    %p146 = scmp.eq.s32.totalorder %s19, 1
    %p147 = por %p145, %p146
    %p149 = scmp.ne.s32.totalorder %s132, %s148
    %p150 = scmp.eq.s32.totalorder %s19, 0
    %p151 = por %p149, %p150
    %s152 = ssub.s32 %s20, %s32
    %s153 = ssub.s32 %s21, %s28
    %s154 = sor.u32 %s152, %s153
    %p155 = scmp.eq.s32.totalorder %s154, 0
    %s157 = sadd.s32 %s156, 1
    %s158 = scalar_select %p155, %s156, %s157
    %p161 = pneg %p155
    %p162 = scmp.eq.s32.totalorder %s13, 1
    %p163 = por %p161, %p162
    %p164 = scmp.ne.s32.totalorder %s156, %s159
    %p165 = scmp.eq.s32.totalorder %s13, 0
    %p166 = por %p164, %p165
    %p167 = scmp.ne.s32.totalorder %s156, %s159
    %p168 = scmp.eq.s32.totalorder %s18, 1
    %p169 = por %p167, %p168
    %p170 = scmp.ne.s32.totalorder %s159, %s160
    %p171 = scmp.eq.s32.totalorder %s18, 0
    %p172 = por %p170, %p171
    %p173 = scmp.ne.s32.totalorder %s159, %s160
    %p174 = scmp.eq.s32.totalorder %s19, 1
    %p175 = por %p173, %p174
    %p177 = scmp.ne.s32.totalorder %s160, %s176
    %p178 = scmp.eq.s32.totalorder %s19, 0
    %p179 = por %p177, %p178
    %s180 = ssub.s32 %s20, %s32
    %s181 = ssub.s32 %s21, %s28
    %s182 = sor.u32 %s180, %s181
    %p183 = scmp.eq.s32.totalorder %s182, 0
    %s185 = sadd.s32 %s184, 1
    %s186 = scalar_select %p183, %s184, %s185
    %p189 = pneg %p183
    %p190 = scmp.eq.s32.totalorder %s13, 1
    %p191 = por %p189, %p190
    %p192 = scmp.ne.s32.totalorder %s184, %s187
    %p193 = scmp.eq.s32.totalorder %s13, 0
    %p194 = por %p192, %p193
    %p195 = scmp.ne.s32.totalorder %s184, %s187
    %p196 = scmp.eq.s32.totalorder %s18, 1
    %p197 = por %p195, %p196
    %p198 = scmp.ne.s32.totalorder %s187, %s188
    %p199 = scmp.eq.s32.totalorder %s18, 0
    %p200 = por %p198, %p199
    %p201 = scmp.ne.s32.totalorder %s187, %s188
    %p202 = scmp.eq.s32.totalorder %s19, 1
    %p203 = por %p201, %p202
    %p205 = scmp.ne.s32.totalorder %s188, %s204
    %p206 = scmp.eq.s32.totalorder %s19, 0
    %p207 = por %p205, %p206
    %p208 = scmp.le.s32.totalorder 1, %s13
    %p209 = scmp.lt.s32.totalorder %s13, 3
    %p210 = pnand %p208, %p209
    %p211 = pneg %p210
    // Predicated region
    $region9: #{conv_block_bbox.2} parent=5 // pred_check
      _
    $region10: #{conv_block_bbox.2} parent=5 // pred_check_branch
      %213 = sbr.rel (%p210) target = $region12
    $region11: #{conv_block_bbox.2} parent=5 // pred_region
      %s214 = ssub.s32 %s13, 1
      // Predicated region
      $region13: #{conv_block_bbox.2} parent=11 // pred_check
        %p215 = pneg %p74
      $region14: #{conv_block_bbox.2} parent=11 // pred_check_branch
        %217 = sbr.rel (%p215) target = $region16
      $region15: #{conv_block_bbox.2} parent=11 // pred_region
        _
      $region16: #{conv_block_bbox.2} parent=11 // pred_fallthru
        _
      // Predicated region
      $region17: #{conv_block_bbox.2} parent=11 // pred_check
        %p218 = pneg %p95
      $region18: #{conv_block_bbox.2} parent=11 // pred_check_branch
        %220 = sbr.rel (%p218) target = $region20
      $region19: #{conv_block_bbox.2} parent=11 // pred_region
        _
      $region20: #{conv_block_bbox.2} parent=11 // pred_fallthru
        _
      // Predicated region
      $region21: #{conv_block_bbox.2} parent=11 // pred_check
        %p221 = pneg %p116
      $region22: #{conv_block_bbox.2} parent=11 // pred_check_branch
        %223 = sbr.rel (%p221) target = $region24
      $region23: #{conv_block_bbox.2} parent=11 // pred_region
        _
      $region24: #{conv_block_bbox.2} parent=11 // pred_fallthru
        _
    $region12: #{conv_block_bbox.2} parent=5 // pred_fallthru
      _
    %p224 = scmp.lt.s32.totalorder %s13, 2
    // Predicated region
    $region25: #{conv_block_bbox.2} parent=5 // pred_check
      %p225 = pneg %p224
    $region26: #{conv_block_bbox.2} parent=5 // pred_check_branch
      %227 = sbr.rel (%p225) target = $region28
    $region27: #{conv_block_bbox.2} parent=5 // pred_region
      // Predicated region
      $region29: #{conv_block_bbox.2} parent=27 // pred_check
        %p228 = pneg %p47
      $region30: #{conv_block_bbox.2} parent=27 // pred_check_branch
        %230 = sbr.rel (%p228) target = $region32
      $region31: #{conv_block_bbox.2} parent=27 // pred_region
        %p231 = scmp.lt.s32.totalorder %s20, 1
        %s232 = scalar_select %p231, %s20, 1
        %p233 = scmp.lt.s32.totalorder %s21, 0
        %s234 = scalar_select %p233, %s21, 0
        %s235 = smul.addr %s234, 8
        %s236 = smul.addr %s232, 8
        %s237 = sadd.s32 %s235, %s236
        %s238 = smul.addr %s237, 4
        %s239 = scalar_lea.vmem %s0, %s238
      $region32: #{conv_block_bbox.2} parent=27 // pred_fallthru
        _
    $region28: #{conv_block_bbox.2} parent=5 // pred_fallthru
      _
    %p240 = scmp.le.s32.totalorder 1, %s13
    %p241 = scmp.lt.s32.totalorder %s13, 3
    %p242 = pnand %p240, %p241
    %p243 = pneg %p242
    // Predicated region
    $region33: #{conv_block_bbox.2} parent=5 // pred_check
      _
    $region34: #{conv_block_bbox.2} parent=5 // pred_check_branch
      %245 = sbr.rel (%p242) target = $region36
    $region35: #{conv_block_bbox.2} parent=5 // pred_region
      %s246 = ssub.s32 %s13, 1
      %p247 = scmp.lt.s32.totalorder %s22, 1
      %s248 = scalar_select %p247, %s22, 1
      %p249 = scmp.lt.s32.totalorder %s23, 0
      %s250 = scalar_select %p249, %s23, 0
      %s251 = smul.addr %s250, 8
      %s252 = smul.addr %s248, 8
      %s253 = sadd.s32 %s251, %s252
      %s254 = smul.addr %s253, 4
      %s255 = scalar_lea.vmem %s0, %s254
      %p256 = pneg %p53
      %p257 = pneg %p50
      %p258 = pneg %p74
      %p259 = pneg %p71
      %p260 = pneg %p95
      %p261 = pneg %p92
      %p262 = pneg %p116
      %p263 = pneg %p113
      %p264 = pneg %p144
      %p265 = pneg %p141
      %p266 = scmp.lt.s32.totalorder %s22, 1
      %s267 = scalar_select %p266, %s22, 1
      %p268 = scmp.lt.s32.totalorder %s23, 0
      %s269 = scalar_select %p268, %s23, 0
      %s270 = sadd.s32 %s269, %s267
      %s271 = smul.addr %s270, 4
      %s272 = scalar_lea.vmem %s4, %s271
      %p273 = pneg %p172
      %p274 = pneg %p169
      %p275 = scmp.lt.s32.totalorder %s22, 1
      %s276 = scalar_select %p275, %s22, 1
      %p277 = scmp.lt.s32.totalorder %s23, 0
      %s278 = scalar_select %p277, %s23, 0
      %s279 = sadd.s32 %s278, %s276
      %s280 = smul.addr %s279, 8
      %s281 = scalar_lea.vmem %s5, %s280
      %p282 = pneg %p200
      %p283 = pneg %p197
      %p284 = scmp.lt.s32.totalorder %s22, 1
      %s285 = scalar_select %p284, %s22, 1
      %p286 = scmp.lt.s32.totalorder %s23, 0
      %s287 = scalar_select %p286, %s23, 0
      %s288 = sadd.s32 %s287, %s285
      %s289 = smul.addr %s288, 8
      %s290 = scalar_lea.vmem %s6, %s289
      %p291 = scmp.lt.s32.totalorder %s22, 1
      %s292 = scalar_select %p291, %s22, 1
      %p293 = scmp.lt.s32.totalorder %s23, 0
      %s294 = scalar_select %p293, %s23, 0
      %s295 = smul.addr %s294, 8
      %s296 = smul.addr %s292, 8
      %s297 = sadd.s32 %s295, %s296
      %s298 = smul.addr %s297, 4
      %s299 = scalar_lea.vmem %s0, %s298
      %p300 = scmp.lt.s32.totalorder %s22, 1
      %s301 = scalar_select %p300, %s22, 1
      %p302 = scmp.lt.s32.totalorder %s23, 0
      %s303 = scalar_select %p302, %s23, 0
      %s304 = sadd.s32 %s303, %s301
      %s305 = smul.addr %s304, 4
      %s306 = scalar_lea.vmem %s4, %s305
      %p307 = scmp.lt.s32.totalorder %s22, 1
      %s308 = scalar_select %p307, %s22, 1
      %p309 = scmp.lt.s32.totalorder %s23, 0
      %s310 = scalar_select %p309, %s23, 0
      %s311 = sadd.s32 %s310, %s308
      %s312 = smul.addr %s311, 8
      %s313 = scalar_lea.vmem %s5, %s312
      %p314 = scmp.lt.s32.totalorder %s22, 1
      %s315 = scalar_select %p314, %s22, 1
      %p316 = scmp.lt.s32.totalorder %s23, 0
      %s317 = scalar_select %p316, %s23, 0
      %s318 = sadd.s32 %s317, %s315
      %s319 = smul.addr %s318, 8
      %s320 = scalar_lea.vmem %s6, %s319
      %v322 = vld [vmem:[%s299] sm:$0xff]
      %v323 = vld [vmem:[%s299 + $0x8] sm:$0xff]
      %v324 = vld [vmem:[%s299 + $0x10] sm:$0xff]
      %v325 = vld [vmem:[%s299 + $0x18] sm:$0xff]
      %v326 = vld [vmem:[%s3] sm:$0x1]
      %v327 = vld [vmem:[%s1] sm:$0xf]
      %s328 = scalar_lea.vmem %s1, 4
      %v329 = vld [vmem:[%s328] sm:$0xf]
      %vm330 = vcmask 64512
      %v332 = vsel %vm330, %v329, 0
      %vm334 = vcmask 1043456
      %v336 = vsel %vm334, %v323, 0
      %338 = vmatprep.subr.bf16.mxu0 0
      %339 = vmatpush1.bf16.msra.mxu0 %v336
      %340 = vmatprep.subr.bf16.mxu0 0
      %341 = vmatpush1.bf16.msra.mxu0 0
      %342 = vmatprep.subr.bf16.mxu0 0
      %343 = vmatpush1.bf16.msra.mxu0 0
      %344 = vmatprep.subr.bf16.mxu0 0
      %345 = vmatpush1.bf16.msra.mxu0 0
      %346 = vmatprep.subr.bf16.mxu0 0
      %347 = vmatpush1.bf16.msra.mxu0 0
      %348 = vmatprep.subr.bf16.mxu0 0
      %349 = vmatpush1.bf16.msra.mxu0 0
      %350 = vmatprep.subr.bf16.mxu0 0
      %351 = vmatpush1.bf16.msra.mxu0 0
      %352 = vmatprep.subr.bf16.mxu0 0
      %353 = vmatpush1.bf16.msra.mxu0 0
      %354 = vmatprep.subr.bf16.mxu0 0
      %355 = vmatpush1.bf16.msra.mxu0 0
      %356 = vmatprep.subr.bf16.mxu0 0
      %357 = vmatpush1.bf16.msra.mxu0 0
      %358 = vmatprep.subr.bf16.mxu0 0
      %359 = vmatpush1.bf16.msra.mxu0 0
      %360 = vmatprep.subr.bf16.mxu0 0
      %361 = vmatpush1.bf16.msra.mxu0 0
      %362 = vmatprep.subr.bf16.mxu0 0
      %363 = vmatpush1.bf16.msra.mxu0 0
      %364 = vmatprep.subr.bf16.mxu0 0
      %365 = vmatpush1.bf16.msra.mxu0 0
      %366 = vmatprep.subr.bf16.mxu0 0
      %367 = vmatpush1.bf16.msra.mxu0 0
      %368 = vmatprep.subr.bf16.mxu0 0
      %369 = vmatpush1.bf16.msra.mxu0 0
      %370 = vmatprep.mubr.bf16.mxu0 0
      %371 = vmatmul.mubr.bf16.gmra.mrb[0].mxu0 %v332
      %v372 = vpop.f32.mrb[0].mxu0
      %v373 = vadd.f32 0.0, %v372
      %v374 = vpop.f32.mrb[0].mxu0
      %v375 = vpop.f32.mrb[0].mxu0
      %v376 = vpop.f32.mrb[0].mxu0
      %377 = vdwg.mxu0
      %v379 = vsel %vm330, %v327, 0
      %v382 = vsel %vm334, %v322, 0
      %384 = vmatprep.subr.bf16.mxu0 0
      %385 = vmatpush1.bf16.msra.mxu0 %v382
      %386 = vmatprep.subr.bf16.mxu0 0
      %387 = vmatpush1.bf16.msra.mxu0 0
      %388 = vmatprep.subr.bf16.mxu0 0
      %389 = vmatpush1.bf16.msra.mxu0 0
      %390 = vmatprep.subr.bf16.mxu0 0
      %391 = vmatpush1.bf16.msra.mxu0 0
      %392 = vmatprep.subr.bf16.mxu0 0
      %393 = vmatpush1.bf16.msra.mxu0 0
      %394 = vmatprep.subr.bf16.mxu0 0
      %395 = vmatpush1.bf16.msra.mxu0 0
      %396 = vmatprep.subr.bf16.mxu0 0
      %397 = vmatpush1.bf16.msra.mxu0 0
      %398 = vmatprep.subr.bf16.mxu0 0
      %399 = vmatpush1.bf16.msra.mxu0 0
      %400 = vmatprep.subr.bf16.mxu0 0
      %401 = vmatpush1.bf16.msra.mxu0 0
      %402 = vmatprep.subr.bf16.mxu0 0
      %403 = vmatpush1.bf16.msra.mxu0 0
      %404 = vmatprep.subr.bf16.mxu0 0
      %405 = vmatpush1.bf16.msra.mxu0 0
      %406 = vmatprep.subr.bf16.mxu0 0
      %407 = vmatpush1.bf16.msra.mxu0 0
      %408 = vmatprep.subr.bf16.mxu0 0
      %409 = vmatpush1.bf16.msra.mxu0 0
      %410 = vmatprep.subr.bf16.mxu0 0
      %411 = vmatpush1.bf16.msra.mxu0 0
      %412 = vmatprep.subr.bf16.mxu0 0
      %413 = vmatpush1.bf16.msra.mxu0 0
      %414 = vmatprep.subr.bf16.mxu0 0
      %415 = vmatpush1.bf16.msra.mxu0 0
      %416 = vmatprep.mubr.bf16.mxu0 0
      %417 = vmatmul.mubr.bf16.gmra.mrb[0].mxu0 %v379
      %v418 = vpop.f32.mrb[0].mxu0
      %v419 = vadd.f32 %v373, %v418
      %v420 = vpop.f32.mrb[0].mxu0
      %v421 = vpop.f32.mrb[0].mxu0
      %v422 = vpop.f32.mrb[0].mxu0
      %423 = vdwg.mxu0
      %s424 = scalar_lea.vmem %s1, 8
      %v425 = vld [vmem:[%s424] sm:$0xf]
      %v427 = vunpack.c.l.b16 %v322
      %v428 = vunpack.c.h.b16 %v322
      %v429 = vpack.c.b16 %v427, %v427
      %v430 = vpack.c.b16 %v428, %v428
      %431 = vrot.lane.b32.xlu0 %v429, 127
      %v432 = vpop.permute.xlu0 %431
      %433 = vrot.lane.b32.xlu0 %v430, 127
      %v434 = vpop.permute.xlu0 %433
      %vm435 = vcmask 1039360
      %v436 = vsel %vm435, %v432, %v434
      %v438 = vsel %vm330, %v425, 0
      %v441 = vsel %vm334, %v436, 0
      %443 = vmatprep.subr.bf16.mxu0 0
      %444 = vmatpush1.bf16.msra.mxu0 %v441
      %445 = vmatprep.subr.bf16.mxu0 0
      %446 = vmatpush1.bf16.msra.mxu0 0
      %447 = vmatprep.subr.bf16.mxu0 0
      %448 = vmatpush1.bf16.msra.mxu0 0
      %449 = vmatprep.subr.bf16.mxu0 0
      %450 = vmatpush1.bf16.msra.mxu0 0
      %451 = vmatprep.subr.bf16.mxu0 0
      %452 = vmatpush1.bf16.msra.mxu0 0
      %453 = vmatprep.subr.bf16.mxu0 0
      %454 = vmatpush1.bf16.msra.mxu0 0
      %455 = vmatprep.subr.bf16.mxu0 0
      %456 = vmatpush1.bf16.msra.mxu0 0
      %457 = vmatprep.subr.bf16.mxu0 0
      %458 = vmatpush1.bf16.msra.mxu0 0
      %459 = vmatprep.subr.bf16.mxu0 0
      %460 = vmatpush1.bf16.msra.mxu0 0
      %461 = vmatprep.subr.bf16.mxu0 0
      %462 = vmatpush1.bf16.msra.mxu0 0
      %463 = vmatprep.subr.bf16.mxu0 0
      %464 = vmatpush1.bf16.msra.mxu0 0
      %465 = vmatprep.subr.bf16.mxu0 0
      %466 = vmatpush1.bf16.msra.mxu0 0
      %467 = vmatprep.subr.bf16.mxu0 0
      %468 = vmatpush1.bf16.msra.mxu0 0
      %469 = vmatprep.subr.bf16.mxu0 0
      %470 = vmatpush1.bf16.msra.mxu0 0
      %471 = vmatprep.subr.bf16.mxu0 0
      %472 = vmatpush1.bf16.msra.mxu0 0
      %473 = vmatprep.subr.bf16.mxu0 0
      %474 = vmatpush1.bf16.msra.mxu0 0
      %475 = vmatprep.mubr.bf16.mxu0 0
      %476 = vmatmul.mubr.bf16.gmra.mrb[0].mxu0 %v438
      %v477 = vpop.f32.mrb[0].mxu0
      %v478 = vadd.f32 0.0, %v477
      %v479 = vpop.f32.mrb[0].mxu0
      %v480 = vpop.f32.mrb[0].mxu0
      %v481 = vpop.f32.mrb[0].mxu0
      %482 = vdwg.mxu0
      %v483 = vadd.f32 %v419, %v478
      %s484 = scalar_lea.vmem %s1, 12
      %v485 = vld [vmem:[%s484] sm:$0xf]
      %v487 = vsel %vm330, %v485, 0
      %v490 = vsel %vm334, %v324, 0
      %492 = vmatprep.subr.bf16.mxu0 0
      %493 = vmatpush1.bf16.msra.mxu0 %v490
      %494 = vmatprep.subr.bf16.mxu0 0
      %495 = vmatpush1.bf16.msra.mxu0 0
      %496 = vmatprep.subr.bf16.mxu0 0
      %497 = vmatpush1.bf16.msra.mxu0 0
      %498 = vmatprep.subr.bf16.mxu0 0
      %499 = vmatpush1.bf16.msra.mxu0 0
      %500 = vmatprep.subr.bf16.mxu0 0
      %501 = vmatpush1.bf16.msra.mxu0 0
      %502 = vmatprep.subr.bf16.mxu0 0
      %503 = vmatpush1.bf16.msra.mxu0 0
      %504 = vmatprep.subr.bf16.mxu0 0
      %505 = vmatpush1.bf16.msra.mxu0 0
      %506 = vmatprep.subr.bf16.mxu0 0
      %507 = vmatpush1.bf16.msra.mxu0 0
      %508 = vmatprep.subr.bf16.mxu0 0
      %509 = vmatpush1.bf16.msra.mxu0 0
      %510 = vmatprep.subr.bf16.mxu0 0
      %511 = vmatpush1.bf16.msra.mxu0 0
      %512 = vmatprep.subr.bf16.mxu0 0
      %513 = vmatpush1.bf16.msra.mxu0 0
      %514 = vmatprep.subr.bf16.mxu0 0
      %515 = vmatpush1.bf16.msra.mxu0 0
      %516 = vmatprep.subr.bf16.mxu0 0
      %517 = vmatpush1.bf16.msra.mxu0 0
      %518 = vmatprep.subr.bf16.mxu0 0
      %519 = vmatpush1.bf16.msra.mxu0 0
      %520 = vmatprep.subr.bf16.mxu0 0
      %521 = vmatpush1.bf16.msra.mxu0 0
      %522 = vmatprep.subr.bf16.mxu0 0
      %523 = vmatpush1.bf16.msra.mxu0 0
      %524 = vmatprep.mubr.bf16.mxu0 0
      %525 = vmatmul.mubr.bf16.gmra.mrb[0].mxu0 %v487
      %v526 = vpop.f32.mrb[0].mxu0
      %v527 = vadd.f32 0.0, %v526
      %v528 = vpop.f32.mrb[0].mxu0
      %v529 = vpop.f32.mrb[0].mxu0
      %v530 = vpop.f32.mrb[0].mxu0
      %531 = vdwg.mxu0
      %v532 = vadd.f32 %v483, %v527
      %s533 = scalar_lea.vmem %s1, 16
      %v534 = vld [vmem:[%s533] sm:$0xf]
      %v536 = vsel %vm330, %v534, 0
      %v539 = vsel %vm334, %v325, 0
      %541 = vmatprep.subr.bf16.mxu0 0
      %542 = vmatpush1.bf16.msra.mxu0 %v539
      %543 = vmatprep.subr.bf16.mxu0 0
      %544 = vmatpush1.bf16.msra.mxu0 0
      %545 = vmatprep.subr.bf16.mxu0 0
      %546 = vmatpush1.bf16.msra.mxu0 0
      %547 = vmatprep.subr.bf16.mxu0 0
      %548 = vmatpush1.bf16.msra.mxu0 0
      %549 = vmatprep.subr.bf16.mxu0 0
      %550 = vmatpush1.bf16.msra.mxu0 0
      %551 = vmatprep.subr.bf16.mxu0 0
      %552 = vmatpush1.bf16.msra.mxu0 0
      %553 = vmatprep.subr.bf16.mxu0 0
      %554 = vmatpush1.bf16.msra.mxu0 0
      %555 = vmatprep.subr.bf16.mxu0 0
      %556 = vmatpush1.bf16.msra.mxu0 0
      %557 = vmatprep.subr.bf16.mxu0 0
      %558 = vmatpush1.bf16.msra.mxu0 0
      %559 = vmatprep.subr.bf16.mxu0 0
      %560 = vmatpush1.bf16.msra.mxu0 0
      %561 = vmatprep.subr.bf16.mxu0 0
      %562 = vmatpush1.bf16.msra.mxu0 0
      %563 = vmatprep.subr.bf16.mxu0 0
      %564 = vmatpush1.bf16.msra.mxu0 0
      %565 = vmatprep.subr.bf16.mxu0 0
      %566 = vmatpush1.bf16.msra.mxu0 0
      %567 = vmatprep.subr.bf16.mxu0 0
      %568 = vmatpush1.bf16.msra.mxu0 0
      %569 = vmatprep.subr.bf16.mxu0 0
      %570 = vmatpush1.bf16.msra.mxu0 0
      %571 = vmatprep.subr.bf16.mxu0 0
      %572 = vmatpush1.bf16.msra.mxu0 0
      %573 = vmatprep.mubr.bf16.mxu0 0
      %574 = vmatmul.mubr.bf16.gmra.mrb[0].mxu0 %v536
      %v575 = vpop.f32.mrb[0].mxu0
      %v576 = vadd.f32 0.0, %v575
      %v577 = vpop.f32.mrb[0].mxu0
      %v578 = vpop.f32.mrb[0].mxu0
      %v579 = vpop.f32.mrb[0].mxu0
      %580 = vdwg.mxu0
      %v581 = vadd.f32 %v532, %v576
      %s582 = scalar_lea.vmem %s1, 20
      %v583 = vld [vmem:[%s582] sm:$0xf]
      %v585 = vunpack.c.l.b16 %v324
      %v586 = vunpack.c.h.b16 %v324
      %v587 = vpack.c.b16 %v585, %v585
      %v588 = vpack.c.b16 %v586, %v586
      %589 = vrot.lane.b32.xlu0 %v587, 127
      %v590 = vpop.permute.xlu0 %589
      %591 = vrot.lane.b32.xlu0 %v588, 127
      %v592 = vpop.permute.xlu0 %591
      %v593 = vsel %vm435, %v590, %v592
      %v595 = vsel %vm330, %v583, 0
      %v598 = vsel %vm334, %v593, 0
      %600 = vmatprep.subr.bf16.mxu0 0
      %601 = vmatpush1.bf16.msra.mxu0 %v598
      %602 = vmatprep.subr.bf16.mxu0 0
      %603 = vmatpush1.bf16.msra.mxu0 0
      %604 = vmatprep.subr.bf16.mxu0 0
      %605 = vmatpush1.bf16.msra.mxu0 0
      %606 = vmatprep.subr.bf16.mxu0 0
      %607 = vmatpush1.bf16.msra.mxu0 0
      %608 = vmatprep.subr.bf16.mxu0 0
      %609 = vmatpush1.bf16.msra.mxu0 0
      %610 = vmatprep.subr.bf16.mxu0 0
      %611 = vmatpush1.bf16.msra.mxu0 0
      %612 = vmatprep.subr.bf16.mxu0 0
      %613 = vmatpush1.bf16.msra.mxu0 0
      %614 = vmatprep.subr.bf16.mxu0 0
      %615 = vmatpush1.bf16.msra.mxu0 0
      %616 = vmatprep.subr.bf16.mxu0 0
      %617 = vmatpush1.bf16.msra.mxu0 0
      %618 = vmatprep.subr.bf16.mxu0 0
      %619 = vmatpush1.bf16.msra.mxu0 0
      %620 = vmatprep.subr.bf16.mxu0 0
      %621 = vmatpush1.bf16.msra.mxu0 0
      %622 = vmatprep.subr.bf16.mxu0 0
      %623 = vmatpush1.bf16.msra.mxu0 0
      %624 = vmatprep.subr.bf16.mxu0 0
      %625 = vmatpush1.bf16.msra.mxu0 0
      %626 = vmatprep.subr.bf16.mxu0 0
      %627 = vmatpush1.bf16.msra.mxu0 0
      %628 = vmatprep.subr.bf16.mxu0 0
      %629 = vmatpush1.bf16.msra.mxu0 0
      %630 = vmatprep.subr.bf16.mxu0 0
      %631 = vmatpush1.bf16.msra.mxu0 0
      %632 = vmatprep.mubr.bf16.mxu0 0
      %633 = vmatmul.mubr.bf16.gmra.mrb[0].mxu0 %v595
      %v634 = vpop.f32.mrb[0].mxu0
      %v635 = vadd.f32 0.0, %v634
      %v636 = vpop.f32.mrb[0].mxu0
      %v637 = vpop.f32.mrb[0].mxu0
      %v638 = vpop.f32.mrb[0].mxu0
      %639 = vdwg.mxu0
      %v640 = vadd.f32 %v581, %v635
      %s641 = scalar_lea.vmem %s1, 24
      %v642 = vld [vmem:[%s641] sm:$0xf]
      %643 = vrot.lane.b32.xlu0 %v429, 119
      %v644 = vpop.permute.xlu0 %643
      %645 = vrot.lane.b32.xlu0 %v430, 119
      %v646 = vpop.permute.xlu0 %645
      %vm647 = vcmask 973824
      %v648 = vsel %vm647, %v644, %v646
      %v650 = vsel %vm330, %v642, 0
      %v653 = vsel %vm334, %v648, 0
      %655 = vmatprep.subr.bf16.mxu0 0
      %656 = vmatpush1.bf16.msra.mxu0 %v653
      %657 = vmatprep.subr.bf16.mxu0 0
      %658 = vmatpush1.bf16.msra.mxu0 0
      %659 = vmatprep.subr.bf16.mxu0 0
      %660 = vmatpush1.bf16.msra.mxu0 0
      %661 = vmatprep.subr.bf16.mxu0 0
      %662 = vmatpush1.bf16.msra.mxu0 0
      %663 = vmatprep.subr.bf16.mxu0 0
      %664 = vmatpush1.bf16.msra.mxu0 0
      %665 = vmatprep.subr.bf16.mxu0 0
      %666 = vmatpush1.bf16.msra.mxu0 0
      %667 = vmatprep.subr.bf16.mxu0 0
      %668 = vmatpush1.bf16.msra.mxu0 0
      %669 = vmatprep.subr.bf16.mxu0 0
      %670 = vmatpush1.bf16.msra.mxu0 0
      %671 = vmatprep.subr.bf16.mxu0 0
      %672 = vmatpush1.bf16.msra.mxu0 0
      %673 = vmatprep.subr.bf16.mxu0 0
      %674 = vmatpush1.bf16.msra.mxu0 0
      %675 = vmatprep.subr.bf16.mxu0 0
      %676 = vmatpush1.bf16.msra.mxu0 0
      %677 = vmatprep.subr.bf16.mxu0 0
      %678 = vmatpush1.bf16.msra.mxu0 0
      %679 = vmatprep.subr.bf16.mxu0 0
      %680 = vmatpush1.bf16.msra.mxu0 0
      %681 = vmatprep.subr.bf16.mxu0 0
      %682 = vmatpush1.bf16.msra.mxu0 0
      %683 = vmatprep.subr.bf16.mxu0 0
      %684 = vmatpush1.bf16.msra.mxu0 0
      %685 = vmatprep.subr.bf16.mxu0 0
      %686 = vmatpush1.bf16.msra.mxu0 0
      %687 = vmatprep.mubr.bf16.mxu0 0
      %688 = vmatmul.mubr.bf16.gmra.mrb[0].mxu0 %v650
      %v689 = vpop.f32.mrb[0].mxu0
      %v690 = vadd.f32 0.0, %v689
      %v691 = vpop.f32.mrb[0].mxu0
      %v692 = vpop.f32.mrb[0].mxu0
      %v693 = vpop.f32.mrb[0].mxu0
      %694 = vdwg.mxu0
      %v695 = vadd.f32 %v640, %v690
      %s696 = scalar_lea.vmem %s1, 28
      %v697 = vld [vmem:[%s696] sm:$0xf]
      %v699 = vunpack.c.l.b16 %v323
      %v700 = vunpack.c.h.b16 %v323
      %v701 = vpack.c.b16 %v699, %v699
      %v702 = vpack.c.b16 %v700, %v700
      %703 = vrot.lane.b32.xlu0 %v701, 119
      %v704 = vpop.permute.xlu0 %703
      %705 = vrot.lane.b32.xlu0 %v702, 119
      %v706 = vpop.permute.xlu0 %705
      %v707 = vsel %vm647, %v704, %v706
      %v709 = vsel %vm330, %v697, 0
      %v712 = vsel %vm334, %v707, 0
      %714 = vmatprep.subr.bf16.mxu0 0
      %715 = vmatpush1.bf16.msra.mxu0 %v712
      %716 = vmatprep.subr.bf16.mxu0 0
      %717 = vmatpush1.bf16.msra.mxu0 0
      %718 = vmatprep.subr.bf16.mxu0 0
      %719 = vmatpush1.bf16.msra.mxu0 0
      %720 = vmatprep.subr.bf16.mxu0 0
      %721 = vmatpush1.bf16.msra.mxu0 0
      %722 = vmatprep.subr.bf16.mxu0 0
      %723 = vmatpush1.bf16.msra.mxu0 0
      %724 = vmatprep.subr.bf16.mxu0 0
      %725 = vmatpush1.bf16.msra.mxu0 0
      %726 = vmatprep.subr.bf16.mxu0 0
      %727 = vmatpush1.bf16.msra.mxu0 0
      %728 = vmatprep.subr.bf16.mxu0 0
      %729 = vmatpush1.bf16.msra.mxu0 0
      %730 = vmatprep.subr.bf16.mxu0 0
      %731 = vmatpush1.bf16.msra.mxu0 0
      %732 = vmatprep.subr.bf16.mxu0 0
      %733 = vmatpush1.bf16.msra.mxu0 0
      %734 = vmatprep.subr.bf16.mxu0 0
      %735 = vmatpush1.bf16.msra.mxu0 0
      %736 = vmatprep.subr.bf16.mxu0 0
      %737 = vmatpush1.bf16.msra.mxu0 0
      %738 = vmatprep.subr.bf16.mxu0 0
      %739 = vmatpush1.bf16.msra.mxu0 0
      %740 = vmatprep.subr.bf16.mxu0 0
      %741 = vmatpush1.bf16.msra.mxu0 0
      %742 = vmatprep.subr.bf16.mxu0 0
      %743 = vmatpush1.bf16.msra.mxu0 0
      %744 = vmatprep.subr.bf16.mxu0 0
      %745 = vmatpush1.bf16.msra.mxu0 0
      %746 = vmatprep.mubr.bf16.mxu0 0
      %747 = vmatmul.mubr.bf16.gmra.mrb[0].mxu0 %v709
      %v748 = vpop.f32.mrb[0].mxu0
      %v749 = vadd.f32 0.0, %v748
      %v750 = vpop.f32.mrb[0].mxu0
      %v751 = vpop.f32.mrb[0].mxu0
      %v752 = vpop.f32.mrb[0].mxu0
      %753 = vdwg.mxu0
      %v754 = vadd.f32 %v695, %v749
      %s755 = scalar_lea.vmem %s1, 32
      %v756 = vld [vmem:[%s755] sm:$0xf]
      %757 = vrot.lane.b32.xlu0 %v429, 118
      %v758 = vpop.permute.xlu0 %757
      %759 = vrot.lane.b32.xlu0 %v430, 118
      %v760 = vpop.permute.xlu0 %759
      %vm761 = vcmask 965632
      %v762 = vsel %vm761, %v758, %v760
      %v764 = vsel %vm330, %v756, 0
      %v767 = vsel %vm334, %v762, 0
      %769 = vmatprep.subr.bf16.mxu0 0
      %770 = vmatpush1.bf16.msra.mxu0 %v767
      %771 = vmatprep.subr.bf16.mxu0 0
      %772 = vmatpush1.bf16.msra.mxu0 0
      %773 = vmatprep.subr.bf16.mxu0 0
      %774 = vmatpush1.bf16.msra.mxu0 0
      %775 = vmatprep.subr.bf16.mxu0 0
      %776 = vmatpush1.bf16.msra.mxu0 0
      %777 = vmatprep.subr.bf16.mxu0 0
      %778 = vmatpush1.bf16.msra.mxu0 0
      %779 = vmatprep.subr.bf16.mxu0 0
      %780 = vmatpush1.bf16.msra.mxu0 0
      %781 = vmatprep.subr.bf16.mxu0 0
      %782 = vmatpush1.bf16.msra.mxu0 0
      %783 = vmatprep.subr.bf16.mxu0 0
      %784 = vmatpush1.bf16.msra.mxu0 0
      %785 = vmatprep.subr.bf16.mxu0 0
      %786 = vmatpush1.bf16.msra.mxu0 0
      %787 = vmatprep.subr.bf16.mxu0 0
      %788 = vmatpush1.bf16.msra.mxu0 0
      %789 = vmatprep.subr.bf16.mxu0 0
      %790 = vmatpush1.bf16.msra.mxu0 0
      %791 = vmatprep.subr.bf16.mxu0 0
      %792 = vmatpush1.bf16.msra.mxu0 0
      %793 = vmatprep.subr.bf16.mxu0 0
      %794 = vmatpush1.bf16.msra.mxu0 0
      %795 = vmatprep.subr.bf16.mxu0 0
      %796 = vmatpush1.bf16.msra.mxu0 0
      %797 = vmatprep.subr.bf16.mxu0 0
      %798 = vmatpush1.bf16.msra.mxu0 0
      %799 = vmatprep.subr.bf16.mxu0 0
      %800 = vmatpush1.bf16.msra.mxu0 0
      %801 = vmatprep.mubr.bf16.mxu0 0
      %802 = vmatmul.mubr.bf16.gmra.mrb[0].mxu0 %v764
      %v803 = vpop.f32.mrb[0].mxu0
      %v804 = vadd.f32 0.0, %v803
      %v805 = vpop.f32.mrb[0].mxu0
      %v806 = vpop.f32.mrb[0].mxu0
      %v807 = vpop.f32.mrb[0].mxu0
      %808 = vdwg.mxu0
      %v809 = vadd.f32 %v754, %v804
      %810 = vst [vmem:[#allocation2] sm:$0xff] %v809
      %v811 = vmul.f32 %v809, %v809
      %v813 = vlaneseq
      %v814 = vshrl.u32 %v813, 7
      %v815 = vsub.s32 0, %v814
      %v816 = vrot.slane %v326, %v815
      %v818 = vmul.f32 %v811, %v816
      %819 = vadd.xlane.f32.xlu0 %v818
      %v820 = vpop.xlane.xlu0 %819
      %v821 = vadd.f32 %v820, 0.0
      %v822 = vld [vmem:[%s1] sm:$0xf]
      %v823 = vld [vmem:[%s328] sm:$0xf]
      %v825 = vsel %vm330, %v823, 0
      %827 = vmatprep.subr.bf16.mxu0 0
      %828 = vmatpush1.bf16.msra.mxu0 %v441
      %829 = vmatprep.subr.bf16.mxu0 0
      %830 = vmatpush1.bf16.msra.mxu0 0
      %831 = vmatprep.subr.bf16.mxu0 0
      %832 = vmatpush1.bf16.msra.mxu0 0
      %833 = vmatprep.subr.bf16.mxu0 0
      %834 = vmatpush1.bf16.msra.mxu0 0
      %835 = vmatprep.subr.bf16.mxu0 0
      %836 = vmatpush1.bf16.msra.mxu0 0
      %837 = vmatprep.subr.bf16.mxu0 0
      %838 = vmatpush1.bf16.msra.mxu0 0
      %839 = vmatprep.subr.bf16.mxu0 0
      %840 = vmatpush1.bf16.msra.mxu0 0
      %841 = vmatprep.subr.bf16.mxu0 0
      %842 = vmatpush1.bf16.msra.mxu0 0
      %843 = vmatprep.subr.bf16.mxu0 0
      %844 = vmatpush1.bf16.msra.mxu0 0
      %845 = vmatprep.subr.bf16.mxu0 0
      %846 = vmatpush1.bf16.msra.mxu0 0
      %847 = vmatprep.subr.bf16.mxu0 0
      %848 = vmatpush1.bf16.msra.mxu0 0
      %849 = vmatprep.subr.bf16.mxu0 0
      %850 = vmatpush1.bf16.msra.mxu0 0
      %851 = vmatprep.subr.bf16.mxu0 0
      %852 = vmatpush1.bf16.msra.mxu0 0
      %853 = vmatprep.subr.bf16.mxu0 0
      %854 = vmatpush1.bf16.msra.mxu0 0
      %855 = vmatprep.subr.bf16.mxu0 0
      %856 = vmatpush1.bf16.msra.mxu0 0
      %857 = vmatprep.subr.bf16.mxu0 0
      %858 = vmatpush1.bf16.msra.mxu0 0
      %859 = vmatprep.mubr.bf16.mxu0 0
      %860 = vmatmul.mubr.bf16.gmra.mrb[0].mxu0 %v825
      %v861 = vpop.f32.mrb[0].mxu0
      %v862 = vadd.f32 0.0, %v861
      %v863 = vpop.f32.mrb[0].mxu0
      %v864 = vpop.f32.mrb[0].mxu0
      %v865 = vpop.f32.mrb[0].mxu0
      %866 = vdwg.mxu0
      %v868 = vsel %vm330, %v822, 0
      %870 = vmatprep.subr.bf16.mxu0 0
      %871 = vmatpush1.bf16.msra.mxu0 %v336
      %872 = vmatprep.subr.bf16.mxu0 0
      %873 = vmatpush1.bf16.msra.mxu0 0
      %874 = vmatprep.subr.bf16.mxu0 0
      %875 = vmatpush1.bf16.msra.mxu0 0
      %876 = vmatprep.subr.bf16.mxu0 0
      %877 = vmatpush1.bf16.msra.mxu0 0
      %878 = vmatprep.subr.bf16.mxu0 0
      %879 = vmatpush1.bf16.msra.mxu0 0
      %880 = vmatprep.subr.bf16.mxu0 0
      %881 = vmatpush1.bf16.msra.mxu0 0
      %882 = vmatprep.subr.bf16.mxu0 0
      %883 = vmatpush1.bf16.msra.mxu0 0
      %884 = vmatprep.subr.bf16.mxu0 0
      %885 = vmatpush1.bf16.msra.mxu0 0
      %886 = vmatprep.subr.bf16.mxu0 0
      %887 = vmatpush1.bf16.msra.mxu0 0
      %888 = vmatprep.subr.bf16.mxu0 0
      %889 = vmatpush1.bf16.msra.mxu0 0
      %890 = vmatprep.subr.bf16.mxu0 0
      %891 = vmatpush1.bf16.msra.mxu0 0
      %892 = vmatprep.subr.bf16.mxu0 0
      %893 = vmatpush1.bf16.msra.mxu0 0
      %894 = vmatprep.subr.bf16.mxu0 0
      %895 = vmatpush1.bf16.msra.mxu0 0
      %896 = vmatprep.subr.bf16.mxu0 0
      %897 = vmatpush1.bf16.msra.mxu0 0
      %898 = vmatprep.subr.bf16.mxu0 0
      %899 = vmatpush1.bf16.msra.mxu0 0
      %900 = vmatprep.subr.bf16.mxu0 0
      %901 = vmatpush1.bf16.msra.mxu0 0
      %902 = vmatprep.mubr.bf16.mxu0 0
      %903 = vmatmul.mubr.bf16.gmra.mrb[0].mxu0 %v868
      %v904 = vpop.f32.mrb[0].mxu0
      %v905 = vadd.f32 %v862, %v904
      %v906 = vpop.f32.mrb[0].mxu0
      %v907 = vpop.f32.mrb[0].mxu0
      %v908 = vpop.f32.mrb[0].mxu0
      %909 = vdwg.mxu0
      %v910 = vld [vmem:[%s424] sm:$0xf]
      %911 = vrot.lane.b32.xlu0 %v701, 127
      %v912 = vpop.permute.xlu0 %911
      %913 = vrot.lane.b32.xlu0 %v702, 127
      %v914 = vpop.permute.xlu0 %913
      %v915 = vsel %vm435, %v912, %v914
      %v917 = vsel %vm330, %v910, 0
      %v920 = vsel %vm334, %v915, 0
      %922 = vmatprep.subr.bf16.mxu0 0
      %923 = vmatpush1.bf16.msra.mxu0 %v920
      %924 = vmatprep.subr.bf16.mxu0 0
      %925 = vmatpush1.bf16.msra.mxu0 0
      %926 = vmatprep.subr.bf16.mxu0 0
      %927 = vmatpush1.bf16.msra.mxu0 0
      %928 = vmatprep.subr.bf16.mxu0 0
      %929 = vmatpush1.bf16.msra.mxu0 0
      %930 = vmatprep.subr.bf16.mxu0 0
      %931 = vmatpush1.bf16.msra.mxu0 0
      %932 = vmatprep.subr.bf16.mxu0 0
      %933 = vmatpush1.bf16.msra.mxu0 0
      %934 = vmatprep.subr.bf16.mxu0 0
      %935 = vmatpush1.bf16.msra.mxu0 0
      %936 = vmatprep.subr.bf16.mxu0 0
      %937 = vmatpush1.bf16.msra.mxu0 0
      %938 = vmatprep.subr.bf16.mxu0 0
      %939 = vmatpush1.bf16.msra.mxu0 0
      %940 = vmatprep.subr.bf16.mxu0 0
      %941 = vmatpush1.bf16.msra.mxu0 0
      %942 = vmatprep.subr.bf16.mxu0 0
      %943 = vmatpush1.bf16.msra.mxu0 0
      %944 = vmatprep.subr.bf16.mxu0 0
      %945 = vmatpush1.bf16.msra.mxu0 0
      %946 = vmatprep.subr.bf16.mxu0 0
      %947 = vmatpush1.bf16.msra.mxu0 0
      %948 = vmatprep.subr.bf16.mxu0 0
      %949 = vmatpush1.bf16.msra.mxu0 0
      %950 = vmatprep.subr.bf16.mxu0 0
      %951 = vmatpush1.bf16.msra.mxu0 0
      %952 = vmatprep.subr.bf16.mxu0 0
      %953 = vmatpush1.bf16.msra.mxu0 0
      %954 = vmatprep.mubr.bf16.mxu0 0
      %955 = vmatmul.mubr.bf16.gmra.mrb[0].mxu0 %v917
      %v956 = vpop.f32.mrb[0].mxu0
      %v957 = vadd.f32 0.0, %v956
      %v958 = vpop.f32.mrb[0].mxu0
      %v959 = vpop.f32.mrb[0].mxu0
      %v960 = vpop.f32.mrb[0].mxu0
      %961 = vdwg.mxu0
      %v962 = vadd.f32 %v905, %v957
      %v963 = vld [vmem:[%s484] sm:$0xf]
      %v965 = vsel %vm330, %v963, 0
      %967 = vmatprep.subr.bf16.mxu0 0
      %968 = vmatpush1.bf16.msra.mxu0 %v539
      %969 = vmatprep.subr.bf16.mxu0 0
      %970 = vmatpush1.bf16.msra.mxu0 0
      %971 = vmatprep.subr.bf16.mxu0 0
      %972 = vmatpush1.bf16.msra.mxu0 0
      %973 = vmatprep.subr.bf16.mxu0 0
      %974 = vmatpush1.bf16.msra.mxu0 0
      %975 = vmatprep.subr.bf16.mxu0 0
      %976 = vmatpush1.bf16.msra.mxu0 0
      %977 = vmatprep.subr.bf16.mxu0 0
      %978 = vmatpush1.bf16.msra.mxu0 0
      %979 = vmatprep.subr.bf16.mxu0 0
      %980 = vmatpush1.bf16.msra.mxu0 0
      %981 = vmatprep.subr.bf16.mxu0 0
      %982 = vmatpush1.bf16.msra.mxu0 0
      %983 = vmatprep.subr.bf16.mxu0 0
      %984 = vmatpush1.bf16.msra.mxu0 0
      %985 = vmatprep.subr.bf16.mxu0 0
      %986 = vmatpush1.bf16.msra.mxu0 0
      %987 = vmatprep.subr.bf16.mxu0 0
      %988 = vmatpush1.bf16.msra.mxu0 0
      %989 = vmatprep.subr.bf16.mxu0 0
      %990 = vmatpush1.bf16.msra.mxu0 0
      %991 = vmatprep.subr.bf16.mxu0 0
      %992 = vmatpush1.bf16.msra.mxu0 0
      %993 = vmatprep.subr.bf16.mxu0 0
      %994 = vmatpush1.bf16.msra.mxu0 0
      %995 = vmatprep.subr.bf16.mxu0 0
      %996 = vmatpush1.bf16.msra.mxu0 0
      %997 = vmatprep.subr.bf16.mxu0 0
      %998 = vmatpush1.bf16.msra.mxu0 0
      %999 = vmatprep.mubr.bf16.mxu0 0
      %1000 = vmatmul.mubr.bf16.gmra.mrb[0].mxu0 %v965
      %v1001 = vpop.f32.mrb[0].mxu0
      %v1002 = vadd.f32 0.0, %v1001
      %v1003 = vpop.f32.mrb[0].mxu0
      %v1004 = vpop.f32.mrb[0].mxu0
      %v1005 = vpop.f32.mrb[0].mxu0
      %1006 = vdwg.mxu0
      %v1007 = vadd.f32 %v962, %v1002
      %v1008 = vld [vmem:[%s533] sm:$0xf]
      %v1010 = vsel %vm330, %v1008, 0
      %1012 = vmatprep.subr.bf16.mxu0 0
      %1013 = vmatpush1.bf16.msra.mxu0 %v598
      %1014 = vmatprep.subr.bf16.mxu0 0
      %1015 = vmatpush1.bf16.msra.mxu0 0
      %1016 = vmatprep.subr.bf16.mxu0 0
      %1017 = vmatpush1.bf16.msra.mxu0 0
      %1018 = vmatprep.subr.bf16.mxu0 0
      %1019 = vmatpush1.bf16.msra.mxu0 0
      %1020 = vmatprep.subr.bf16.mxu0 0
      %1021 = vmatpush1.bf16.msra.mxu0 0
      %1022 = vmatprep.subr.bf16.mxu0 0
      %1023 = vmatpush1.bf16.msra.mxu0 0
      %1024 = vmatprep.subr.bf16.mxu0 0
      %1025 = vmatpush1.bf16.msra.mxu0 0
      %1026 = vmatprep.subr.bf16.mxu0 0
      %1027 = vmatpush1.bf16.msra.mxu0 0
      %1028 = vmatprep.subr.bf16.mxu0 0
      %1029 = vmatpush1.bf16.msra.mxu0 0
      %1030 = vmatprep.subr.bf16.mxu0 0
      %1031 = vmatpush1.bf16.msra.mxu0 0
      %1032 = vmatprep.subr.bf16.mxu0 0
      %1033 = vmatpush1.bf16.msra.mxu0 0
      %1034 = vmatprep.subr.bf16.mxu0 0
      %1035 = vmatpush1.bf16.msra.mxu0 0
      %1036 = vmatprep.subr.bf16.mxu0 0
      %1037 = vmatpush1.bf16.msra.mxu0 0
      %1038 = vmatprep.subr.bf16.mxu0 0
      %1039 = vmatpush1.bf16.msra.mxu0 0
      %1040 = vmatprep.subr.bf16.mxu0 0
      %1041 = vmatpush1.bf16.msra.mxu0 0
      %1042 = vmatprep.subr.bf16.mxu0 0
      %1043 = vmatpush1.bf16.msra.mxu0 0
      %1044 = vmatprep.mubr.bf16.mxu0 0
      %1045 = vmatmul.mubr.bf16.gmra.mrb[0].mxu0 %v1010
      %v1046 = vpop.f32.mrb[0].mxu0
      %v1047 = vadd.f32 0.0, %v1046
      %v1048 = vpop.f32.mrb[0].mxu0
      %v1049 = vpop.f32.mrb[0].mxu0
      %v1050 = vpop.f32.mrb[0].mxu0
      %1051 = vdwg.mxu0
      %v1052 = vadd.f32 %v1007, %v1047
      %v1053 = vld [vmem:[%s582] sm:$0xf]
      %v1055 = vunpack.c.l.b16 %v325
      %v1056 = vunpack.c.h.b16 %v325
      %v1057 = vpack.c.b16 %v1055, %v1055
      %v1058 = vpack.c.b16 %v1056, %v1056
      %1059 = vrot.lane.b32.xlu0 %v1057, 127
      %v1060 = vpop.permute.xlu0 %1059
      %1061 = vrot.lane.b32.xlu0 %v1058, 127
      %v1062 = vpop.permute.xlu0 %1061
      %v1063 = vsel %vm435, %v1060, %v1062
      %v1065 = vsel %vm330, %v1053, 0
      %v1068 = vsel %vm334, %v1063, 0
      %1070 = vmatprep.subr.bf16.mxu0 0
      %1071 = vmatpush1.bf16.msra.mxu0 %v1068
      %1072 = vmatprep.subr.bf16.mxu0 0
      %1073 = vmatpush1.bf16.msra.mxu0 0
      %1074 = vmatprep.subr.bf16.mxu0 0
      %1075 = vmatpush1.bf16.msra.mxu0 0
      %1076 = vmatprep.subr.bf16.mxu0 0
      %1077 = vmatpush1.bf16.msra.mxu0 0
      %1078 = vmatprep.subr.bf16.mxu0 0
      %1079 = vmatpush1.bf16.msra.mxu0 0
      %1080 = vmatprep.subr.bf16.mxu0 0
      %1081 = vmatpush1.bf16.msra.mxu0 0
      %1082 = vmatprep.subr.bf16.mxu0 0
      %1083 = vmatpush1.bf16.msra.mxu0 0
      %1084 = vmatprep.subr.bf16.mxu0 0
      %1085 = vmatpush1.bf16.msra.mxu0 0
      %1086 = vmatprep.subr.bf16.mxu0 0
      %1087 = vmatpush1.bf16.msra.mxu0 0
      %1088 = vmatprep.subr.bf16.mxu0 0
      %1089 = vmatpush1.bf16.msra.mxu0 0
      %1090 = vmatprep.subr.bf16.mxu0 0
      %1091 = vmatpush1.bf16.msra.mxu0 0
      %1092 = vmatprep.subr.bf16.mxu0 0
      %1093 = vmatpush1.bf16.msra.mxu0 0
      %1094 = vmatprep.subr.bf16.mxu0 0
      %1095 = vmatpush1.bf16.msra.mxu0 0
      %1096 = vmatprep.subr.bf16.mxu0 0
      %1097 = vmatpush1.bf16.msra.mxu0 0
      %1098 = vmatprep.subr.bf16.mxu0 0
      %1099 = vmatpush1.bf16.msra.mxu0 0
      %1100 = vmatprep.subr.bf16.mxu0 0
      %1101 = vmatpush1.bf16.msra.mxu0 0
      %1102 = vmatprep.mubr.bf16.mxu0 0
      %1103 = vmatmul.mubr.bf16.gmra.mrb[0].mxu0 %v1065
      %v1104 = vpop.f32.mrb[0].mxu0
      %v1105 = vadd.f32 0.0, %v1104
      %v1106 = vpop.f32.mrb[0].mxu0
      %v1107 = vpop.f32.mrb[0].mxu0
      %v1108 = vpop.f32.mrb[0].mxu0
      %1109 = vdwg.mxu0
      %v1110 = vadd.f32 %v1052, %v1105
      %v1111 = vld [vmem:[%s641] sm:$0xf]
      %v1113 = vsel %vm330, %v1111, 0
      %1115 = vmatprep.subr.bf16.mxu0 0
      %1116 = vmatpush1.bf16.msra.mxu0 %v712
      %1117 = vmatprep.subr.bf16.mxu0 0
      %1118 = vmatpush1.bf16.msra.mxu0 0
      %1119 = vmatprep.subr.bf16.mxu0 0
      %1120 = vmatpush1.bf16.msra.mxu0 0
      %1121 = vmatprep.subr.bf16.mxu0 0
      %1122 = vmatpush1.bf16.msra.mxu0 0
      %1123 = vmatprep.subr.bf16.mxu0 0
      %1124 = vmatpush1.bf16.msra.mxu0 0
      %1125 = vmatprep.subr.bf16.mxu0 0
      %1126 = vmatpush1.bf16.msra.mxu0 0
      %1127 = vmatprep.subr.bf16.mxu0 0
      %1128 = vmatpush1.bf16.msra.mxu0 0
      %1129 = vmatprep.subr.bf16.mxu0 0
      %1130 = vmatpush1.bf16.msra.mxu0 0
      %1131 = vmatprep.subr.bf16.mxu0 0
      %1132 = vmatpush1.bf16.msra.mxu0 0
      %1133 = vmatprep.subr.bf16.mxu0 0
      %1134 = vmatpush1.bf16.msra.mxu0 0
      %1135 = vmatprep.subr.bf16.mxu0 0
      %1136 = vmatpush1.bf16.msra.mxu0 0
      %1137 = vmatprep.subr.bf16.mxu0 0
      %1138 = vmatpush1.bf16.msra.mxu0 0
      %1139 = vmatprep.subr.bf16.mxu0 0
      %1140 = vmatpush1.bf16.msra.mxu0 0
      %1141 = vmatprep.subr.bf16.mxu0 0
      %1142 = vmatpush1.bf16.msra.mxu0 0
      %1143 = vmatprep.subr.bf16.mxu0 0
      %1144 = vmatpush1.bf16.msra.mxu0 0
      %1145 = vmatprep.subr.bf16.mxu0 0
      %1146 = vmatpush1.bf16.msra.mxu0 0
      %1147 = vmatprep.mubr.bf16.mxu0 0
      %1148 = vmatmul.mubr.bf16.gmra.mrb[0].mxu0 %v1113
      %v1149 = vpop.f32.mrb[0].mxu0
      %v1150 = vadd.f32 0.0, %v1149
      %v1151 = vpop.f32.mrb[0].mxu0
      %v1152 = vpop.f32.mrb[0].mxu0
      %v1153 = vpop.f32.mrb[0].mxu0
      %1154 = vdwg.mxu0
      %v1155 = vadd.f32 %v1110, %v1150
      %v1156 = vld [vmem:[%s696] sm:$0xf]
      %v1158 = vsel %vm330, %v1156, 0
      %1160 = vmatprep.subr.bf16.mxu0 0
      %1161 = vmatpush1.bf16.msra.mxu0 %v767
      %1162 = vmatprep.subr.bf16.mxu0 0
      %1163 = vmatpush1.bf16.msra.mxu0 0
      %1164 = vmatprep.subr.bf16.mxu0 0
      %1165 = vmatpush1.bf16.msra.mxu0 0
      %1166 = vmatprep.subr.bf16.mxu0 0
      %1167 = vmatpush1.bf16.msra.mxu0 0
      %1168 = vmatprep.subr.bf16.mxu0 0
      %1169 = vmatpush1.bf16.msra.mxu0 0
      %1170 = vmatprep.subr.bf16.mxu0 0
      %1171 = vmatpush1.bf16.msra.mxu0 0
      %1172 = vmatprep.subr.bf16.mxu0 0
      %1173 = vmatpush1.bf16.msra.mxu0 0
      %1174 = vmatprep.subr.bf16.mxu0 0
      %1175 = vmatpush1.bf16.msra.mxu0 0
      %1176 = vmatprep.subr.bf16.mxu0 0
      %1177 = vmatpush1.bf16.msra.mxu0 0
      %1178 = vmatprep.subr.bf16.mxu0 0
      %1179 = vmatpush1.bf16.msra.mxu0 0
      %1180 = vmatprep.subr.bf16.mxu0 0
      %1181 = vmatpush1.bf16.msra.mxu0 0
      %1182 = vmatprep.subr.bf16.mxu0 0
      %1183 = vmatpush1.bf16.msra.mxu0 0
      %1184 = vmatprep.subr.bf16.mxu0 0
      %1185 = vmatpush1.bf16.msra.mxu0 0
      %1186 = vmatprep.subr.bf16.mxu0 0
      %1187 = vmatpush1.bf16.msra.mxu0 0
      %1188 = vmatprep.subr.bf16.mxu0 0
      %1189 = vmatpush1.bf16.msra.mxu0 0
      %1190 = vmatprep.subr.bf16.mxu0 0
      %1191 = vmatpush1.bf16.msra.mxu0 0
      %1192 = vmatprep.mubr.bf16.mxu0 0
      %1193 = vmatmul.mubr.bf16.gmra.mrb[0].mxu0 %v1158
      %v1194 = vpop.f32.mrb[0].mxu0
      %v1195 = vadd.f32 0.0, %v1194
      %v1196 = vpop.f32.mrb[0].mxu0
      %v1197 = vpop.f32.mrb[0].mxu0
      %v1198 = vpop.f32.mrb[0].mxu0
      %1199 = vdwg.mxu0
      %v1200 = vadd.f32 %v1155, %v1195
      %v1201 = vld [vmem:[%s755] sm:$0xf]
      %1202 = vrot.lane.b32.xlu0 %v701, 118
      %v1203 = vpop.permute.xlu0 %1202
      %1204 = vrot.lane.b32.xlu0 %v702, 118
      %v1205 = vpop.permute.xlu0 %1204
      %v1206 = vsel %vm761, %v1203, %v1205
      %v1208 = vsel %vm330, %v1201, 0
      %v1211 = vsel %vm334, %v1206, 0
      %1213 = vmatprep.subr.bf16.mxu0 0
      %1214 = vmatpush1.bf16.msra.mxu0 %v1211
      %1215 = vmatprep.subr.bf16.mxu0 0
      %1216 = vmatpush1.bf16.msra.mxu0 0
      %1217 = vmatprep.subr.bf16.mxu0 0
      %1218 = vmatpush1.bf16.msra.mxu0 0
      %1219 = vmatprep.subr.bf16.mxu0 0
      %1220 = vmatpush1.bf16.msra.mxu0 0
      %1221 = vmatprep.subr.bf16.mxu0 0
      %1222 = vmatpush1.bf16.msra.mxu0 0
      %1223 = vmatprep.subr.bf16.mxu0 0
      %1224 = vmatpush1.bf16.msra.mxu0 0
      %1225 = vmatprep.subr.bf16.mxu0 0
      %1226 = vmatpush1.bf16.msra.mxu0 0
      %1227 = vmatprep.subr.bf16.mxu0 0
      %1228 = vmatpush1.bf16.msra.mxu0 0
      %1229 = vmatprep.subr.bf16.mxu0 0
      %1230 = vmatpush1.bf16.msra.mxu0 0
      %1231 = vmatprep.subr.bf16.mxu0 0
      %1232 = vmatpush1.bf16.msra.mxu0 0
      %1233 = vmatprep.subr.bf16.mxu0 0
      %1234 = vmatpush1.bf16.msra.mxu0 0
      %1235 = vmatprep.subr.bf16.mxu0 0
      %1236 = vmatpush1.bf16.msra.mxu0 0
      %1237 = vmatprep.subr.bf16.mxu0 0
      %1238 = vmatpush1.bf16.msra.mxu0 0
      %1239 = vmatprep.subr.bf16.mxu0 0
      %1240 = vmatpush1.bf16.msra.mxu0 0
      %1241 = vmatprep.subr.bf16.mxu0 0
      %1242 = vmatpush1.bf16.msra.mxu0 0
      %1243 = vmatprep.subr.bf16.mxu0 0
      %1244 = vmatpush1.bf16.msra.mxu0 0
      %1245 = vmatprep.mubr.bf16.mxu0 0
      %1246 = vmatmul.mubr.bf16.gmra.mrb[0].mxu0 %v1208
      %v1247 = vpop.f32.mrb[0].mxu0
      %v1248 = vadd.f32 0.0, %v1247
      %v1249 = vpop.f32.mrb[0].mxu0
      %v1250 = vpop.f32.mrb[0].mxu0
      %v1251 = vpop.f32.mrb[0].mxu0
      %1252 = vdwg.mxu0
      %v1253 = vadd.f32 %v1200, %v1248
      %v1254 = vld [vmem:[#allocation2] sm:$0xff]
      %v1255 = vadd.f32 %v1254, %v1253
      %1256 = vst [vmem:[#allocation2] sm:$0xff] %v1255
      %v1257 = vmul.f32 %v1253, %v1253
      %v1258 = vmul.f32 %v1257, %v816
      %1259 = vadd.xlane.f32.xlu0 %v1258
      %v1260 = vpop.xlane.xlu0 %1259
      %v1261 = vadd.f32 %v821, %v1260
      %v1262 = vld [vmem:[%s1] sm:$0xf]
      %v1263 = vld [vmem:[%s328] sm:$0xf]
      %v1265 = vsel %vm330, %v1263, 0
      %1267 = vmatprep.subr.bf16.mxu0 0
      %1268 = vmatpush1.bf16.msra.mxu0 %v539
      %1269 = vmatprep.subr.bf16.mxu0 0
      %1270 = vmatpush1.bf16.msra.mxu0 0
      %1271 = vmatprep.subr.bf16.mxu0 0
      %1272 = vmatpush1.bf16.msra.mxu0 0
      %1273 = vmatprep.subr.bf16.mxu0 0
      %1274 = vmatpush1.bf16.msra.mxu0 0
      %1275 = vmatprep.subr.bf16.mxu0 0
      %1276 = vmatpush1.bf16.msra.mxu0 0
      %1277 = vmatprep.subr.bf16.mxu0 0
      %1278 = vmatpush1.bf16.msra.mxu0 0
      %1279 = vmatprep.subr.bf16.mxu0 0
      %1280 = vmatpush1.bf16.msra.mxu0 0
      %1281 = vmatprep.subr.bf16.mxu0 0
      %1282 = vmatpush1.bf16.msra.mxu0 0
      %1283 = vmatprep.subr.bf16.mxu0 0
      %1284 = vmatpush1.bf16.msra.mxu0 0
      %1285 = vmatprep.subr.bf16.mxu0 0
      %1286 = vmatpush1.bf16.msra.mxu0 0
      %1287 = vmatprep.subr.bf16.mxu0 0
      %1288 = vmatpush1.bf16.msra.mxu0 0
      %1289 = vmatprep.subr.bf16.mxu0 0
      %1290 = vmatpush1.bf16.msra.mxu0 0
      %1291 = vmatprep.subr.bf16.mxu0 0
      %1292 = vmatpush1.bf16.msra.mxu0 0
      %1293 = vmatprep.subr.bf16.mxu0 0
      %1294 = vmatpush1.bf16.msra.mxu0 0
      %1295 = vmatprep.subr.bf16.mxu0 0
      %1296 = vmatpush1.bf16.msra.mxu0 0
      %1297 = vmatprep.subr.bf16.mxu0 0
      %1298 = vmatpush1.bf16.msra.mxu0 0
      %1299 = vmatprep.mubr.bf16.mxu0 0
      %1300 = vmatmul.mubr.bf16.gmra.mrb[0].mxu0 %v1265
      %v1301 = vpop.f32.mrb[0].mxu0
      %v1302 = vadd.f32 0.0, %v1301
      %v1303 = vpop.f32.mrb[0].mxu0
      %v1304 = vpop.f32.mrb[0].mxu0
      %v1305 = vpop.f32.mrb[0].mxu0
      %1306 = vdwg.mxu0
      %v1308 = vsel %vm330, %v1262, 0
      %1310 = vmatprep.subr.bf16.mxu0 0
      %1311 = vmatpush1.bf16.msra.mxu0 %v490
      %1312 = vmatprep.subr.bf16.mxu0 0
      %1313 = vmatpush1.bf16.msra.mxu0 0
      %1314 = vmatprep.subr.bf16.mxu0 0
      %1315 = vmatpush1.bf16.msra.mxu0 0
      %1316 = vmatprep.subr.bf16.mxu0 0
      %1317 = vmatpush1.bf16.msra.mxu0 0
      %1318 = vmatprep.subr.bf16.mxu0 0
      %1319 = vmatpush1.bf16.msra.mxu0 0
      %1320 = vmatprep.subr.bf16.mxu0 0
      %1321 = vmatpush1.bf16.msra.mxu0 0
      %1322 = vmatprep.subr.bf16.mxu0 0
      %1323 = vmatpush1.bf16.msra.mxu0 0
      %1324 = vmatprep.subr.bf16.mxu0 0
      %1325 = vmatpush1.bf16.msra.mxu0 0
      %1326 = vmatprep.subr.bf16.mxu0 0
      %1327 = vmatpush1.bf16.msra.mxu0 0
      %1328 = vmatprep.subr.bf16.mxu0 0
      %1329 = vmatpush1.bf16.msra.mxu0 0
      %1330 = vmatprep.subr.bf16.mxu0 0
      %1331 = vmatpush1.bf16.msra.mxu0 0
      %1332 = vmatprep.subr.bf16.mxu0 0
      %1333 = vmatpush1.bf16.msra.mxu0 0
      %1334 = vmatprep.subr.bf16.mxu0 0
      %1335 = vmatpush1.bf16.msra.mxu0 0
      %1336 = vmatprep.subr.bf16.mxu0 0
      %1337 = vmatpush1.bf16.msra.mxu0 0
      %1338 = vmatprep.subr.bf16.mxu0 0
      %1339 = vmatpush1.bf16.msra.mxu0 0
      %1340 = vmatprep.subr.bf16.mxu0 0
      %1341 = vmatpush1.bf16.msra.mxu0 0
      %1342 = vmatprep.mubr.bf16.mxu0 0
      %1343 = vmatmul.mubr.bf16.gmra.mrb[0].mxu0 %v1308
      %v1344 = vpop.f32.mrb[0].mxu0
      %v1345 = vadd.f32 %v1302, %v1344
      %v1346 = vpop.f32.mrb[0].mxu0
      %v1347 = vpop.f32.mrb[0].mxu0
      %v1348 = vpop.f32.mrb[0].mxu0
      %1349 = vdwg.mxu0
      %v1350 = vld [vmem:[%s424] sm:$0xf]
      %v1352 = vsel %vm330, %v1350, 0
      %1354 = vmatprep.subr.bf16.mxu0 0
      %1355 = vmatpush1.bf16.msra.mxu0 %v598
      %1356 = vmatprep.subr.bf16.mxu0 0
      %1357 = vmatpush1.bf16.msra.mxu0 0
      %1358 = vmatprep.subr.bf16.mxu0 0
      %1359 = vmatpush1.bf16.msra.mxu0 0
      %1360 = vmatprep.subr.bf16.mxu0 0
      %1361 = vmatpush1.bf16.msra.mxu0 0
      %1362 = vmatprep.subr.bf16.mxu0 0
      %1363 = vmatpush1.bf16.msra.mxu0 0
      %1364 = vmatprep.subr.bf16.mxu0 0
      %1365 = vmatpush1.bf16.msra.mxu0 0
      %1366 = vmatprep.subr.bf16.mxu0 0
      %1367 = vmatpush1.bf16.msra.mxu0 0
      %1368 = vmatprep.subr.bf16.mxu0 0
      %1369 = vmatpush1.bf16.msra.mxu0 0
      %1370 = vmatprep.subr.bf16.mxu0 0
      %1371 = vmatpush1.bf16.msra.mxu0 0
      %1372 = vmatprep.subr.bf16.mxu0 0
      %1373 = vmatpush1.bf16.msra.mxu0 0
      %1374 = vmatprep.subr.bf16.mxu0 0
      %1375 = vmatpush1.bf16.msra.mxu0 0
      %1376 = vmatprep.subr.bf16.mxu0 0
      %1377 = vmatpush1.bf16.msra.mxu0 0
      %1378 = vmatprep.subr.bf16.mxu0 0
      %1379 = vmatpush1.bf16.msra.mxu0 0
      %1380 = vmatprep.subr.bf16.mxu0 0
      %1381 = vmatpush1.bf16.msra.mxu0 0
      %1382 = vmatprep.subr.bf16.mxu0 0
      %1383 = vmatpush1.bf16.msra.mxu0 0
      %1384 = vmatprep.subr.bf16.mxu0 0
      %1385 = vmatpush1.bf16.msra.mxu0 0
      %1386 = vmatprep.mubr.bf16.mxu0 0
      %1387 = vmatmul.mubr.bf16.gmra.mrb[0].mxu0 %v1352
      %v1388 = vpop.f32.mrb[0].mxu0
      %v1389 = vadd.f32 0.0, %v1388
      %v1390 = vpop.f32.mrb[0].mxu0
      %v1391 = vpop.f32.mrb[0].mxu0
      %v1392 = vpop.f32.mrb[0].mxu0
      %1393 = vdwg.mxu0
      %v1394 = vadd.f32 %v1345, %v1389
      %v1395 = vld [vmem:[%s484] sm:$0xf]
      %v1397 = vsel %vm330, %v1395, 0
      %1399 = vmatprep.subr.bf16.mxu0 0
      %1400 = vmatpush1.bf16.msra.mxu0 %v653
      %1401 = vmatprep.subr.bf16.mxu0 0
      %1402 = vmatpush1.bf16.msra.mxu0 0
      %1403 = vmatprep.subr.bf16.mxu0 0
      %1404 = vmatpush1.bf16.msra.mxu0 0
      %1405 = vmatprep.subr.bf16.mxu0 0
      %1406 = vmatpush1.bf16.msra.mxu0 0
      %1407 = vmatprep.subr.bf16.mxu0 0
      %1408 = vmatpush1.bf16.msra.mxu0 0
      %1409 = vmatprep.subr.bf16.mxu0 0
      %1410 = vmatpush1.bf16.msra.mxu0 0
      %1411 = vmatprep.subr.bf16.mxu0 0
      %1412 = vmatpush1.bf16.msra.mxu0 0
      %1413 = vmatprep.subr.bf16.mxu0 0
      %1414 = vmatpush1.bf16.msra.mxu0 0
      %1415 = vmatprep.subr.bf16.mxu0 0
      %1416 = vmatpush1.bf16.msra.mxu0 0
      %1417 = vmatprep.subr.bf16.mxu0 0
      %1418 = vmatpush1.bf16.msra.mxu0 0
      %1419 = vmatprep.subr.bf16.mxu0 0
      %1420 = vmatpush1.bf16.msra.mxu0 0
      %1421 = vmatprep.subr.bf16.mxu0 0
      %1422 = vmatpush1.bf16.msra.mxu0 0
      %1423 = vmatprep.subr.bf16.mxu0 0
      %1424 = vmatpush1.bf16.msra.mxu0 0
      %1425 = vmatprep.subr.bf16.mxu0 0
      %1426 = vmatpush1.bf16.msra.mxu0 0
      %1427 = vmatprep.subr.bf16.mxu0 0
      %1428 = vmatpush1.bf16.msra.mxu0 0
      %1429 = vmatprep.subr.bf16.mxu0 0
      %1430 = vmatpush1.bf16.msra.mxu0 0
      %1431 = vmatprep.mubr.bf16.mxu0 0
      %1432 = vmatmul.mubr.bf16.gmra.mrb[0].mxu0 %v1397
      %v1433 = vpop.f32.mrb[0].mxu0
      %v1434 = vadd.f32 0.0, %v1433
      %v1435 = vpop.f32.mrb[0].mxu0
      %v1436 = vpop.f32.mrb[0].mxu0
      %v1437 = vpop.f32.mrb[0].mxu0
      %1438 = vdwg.mxu0
      %v1439 = vadd.f32 %v1394, %v1434
      %v1440 = vld [vmem:[%s533] sm:$0xf]
      %v1442 = vsel %vm330, %v1440, 0
      %1444 = vmatprep.subr.bf16.mxu0 0
      %1445 = vmatpush1.bf16.msra.mxu0 %v712
      %1446 = vmatprep.subr.bf16.mxu0 0
      %1447 = vmatpush1.bf16.msra.mxu0 0
      %1448 = vmatprep.subr.bf16.mxu0 0
      %1449 = vmatpush1.bf16.msra.mxu0 0
      %1450 = vmatprep.subr.bf16.mxu0 0
      %1451 = vmatpush1.bf16.msra.mxu0 0
      %1452 = vmatprep.subr.bf16.mxu0 0
      %1453 = vmatpush1.bf16.msra.mxu0 0
      %1454 = vmatprep.subr.bf16.mxu0 0
      %1455 = vmatpush1.bf16.msra.mxu0 0
      %1456 = vmatprep.subr.bf16.mxu0 0
      %1457 = vmatpush1.bf16.msra.mxu0 0
      %1458 = vmatprep.subr.bf16.mxu0 0
      %1459 = vmatpush1.bf16.msra.mxu0 0
      %1460 = vmatprep.subr.bf16.mxu0 0
      %1461 = vmatpush1.bf16.msra.mxu0 0
      %1462 = vmatprep.subr.bf16.mxu0 0
      %1463 = vmatpush1.bf16.msra.mxu0 0
      %1464 = vmatprep.subr.bf16.mxu0 0
      %1465 = vmatpush1.bf16.msra.mxu0 0
      %1466 = vmatprep.subr.bf16.mxu0 0
      %1467 = vmatpush1.bf16.msra.mxu0 0
      %1468 = vmatprep.subr.bf16.mxu0 0
      %1469 = vmatpush1.bf16.msra.mxu0 0
      %1470 = vmatprep.subr.bf16.mxu0 0
      %1471 = vmatpush1.bf16.msra.mxu0 0
      %1472 = vmatprep.subr.bf16.mxu0 0
      %1473 = vmatpush1.bf16.msra.mxu0 0
      %1474 = vmatprep.subr.bf16.mxu0 0
      %1475 = vmatpush1.bf16.msra.mxu0 0
      %1476 = vmatprep.mubr.bf16.mxu0 0
      %1477 = vmatmul.mubr.bf16.gmra.mrb[0].mxu0 %v1442
      %v1478 = vpop.f32.mrb[0].mxu0
      %v1479 = vadd.f32 0.0, %v1478
      %v1480 = vpop.f32.mrb[0].mxu0
      %v1481 = vpop.f32.mrb[0].mxu0
      %v1482 = vpop.f32.mrb[0].mxu0
      %1483 = vdwg.mxu0
      %v1484 = vadd.f32 %v1439, %v1479
      %v1485 = vld [vmem:[%s582] sm:$0xf]
      %v1487 = vsel %vm330, %v1485, 0
      %1489 = vmatprep.subr.bf16.mxu0 0
      %1490 = vmatpush1.bf16.msra.mxu0 %v767
      %1491 = vmatprep.subr.bf16.mxu0 0
      %1492 = vmatpush1.bf16.msra.mxu0 0
      %1493 = vmatprep.subr.bf16.mxu0 0
      %1494 = vmatpush1.bf16.msra.mxu0 0
      %1495 = vmatprep.subr.bf16.mxu0 0
      %1496 = vmatpush1.bf16.msra.mxu0 0
      %1497 = vmatprep.subr.bf16.mxu0 0
      %1498 = vmatpush1.bf16.msra.mxu0 0
      %1499 = vmatprep.subr.bf16.mxu0 0
      %1500 = vmatpush1.bf16.msra.mxu0 0
      %1501 = vmatprep.subr.bf16.mxu0 0
      %1502 = vmatpush1.bf16.msra.mxu0 0
      %1503 = vmatprep.subr.bf16.mxu0 0
      %1504 = vmatpush1.bf16.msra.mxu0 0
      %1505 = vmatprep.subr.bf16.mxu0 0
      %1506 = vmatpush1.bf16.msra.mxu0 0
      %1507 = vmatprep.subr.bf16.mxu0 0
      %1508 = vmatpush1.bf16.msra.mxu0 0
      %1509 = vmatprep.subr.bf16.mxu0 0
      %1510 = vmatpush1.bf16.msra.mxu0 0
      %1511 = vmatprep.subr.bf16.mxu0 0
      %1512 = vmatpush1.bf16.msra.mxu0 0
      %1513 = vmatprep.subr.bf16.mxu0 0
      %1514 = vmatpush1.bf16.msra.mxu0 0
      %1515 = vmatprep.subr.bf16.mxu0 0
      %1516 = vmatpush1.bf16.msra.mxu0 0
      %1517 = vmatprep.subr.bf16.mxu0 0
      %1518 = vmatpush1.bf16.msra.mxu0 0
      %1519 = vmatprep.subr.bf16.mxu0 0
      %1520 = vmatpush1.bf16.msra.mxu0 0
      %1521 = vmatprep.mubr.bf16.mxu0 0
      %1522 = vmatmul.mubr.bf16.gmra.mrb[0].mxu0 %v1487
      %v1523 = vpop.f32.mrb[0].mxu0
      %v1524 = vadd.f32 0.0, %v1523
      %v1525 = vpop.f32.mrb[0].mxu0
      %v1526 = vpop.f32.mrb[0].mxu0
      %v1527 = vpop.f32.mrb[0].mxu0
      %1528 = vdwg.mxu0
      %v1529 = vadd.f32 %v1484, %v1524
      %v1530 = vld [vmem:[%s641] sm:$0xf]
      %1531 = vrot.lane.b32.xlu0 %v587, 119
      %v1532 = vpop.permute.xlu0 %1531
      %1533 = vrot.lane.b32.xlu0 %v588, 119
      %v1534 = vpop.permute.xlu0 %1533
      %v1535 = vsel %vm647, %v1532, %v1534
      %v1537 = vsel %vm330, %v1530, 0
      %v1540 = vsel %vm334, %v1535, 0
      %1542 = vmatprep.subr.bf16.mxu0 0
      %1543 = vmatpush1.bf16.msra.mxu0 %v1540
      %1544 = vmatprep.subr.bf16.mxu0 0
      %1545 = vmatpush1.bf16.msra.mxu0 0
      %1546 = vmatprep.subr.bf16.mxu0 0
      %1547 = vmatpush1.bf16.msra.mxu0 0
      %1548 = vmatprep.subr.bf16.mxu0 0
      %1549 = vmatpush1.bf16.msra.mxu0 0
      %1550 = vmatprep.subr.bf16.mxu0 0
      %1551 = vmatpush1.bf16.msra.mxu0 0
      %1552 = vmatprep.subr.bf16.mxu0 0
      %1553 = vmatpush1.bf16.msra.mxu0 0
      %1554 = vmatprep.subr.bf16.mxu0 0
      %1555 = vmatpush1.bf16.msra.mxu0 0
      %1556 = vmatprep.subr.bf16.mxu0 0
      %1557 = vmatpush1.bf16.msra.mxu0 0
      %1558 = vmatprep.subr.bf16.mxu0 0
      %1559 = vmatpush1.bf16.msra.mxu0 0
      %1560 = vmatprep.subr.bf16.mxu0 0
      %1561 = vmatpush1.bf16.msra.mxu0 0
      %1562 = vmatprep.subr.bf16.mxu0 0
      %1563 = vmatpush1.bf16.msra.mxu0 0
      %1564 = vmatprep.subr.bf16.mxu0 0
      %1565 = vmatpush1.bf16.msra.mxu0 0
      %1566 = vmatprep.subr.bf16.mxu0 0
      %1567 = vmatpush1.bf16.msra.mxu0 0
      %1568 = vmatprep.subr.bf16.mxu0 0
      %1569 = vmatpush1.bf16.msra.mxu0 0
      %1570 = vmatprep.subr.bf16.mxu0 0
      %1571 = vmatpush1.bf16.msra.mxu0 0
      %1572 = vmatprep.subr.bf16.mxu0 0
      %1573 = vmatpush1.bf16.msra.mxu0 0
      %1574 = vmatprep.mubr.bf16.mxu0 0
      %1575 = vmatmul.mubr.bf16.gmra.mrb[0].mxu0 %v1537
      %v1576 = vpop.f32.mrb[0].mxu0
      %v1577 = vadd.f32 0.0, %v1576
      %v1578 = vpop.f32.mrb[0].mxu0
      %v1579 = vpop.f32.mrb[0].mxu0
      %v1580 = vpop.f32.mrb[0].mxu0
      %1581 = vdwg.mxu0
      %v1582 = vadd.f32 %v1529, %v1577
      %v1583 = vld [vmem:[%s696] sm:$0xf]
      %1584 = vrot.lane.b32.xlu0 %v1057, 119
      %v1585 = vpop.permute.xlu0 %1584
      %1586 = vrot.lane.b32.xlu0 %v1058, 119
      %v1587 = vpop.permute.xlu0 %1586
      %v1588 = vsel %vm647, %v1585, %v1587
      %v1590 = vsel %vm330, %v1583, 0
      %v1593 = vsel %vm334, %v1588, 0
      %1595 = vmatprep.subr.bf16.mxu0 0
      %1596 = vmatpush1.bf16.msra.mxu0 %v1593
      %1597 = vmatprep.subr.bf16.mxu0 0
      %1598 = vmatpush1.bf16.msra.mxu0 0
      %1599 = vmatprep.subr.bf16.mxu0 0
      %1600 = vmatpush1.bf16.msra.mxu0 0
      %1601 = vmatprep.subr.bf16.mxu0 0
      %1602 = vmatpush1.bf16.msra.mxu0 0
      %1603 = vmatprep.subr.bf16.mxu0 0
      %1604 = vmatpush1.bf16.msra.mxu0 0
      %1605 = vmatprep.subr.bf16.mxu0 0
      %1606 = vmatpush1.bf16.msra.mxu0 0
      %1607 = vmatprep.subr.bf16.mxu0 0
      %1608 = vmatpush1.bf16.msra.mxu0 0
      %1609 = vmatprep.subr.bf16.mxu0 0
      %1610 = vmatpush1.bf16.msra.mxu0 0
      %1611 = vmatprep.subr.bf16.mxu0 0
      %1612 = vmatpush1.bf16.msra.mxu0 0
      %1613 = vmatprep.subr.bf16.mxu0 0
      %1614 = vmatpush1.bf16.msra.mxu0 0
      %1615 = vmatprep.subr.bf16.mxu0 0
      %1616 = vmatpush1.bf16.msra.mxu0 0
      %1617 = vmatprep.subr.bf16.mxu0 0
      %1618 = vmatpush1.bf16.msra.mxu0 0
      %1619 = vmatprep.subr.bf16.mxu0 0
      %1620 = vmatpush1.bf16.msra.mxu0 0
      %1621 = vmatprep.subr.bf16.mxu0 0
      %1622 = vmatpush1.bf16.msra.mxu0 0
      %1623 = vmatprep.subr.bf16.mxu0 0
      %1624 = vmatpush1.bf16.msra.mxu0 0
      %1625 = vmatprep.subr.bf16.mxu0 0
      %1626 = vmatpush1.bf16.msra.mxu0 0
      %1627 = vmatprep.mubr.bf16.mxu0 0
      %1628 = vmatmul.mubr.bf16.gmra.mrb[0].mxu0 %v1590
      %v1629 = vpop.f32.mrb[0].mxu0
      %v1630 = vadd.f32 0.0, %v1629
      %v1631 = vpop.f32.mrb[0].mxu0
      %v1632 = vpop.f32.mrb[0].mxu0
      %v1633 = vpop.f32.mrb[0].mxu0
      %1634 = vdwg.mxu0
      %v1635 = vadd.f32 %v1582, %v1630
      %v1636 = vld [vmem:[%s755] sm:$0xf]
      %1637 = vrot.lane.b32.xlu0 %v587, 118
      %v1638 = vpop.permute.xlu0 %1637
      %1639 = vrot.lane.b32.xlu0 %v588, 118
      %v1640 = vpop.permute.xlu0 %1639
      %v1641 = vsel %vm761, %v1638, %v1640
      %v1643 = vsel %vm330, %v1636, 0
      %v1646 = vsel %vm334, %v1641, 0
      %1648 = vmatprep.subr.bf16.mxu0 0
      %1649 = vmatpush1.bf16.msra.mxu0 %v1646
      %1650 = vmatprep.subr.bf16.mxu0 0
      %1651 = vmatpush1.bf16.msra.mxu0 0
      %1652 = vmatprep.subr.bf16.mxu0 0
      %1653 = vmatpush1.bf16.msra.mxu0 0
      %1654 = vmatprep.subr.bf16.mxu0 0
      %1655 = vmatpush1.bf16.msra.mxu0 0
      %1656 = vmatprep.subr.bf16.mxu0 0
      %1657 = vmatpush1.bf16.msra.mxu0 0
      %1658 = vmatprep.subr.bf16.mxu0 0
      %1659 = vmatpush1.bf16.msra.mxu0 0
      %1660 = vmatprep.subr.bf16.mxu0 0
      %1661 = vmatpush1.bf16.msra.mxu0 0
      %1662 = vmatprep.subr.bf16.mxu0 0
      %1663 = vmatpush1.bf16.msra.mxu0 0
      %1664 = vmatprep.subr.bf16.mxu0 0
      %1665 = vmatpush1.bf16.msra.mxu0 0
      %1666 = vmatprep.subr.bf16.mxu0 0
      %1667 = vmatpush1.bf16.msra.mxu0 0
      %1668 = vmatprep.subr.bf16.mxu0 0
      %1669 = vmatpush1.bf16.msra.mxu0 0
      %1670 = vmatprep.subr.bf16.mxu0 0
      %1671 = vmatpush1.bf16.msra.mxu0 0
      %1672 = vmatprep.subr.bf16.mxu0 0
      %1673 = vmatpush1.bf16.msra.mxu0 0
      %1674 = vmatprep.subr.bf16.mxu0 0
      %1675 = vmatpush1.bf16.msra.mxu0 0
      %1676 = vmatprep.subr.bf16.mxu0 0
      %1677 = vmatpush1.bf16.msra.mxu0 0
      %1678 = vmatprep.subr.bf16.mxu0 0
      %1679 = vmatpush1.bf16.msra.mxu0 0
      %1680 = vmatprep.mubr.bf16.mxu0 0
      %1681 = vmatmul.mubr.bf16.gmra.mrb[0].mxu0 %v1643
      %v1682 = vpop.f32.mrb[0].mxu0
      %v1683 = vadd.f32 0.0, %v1682
      %v1684 = vpop.f32.mrb[0].mxu0
      %v1685 = vpop.f32.mrb[0].mxu0
      %v1686 = vpop.f32.mrb[0].mxu0
      %1687 = vdwg.mxu0
      %v1688 = vadd.f32 %v1635, %v1683
      %v1689 = vld [vmem:[#allocation2] sm:$0xff]
      %v1690 = vadd.f32 %v1689, %v1688
      %1691 = vst [vmem:[#allocation2] sm:$0xff] %v1690
      %v1692 = vmul.f32 %v1688, %v1688
      %v1693 = vmul.f32 %v1692, %v816
      %1694 = vadd.xlane.f32.xlu0 %v1693
      %v1695 = vpop.xlane.xlu0 %1694
      %v1696 = vadd.f32 %v1261, %v1695
      %v1697 = vld [vmem:[%s1] sm:$0xf]
      %v1698 = vld [vmem:[%s328] sm:$0xf]
      %v1700 = vsel %vm330, %v1698, 0
      %1702 = vmatprep.subr.bf16.mxu0 0
      %1703 = vmatpush1.bf16.msra.mxu0 %v598
      %1704 = vmatprep.subr.bf16.mxu0 0
      %1705 = vmatpush1.bf16.msra.mxu0 0
      %1706 = vmatprep.subr.bf16.mxu0 0
      %1707 = vmatpush1.bf16.msra.mxu0 0
      %1708 = vmatprep.subr.bf16.mxu0 0
      %1709 = vmatpush1.bf16.msra.mxu0 0
      %1710 = vmatprep.subr.bf16.mxu0 0
      %1711 = vmatpush1.bf16.msra.mxu0 0
      %1712 = vmatprep.subr.bf16.mxu0 0
      %1713 = vmatpush1.bf16.msra.mxu0 0
      %1714 = vmatprep.subr.bf16.mxu0 0
      %1715 = vmatpush1.bf16.msra.mxu0 0
      %1716 = vmatprep.subr.bf16.mxu0 0
      %1717 = vmatpush1.bf16.msra.mxu0 0
      %1718 = vmatprep.subr.bf16.mxu0 0
      %1719 = vmatpush1.bf16.msra.mxu0 0
      %1720 = vmatprep.subr.bf16.mxu0 0
      %1721 = vmatpush1.bf16.msra.mxu0 0
      %1722 = vmatprep.subr.bf16.mxu0 0
      %1723 = vmatpush1.bf16.msra.mxu0 0
      %1724 = vmatprep.subr.bf16.mxu0 0
      %1725 = vmatpush1.bf16.msra.mxu0 0
      %1726 = vmatprep.subr.bf16.mxu0 0
      %1727 = vmatpush1.bf16.msra.mxu0 0
      %1728 = vmatprep.subr.bf16.mxu0 0
      %1729 = vmatpush1.bf16.msra.mxu0 0
      %1730 = vmatprep.subr.bf16.mxu0 0
      %1731 = vmatpush1.bf16.msra.mxu0 0
      %1732 = vmatprep.subr.bf16.mxu0 0
      %1733 = vmatpush1.bf16.msra.mxu0 0
      %1734 = vmatprep.mubr.bf16.mxu0 0
      %1735 = vmatmul.mubr.bf16.gmra.mrb[0].mxu0 %v1700
      %v1736 = vpop.f32.mrb[0].mxu0
      %v1737 = vadd.f32 0.0, %v1736
      %v1738 = vpop.f32.mrb[0].mxu0
      %v1739 = vpop.f32.mrb[0].mxu0
      %v1740 = vpop.f32.mrb[0].mxu0
      %1741 = vdwg.mxu0
      %v1743 = vsel %vm330, %v1697, 0
      %1745 = vmatprep.subr.bf16.mxu0 0
      %1746 = vmatpush1.bf16.msra.mxu0 %v539
      %1747 = vmatprep.subr.bf16.mxu0 0
      %1748 = vmatpush1.bf16.msra.mxu0 0
      %1749 = vmatprep.subr.bf16.mxu0 0
      %1750 = vmatpush1.bf16.msra.mxu0 0
      %1751 = vmatprep.subr.bf16.mxu0 0
      %1752 = vmatpush1.bf16.msra.mxu0 0
      %1753 = vmatprep.subr.bf16.mxu0 0
      %1754 = vmatpush1.bf16.msra.mxu0 0
      %1755 = vmatprep.subr.bf16.mxu0 0
      %1756 = vmatpush1.bf16.msra.mxu0 0
      %1757 = vmatprep.subr.bf16.mxu0 0
      %1758 = vmatpush1.bf16.msra.mxu0 0
      %1759 = vmatprep.subr.bf16.mxu0 0
      %1760 = vmatpush1.bf16.msra.mxu0 0
      %1761 = vmatprep.subr.bf16.mxu0 0
      %1762 = vmatpush1.bf16.msra.mxu0 0
      %1763 = vmatprep.subr.bf16.mxu0 0
      %1764 = vmatpush1.bf16.msra.mxu0 0
      %1765 = vmatprep.subr.bf16.mxu0 0
      %1766 = vmatpush1.bf16.msra.mxu0 0
      %1767 = vmatprep.subr.bf16.mxu0 0
      %1768 = vmatpush1.bf16.msra.mxu0 0
      %1769 = vmatprep.subr.bf16.mxu0 0
      %1770 = vmatpush1.bf16.msra.mxu0 0
      %1771 = vmatprep.subr.bf16.mxu0 0
      %1772 = vmatpush1.bf16.msra.mxu0 0
      %1773 = vmatprep.subr.bf16.mxu0 0
      %1774 = vmatpush1.bf16.msra.mxu0 0
      %1775 = vmatprep.subr.bf16.mxu0 0
      %1776 = vmatpush1.bf16.msra.mxu0 0
      %1777 = vmatprep.mubr.bf16.mxu0 0
      %1778 = vmatmul.mubr.bf16.gmra.mrb[0].mxu0 %v1743
      %v1779 = vpop.f32.mrb[0].mxu0
      %v1780 = vadd.f32 %v1737, %v1779
      %v1781 = vpop.f32.mrb[0].mxu0
      %v1782 = vpop.f32.mrb[0].mxu0
      %v1783 = vpop.f32.mrb[0].mxu0
      %1784 = vdwg.mxu0
      %v1785 = vld [vmem:[%s424] sm:$0xf]
      %v1787 = vsel %vm330, %v1785, 0
      %1789 = vmatprep.subr.bf16.mxu0 0
      %1790 = vmatpush1.bf16.msra.mxu0 %v1068
      %1791 = vmatprep.subr.bf16.mxu0 0
      %1792 = vmatpush1.bf16.msra.mxu0 0
      %1793 = vmatprep.subr.bf16.mxu0 0
      %1794 = vmatpush1.bf16.msra.mxu0 0
      %1795 = vmatprep.subr.bf16.mxu0 0
      %1796 = vmatpush1.bf16.msra.mxu0 0
      %1797 = vmatprep.subr.bf16.mxu0 0
      %1798 = vmatpush1.bf16.msra.mxu0 0
      %1799 = vmatprep.subr.bf16.mxu0 0
      %1800 = vmatpush1.bf16.msra.mxu0 0
      %1801 = vmatprep.subr.bf16.mxu0 0
      %1802 = vmatpush1.bf16.msra.mxu0 0
      %1803 = vmatprep.subr.bf16.mxu0 0
      %1804 = vmatpush1.bf16.msra.mxu0 0
      %1805 = vmatprep.subr.bf16.mxu0 0
      %1806 = vmatpush1.bf16.msra.mxu0 0
      %1807 = vmatprep.subr.bf16.mxu0 0
      %1808 = vmatpush1.bf16.msra.mxu0 0
      %1809 = vmatprep.subr.bf16.mxu0 0
      %1810 = vmatpush1.bf16.msra.mxu0 0
      %1811 = vmatprep.subr.bf16.mxu0 0
      %1812 = vmatpush1.bf16.msra.mxu0 0
      %1813 = vmatprep.subr.bf16.mxu0 0
      %1814 = vmatpush1.bf16.msra.mxu0 0
      %1815 = vmatprep.subr.bf16.mxu0 0
      %1816 = vmatpush1.bf16.msra.mxu0 0
      %1817 = vmatprep.subr.bf16.mxu0 0
      %1818 = vmatpush1.bf16.msra.mxu0 0
      %1819 = vmatprep.subr.bf16.mxu0 0
      %1820 = vmatpush1.bf16.msra.mxu0 0
      %1821 = vmatprep.mubr.bf16.mxu0 0
      %1822 = vmatmul.mubr.bf16.gmra.mrb[0].mxu0 %v1787
      %v1823 = vpop.f32.mrb[0].mxu0
      %v1824 = vadd.f32 0.0, %v1823
      %v1825 = vpop.f32.mrb[0].mxu0
      %v1826 = vpop.f32.mrb[0].mxu0
      %v1827 = vpop.f32.mrb[0].mxu0
      %1828 = vdwg.mxu0
      %v1829 = vadd.f32 %v1780, %v1824
      %v1830 = vld [vmem:[%s484] sm:$0xf]
      %v1832 = vsel %vm330, %v1830, 0
      %1834 = vmatprep.subr.bf16.mxu0 0
      %1835 = vmatpush1.bf16.msra.mxu0 %v712
      %1836 = vmatprep.subr.bf16.mxu0 0
      %1837 = vmatpush1.bf16.msra.mxu0 0
      %1838 = vmatprep.subr.bf16.mxu0 0
      %1839 = vmatpush1.bf16.msra.mxu0 0
      %1840 = vmatprep.subr.bf16.mxu0 0
      %1841 = vmatpush1.bf16.msra.mxu0 0
      %1842 = vmatprep.subr.bf16.mxu0 0
      %1843 = vmatpush1.bf16.msra.mxu0 0
      %1844 = vmatprep.subr.bf16.mxu0 0
      %1845 = vmatpush1.bf16.msra.mxu0 0
      %1846 = vmatprep.subr.bf16.mxu0 0
      %1847 = vmatpush1.bf16.msra.mxu0 0
      %1848 = vmatprep.subr.bf16.mxu0 0
      %1849 = vmatpush1.bf16.msra.mxu0 0
      %1850 = vmatprep.subr.bf16.mxu0 0
      %1851 = vmatpush1.bf16.msra.mxu0 0
      %1852 = vmatprep.subr.bf16.mxu0 0
      %1853 = vmatpush1.bf16.msra.mxu0 0
      %1854 = vmatprep.subr.bf16.mxu0 0
      %1855 = vmatpush1.bf16.msra.mxu0 0
      %1856 = vmatprep.subr.bf16.mxu0 0
      %1857 = vmatpush1.bf16.msra.mxu0 0
      %1858 = vmatprep.subr.bf16.mxu0 0
      %1859 = vmatpush1.bf16.msra.mxu0 0
      %1860 = vmatprep.subr.bf16.mxu0 0
      %1861 = vmatpush1.bf16.msra.mxu0 0
      %1862 = vmatprep.subr.bf16.mxu0 0
      %1863 = vmatpush1.bf16.msra.mxu0 0
      %1864 = vmatprep.subr.bf16.mxu0 0
      %1865 = vmatpush1.bf16.msra.mxu0 0
      %1866 = vmatprep.mubr.bf16.mxu0 0
      %1867 = vmatmul.mubr.bf16.gmra.mrb[0].mxu0 %v1832
      %v1868 = vpop.f32.mrb[0].mxu0
      %v1869 = vadd.f32 0.0, %v1868
      %v1870 = vpop.f32.mrb[0].mxu0
      %v1871 = vpop.f32.mrb[0].mxu0
      %v1872 = vpop.f32.mrb[0].mxu0
      %1873 = vdwg.mxu0
      %v1874 = vadd.f32 %v1829, %v1869
      %v1875 = vld [vmem:[%s533] sm:$0xf]
      %v1877 = vsel %vm330, %v1875, 0
      %1879 = vmatprep.subr.bf16.mxu0 0
      %1880 = vmatpush1.bf16.msra.mxu0 %v767
      %1881 = vmatprep.subr.bf16.mxu0 0
      %1882 = vmatpush1.bf16.msra.mxu0 0
      %1883 = vmatprep.subr.bf16.mxu0 0
      %1884 = vmatpush1.bf16.msra.mxu0 0
      %1885 = vmatprep.subr.bf16.mxu0 0
      %1886 = vmatpush1.bf16.msra.mxu0 0
      %1887 = vmatprep.subr.bf16.mxu0 0
      %1888 = vmatpush1.bf16.msra.mxu0 0
      %1889 = vmatprep.subr.bf16.mxu0 0
      %1890 = vmatpush1.bf16.msra.mxu0 0
      %1891 = vmatprep.subr.bf16.mxu0 0
      %1892 = vmatpush1.bf16.msra.mxu0 0
      %1893 = vmatprep.subr.bf16.mxu0 0
      %1894 = vmatpush1.bf16.msra.mxu0 0
      %1895 = vmatprep.subr.bf16.mxu0 0
      %1896 = vmatpush1.bf16.msra.mxu0 0
      %1897 = vmatprep.subr.bf16.mxu0 0
      %1898 = vmatpush1.bf16.msra.mxu0 0
      %1899 = vmatprep.subr.bf16.mxu0 0
      %1900 = vmatpush1.bf16.msra.mxu0 0
      %1901 = vmatprep.subr.bf16.mxu0 0
      %1902 = vmatpush1.bf16.msra.mxu0 0
      %1903 = vmatprep.subr.bf16.mxu0 0
      %1904 = vmatpush1.bf16.msra.mxu0 0
      %1905 = vmatprep.subr.bf16.mxu0 0
      %1906 = vmatpush1.bf16.msra.mxu0 0
      %1907 = vmatprep.subr.bf16.mxu0 0
      %1908 = vmatpush1.bf16.msra.mxu0 0
      %1909 = vmatprep.subr.bf16.mxu0 0
      %1910 = vmatpush1.bf16.msra.mxu0 0
      %1911 = vmatprep.mubr.bf16.mxu0 0
      %1912 = vmatmul.mubr.bf16.gmra.mrb[0].mxu0 %v1877
      %v1913 = vpop.f32.mrb[0].mxu0
      %v1914 = vadd.f32 0.0, %v1913
      %v1915 = vpop.f32.mrb[0].mxu0
      %v1916 = vpop.f32.mrb[0].mxu0
      %v1917 = vpop.f32.mrb[0].mxu0
      %1918 = vdwg.mxu0
      %v1919 = vadd.f32 %v1874, %v1914
      %v1920 = vld [vmem:[%s582] sm:$0xf]
      %v1922 = vsel %vm330, %v1920, 0
      %1924 = vmatprep.subr.bf16.mxu0 0
      %1925 = vmatpush1.bf16.msra.mxu0 %v1211
      %1926 = vmatprep.subr.bf16.mxu0 0
      %1927 = vmatpush1.bf16.msra.mxu0 0
      %1928 = vmatprep.subr.bf16.mxu0 0
      %1929 = vmatpush1.bf16.msra.mxu0 0
      %1930 = vmatprep.subr.bf16.mxu0 0
      %1931 = vmatpush1.bf16.msra.mxu0 0
      %1932 = vmatprep.subr.bf16.mxu0 0
      %1933 = vmatpush1.bf16.msra.mxu0 0
      %1934 = vmatprep.subr.bf16.mxu0 0
      %1935 = vmatpush1.bf16.msra.mxu0 0
      %1936 = vmatprep.subr.bf16.mxu0 0
      %1937 = vmatpush1.bf16.msra.mxu0 0
      %1938 = vmatprep.subr.bf16.mxu0 0
      %1939 = vmatpush1.bf16.msra.mxu0 0
      %1940 = vmatprep.subr.bf16.mxu0 0
      %1941 = vmatpush1.bf16.msra.mxu0 0
      %1942 = vmatprep.subr.bf16.mxu0 0
      %1943 = vmatpush1.bf16.msra.mxu0 0
      %1944 = vmatprep.subr.bf16.mxu0 0
      %1945 = vmatpush1.bf16.msra.mxu0 0
      %1946 = vmatprep.subr.bf16.mxu0 0
      %1947 = vmatpush1.bf16.msra.mxu0 0
      %1948 = vmatprep.subr.bf16.mxu0 0
      %1949 = vmatpush1.bf16.msra.mxu0 0
      %1950 = vmatprep.subr.bf16.mxu0 0
      %1951 = vmatpush1.bf16.msra.mxu0 0
      %1952 = vmatprep.subr.bf16.mxu0 0
      %1953 = vmatpush1.bf16.msra.mxu0 0
      %1954 = vmatprep.subr.bf16.mxu0 0
      %1955 = vmatpush1.bf16.msra.mxu0 0
      %1956 = vmatprep.mubr.bf16.mxu0 0
      %1957 = vmatmul.mubr.bf16.gmra.mrb[0].mxu0 %v1922
      %v1958 = vpop.f32.mrb[0].mxu0
      %v1959 = vadd.f32 0.0, %v1958
      %v1960 = vpop.f32.mrb[0].mxu0
      %v1961 = vpop.f32.mrb[0].mxu0
      %v1962 = vpop.f32.mrb[0].mxu0
      %1963 = vdwg.mxu0
      %v1964 = vadd.f32 %v1919, %v1959
      %v1965 = vld [vmem:[%s641] sm:$0xf]
      %v1967 = vsel %vm330, %v1965, 0
      %1969 = vmatprep.subr.bf16.mxu0 0
      %1970 = vmatpush1.bf16.msra.mxu0 %v1593
      %1971 = vmatprep.subr.bf16.mxu0 0
      %1972 = vmatpush1.bf16.msra.mxu0 0
      %1973 = vmatprep.subr.bf16.mxu0 0
      %1974 = vmatpush1.bf16.msra.mxu0 0
      %1975 = vmatprep.subr.bf16.mxu0 0
      %1976 = vmatpush1.bf16.msra.mxu0 0
      %1977 = vmatprep.subr.bf16.mxu0 0
      %1978 = vmatpush1.bf16.msra.mxu0 0
      %1979 = vmatprep.subr.bf16.mxu0 0
      %1980 = vmatpush1.bf16.msra.mxu0 0
      %1981 = vmatprep.subr.bf16.mxu0 0
      %1982 = vmatpush1.bf16.msra.mxu0 0
      %1983 = vmatprep.subr.bf16.mxu0 0
      %1984 = vmatpush1.bf16.msra.mxu0 0
      %1985 = vmatprep.subr.bf16.mxu0 0
      %1986 = vmatpush1.bf16.msra.mxu0 0
      %1987 = vmatprep.subr.bf16.mxu0 0
      %1988 = vmatpush1.bf16.msra.mxu0 0
      %1989 = vmatprep.subr.bf16.mxu0 0
      %1990 = vmatpush1.bf16.msra.mxu0 0
      %1991 = vmatprep.subr.bf16.mxu0 0
      %1992 = vmatpush1.bf16.msra.mxu0 0
      %1993 = vmatprep.subr.bf16.mxu0 0
      %1994 = vmatpush1.bf16.msra.mxu0 0
      %1995 = vmatprep.subr.bf16.mxu0 0
      %1996 = vmatpush1.bf16.msra.mxu0 0
      %1997 = vmatprep.subr.bf16.mxu0 0
      %1998 = vmatpush1.bf16.msra.mxu0 0
      %1999 = vmatprep.subr.bf16.mxu0 0
      %2000 = vmatpush1.bf16.msra.mxu0 0
      %2001 = vmatprep.mubr.bf16.mxu0 0
      %2002 = vmatmul.mubr.bf16.gmra.mrb[0].mxu0 %v1967
      %v2003 = vpop.f32.mrb[0].mxu0
      %v2004 = vadd.f32 0.0, %v2003
      %v2005 = vpop.f32.mrb[0].mxu0
      %v2006 = vpop.f32.mrb[0].mxu0
      %v2007 = vpop.f32.mrb[0].mxu0
      %2008 = vdwg.mxu0
      %v2009 = vadd.f32 %v1964, %v2004
      %v2010 = vld [vmem:[%s696] sm:$0xf]
      %v2012 = vsel %vm330, %v2010, 0
      %2014 = vmatprep.subr.bf16.mxu0 0
      %2015 = vmatpush1.bf16.msra.mxu0 %v1646
      %2016 = vmatprep.subr.bf16.mxu0 0
      %2017 = vmatpush1.bf16.msra.mxu0 0
      %2018 = vmatprep.subr.bf16.mxu0 0
      %2019 = vmatpush1.bf16.msra.mxu0 0
      %2020 = vmatprep.subr.bf16.mxu0 0
      %2021 = vmatpush1.bf16.msra.mxu0 0
      %2022 = vmatprep.subr.bf16.mxu0 0
      %2023 = vmatpush1.bf16.msra.mxu0 0
      %2024 = vmatprep.subr.bf16.mxu0 0
      %2025 = vmatpush1.bf16.msra.mxu0 0
      %2026 = vmatprep.subr.bf16.mxu0 0
      %2027 = vmatpush1.bf16.msra.mxu0 0
      %2028 = vmatprep.subr.bf16.mxu0 0
      %2029 = vmatpush1.bf16.msra.mxu0 0
      %2030 = vmatprep.subr.bf16.mxu0 0
      %2031 = vmatpush1.bf16.msra.mxu0 0
      %2032 = vmatprep.subr.bf16.mxu0 0
      %2033 = vmatpush1.bf16.msra.mxu0 0
      %2034 = vmatprep.subr.bf16.mxu0 0
      %2035 = vmatpush1.bf16.msra.mxu0 0
      %2036 = vmatprep.subr.bf16.mxu0 0
      %2037 = vmatpush1.bf16.msra.mxu0 0
      %2038 = vmatprep.subr.bf16.mxu0 0
      %2039 = vmatpush1.bf16.msra.mxu0 0
      %2040 = vmatprep.subr.bf16.mxu0 0
      %2041 = vmatpush1.bf16.msra.mxu0 0
      %2042 = vmatprep.subr.bf16.mxu0 0
      %2043 = vmatpush1.bf16.msra.mxu0 0
      %2044 = vmatprep.subr.bf16.mxu0 0
      %2045 = vmatpush1.bf16.msra.mxu0 0
      %2046 = vmatprep.mubr.bf16.mxu0 0
      %2047 = vmatmul.mubr.bf16.gmra.mrb[0].mxu0 %v2012
      %v2048 = vpop.f32.mrb[0].mxu0
      %v2049 = vadd.f32 0.0, %v2048
      %v2050 = vpop.f32.mrb[0].mxu0
      %v2051 = vpop.f32.mrb[0].mxu0
      %v2052 = vpop.f32.mrb[0].mxu0
      %2053 = vdwg.mxu0
      %v2054 = vadd.f32 %v2009, %v2049
      %v2055 = vld [vmem:[%s755] sm:$0xf]
      %2056 = vrot.lane.b32.xlu0 %v1057, 118
      %v2057 = vpop.permute.xlu0 %2056
      %2058 = vrot.lane.b32.xlu0 %v1058, 118
      %v2059 = vpop.permute.xlu0 %2058
      %v2060 = vsel %vm761, %v2057, %v2059
      %v2062 = vsel %vm330, %v2055, 0
      %v2065 = vsel %vm334, %v2060, 0
      %2067 = vmatprep.subr.bf16.mxu0 0
      %2068 = vmatpush1.bf16.msra.mxu0 %v2065
      %2069 = vmatprep.subr.bf16.mxu0 0
      %2070 = vmatpush1.bf16.msra.mxu0 0
      %2071 = vmatprep.subr.bf16.mxu0 0
      %2072 = vmatpush1.bf16.msra.mxu0 0
      %2073 = vmatprep.subr.bf16.mxu0 0
      %2074 = vmatpush1.bf16.msra.mxu0 0
      %2075 = vmatprep.subr.bf16.mxu0 0
      %2076 = vmatpush1.bf16.msra.mxu0 0
      %2077 = vmatprep.subr.bf16.mxu0 0
      %2078 = vmatpush1.bf16.msra.mxu0 0
      %2079 = vmatprep.subr.bf16.mxu0 0
      %2080 = vmatpush1.bf16.msra.mxu0 0
      %2081 = vmatprep.subr.bf16.mxu0 0
      %2082 = vmatpush1.bf16.msra.mxu0 0
      %2083 = vmatprep.subr.bf16.mxu0 0
      %2084 = vmatpush1.bf16.msra.mxu0 0
      %2085 = vmatprep.subr.bf16.mxu0 0
      %2086 = vmatpush1.bf16.msra.mxu0 0
      %2087 = vmatprep.subr.bf16.mxu0 0
      %2088 = vmatpush1.bf16.msra.mxu0 0
      %2089 = vmatprep.subr.bf16.mxu0 0
      %2090 = vmatpush1.bf16.msra.mxu0 0
      %2091 = vmatprep.subr.bf16.mxu0 0
      %2092 = vmatpush1.bf16.msra.mxu0 0
      %2093 = vmatprep.subr.bf16.mxu0 0
      %2094 = vmatpush1.bf16.msra.mxu0 0
      %2095 = vmatprep.subr.bf16.mxu0 0
      %2096 = vmatpush1.bf16.msra.mxu0 0
      %2097 = vmatprep.subr.bf16.mxu0 0
      %2098 = vmatpush1.bf16.msra.mxu0 0
      %2099 = vmatprep.mubr.bf16.mxu0 0
      %2100 = vmatmul.mubr.bf16.gmra.mrb[0].mxu0 %v2062
      %v2101 = vpop.f32.mrb[0].mxu0
      %v2102 = vadd.f32 0.0, %v2101
      %v2103 = vpop.f32.mrb[0].mxu0
      %v2104 = vpop.f32.mrb[0].mxu0
      %v2105 = vpop.f32.mrb[0].mxu0
      %2106 = vdwg.mxu0
      %v2107 = vadd.f32 %v2054, %v2102
      %v2108 = vld [vmem:[#allocation2] sm:$0xff]
      %v2109 = vadd.f32 %v2108, %v2107
      %2110 = vst [vmem:[#allocation2] sm:$0xff] %v2109
      %v2111 = vmul.f32 %v2107, %v2107
      %v2112 = vmul.f32 %v2111, %v816
      %2113 = vadd.xlane.f32.xlu0 %v2112
      %v2114 = vpop.xlane.xlu0 %2113
      %v2115 = vadd.f32 %v1696, %v2114
      %v2116 = vld [vmem:[#allocation2] sm:$0xff]
      %v2117 = vmul.f32 %v2116, %v816
      %2118 = vadd.xlane.f32.xlu0 %v2117
      %v2119 = vpop.xlane.xlu0 %2118
      %vm2120 = vcmask 7168
      %2121 = vst.msk [vmem:[%s313] sm:$0xff] %vm2120, %v2119
      %2122 = vst.msk [vmem:[%s320] sm:$0xff] %vm2120, %v2115
      %v2123 = vmul.f32 %v2116, 0.25
      %v2124 = vld [vmem:[%s2] sm:$0xff]
      %2126 = vset.pattern.permute.xlu0 0
      %2127 = vperm.xlu0 %2126, %v2124
      %v2128 = vpop.permute.xlu0 %2127
      %v2130 = vadd.f32 %v2123, %v2128
      %v2131 = vpack.c.bf16 %v2130, %v2130
      %2132 = vst [vmem:[%s306] sm:$0xf] %v2131
      %p2133 = scmp.lt.s32.totalorder %s22, 1
      %s2134 = scalar_select %p2133, %s22, 1
      %p2135 = scmp.lt.s32.totalorder %s23, 0
      %s2136 = scalar_select %p2135, %s23, 0
      %s2137 = sadd.s32 %s2136, %s2134
      %s2138 = smul.addr %s2137, 4
      %s2139 = scalar_lea.vmem %s4, %s2138
      %p2140 = scmp.lt.s32.totalorder %s22, 1
      %s2141 = scalar_select %p2140, %s22, 1
      %p2142 = scmp.lt.s32.totalorder %s23, 0
      %s2143 = scalar_select %p2142, %s23, 0
      %s2144 = sadd.s32 %s2143, %s2141
      %s2145 = smul.addr %s2144, 8
      %s2146 = scalar_lea.vmem %s5, %s2145
      %p2147 = scmp.lt.s32.totalorder %s22, 1
      %s2148 = scalar_select %p2147, %s22, 1
      %p2149 = scmp.lt.s32.totalorder %s23, 0
      %s2150 = scalar_select %p2149, %s23, 0
      %s2151 = sadd.s32 %s2150, %s2148
      %s2152 = smul.addr %s2151, 8
      %s2153 = scalar_lea.vmem %s6, %s2152
      // Predicated region
      $region37: #{conv_block_bbox.2} parent=35 // pred_check
        %p2154 = pneg %p141
      $region38: #{conv_block_bbox.2} parent=35 // pred_check_branch
        %2156 = sbr.rel (%p2154) target = $region40
      $region39: #{conv_block_bbox.2} parent=35 // pred_region
        _
      $region40: #{conv_block_bbox.2} parent=35 // pred_fallthru
        _
      // Predicated region
      $region41: #{conv_block_bbox.2} parent=35 // pred_check
        %p2157 = pneg %p169
      $region42: #{conv_block_bbox.2} parent=35 // pred_check_branch
        %2159 = sbr.rel (%p2157) target = $region44
      $region43: #{conv_block_bbox.2} parent=35 // pred_region
        _
      $region44: #{conv_block_bbox.2} parent=35 // pred_fallthru
        _
      // Predicated region
      $region45: #{conv_block_bbox.2} parent=35 // pred_check
        %p2160 = pneg %p197
      $region46: #{conv_block_bbox.2} parent=35 // pred_check_branch
        %2162 = sbr.rel (%p2160) target = $region48
      $region47: #{conv_block_bbox.2} parent=35 // pred_region
        _
      $region48: #{conv_block_bbox.2} parent=35 // pred_fallthru
        _
    $region36: #{conv_block_bbox.2} parent=5 // pred_fallthru
      _
    %p2163 = scmp.le.s32.totalorder 2, %s13
    // Predicated region
    $region49: #{conv_block_bbox.2} parent=5 // pred_check
      %p2164 = pneg %p2163
    $region50: #{conv_block_bbox.2} parent=5 // pred_check_branch
      %2166 = sbr.rel (%p2164) target = $region52
    $region51: #{conv_block_bbox.2} parent=5 // pred_region
      %s2167 = ssub.s32 %s13, 2
      // Predicated region
      $region53: #{conv_block_bbox.2} parent=51 // pred_check
        %p2168 = pneg %p147
      $region54: #{conv_block_bbox.2} parent=51 // pred_check_branch
        %2170 = sbr.rel (%p2168) target = $region56
      $region55: #{conv_block_bbox.2} parent=51 // pred_region
        %p2171 = scmp.lt.s32.totalorder %s24, 1
        %s2172 = scalar_select %p2171, %s24, 1
        %p2173 = scmp.lt.s32.totalorder %s25, 0
        %s2174 = scalar_select %p2173, %s25, 0
        %s2175 = sadd.s32 %s2174, %s2172
        %s2176 = smul.addr %s2175, 4
        %s2177 = scalar_lea.vmem %s4, %s2176
      $region56: #{conv_block_bbox.2} parent=51 // pred_fallthru
        _
      // Predicated region
      $region57: #{conv_block_bbox.2} parent=51 // pred_check
        %p2178 = pneg %p175
      $region58: #{conv_block_bbox.2} parent=51 // pred_check_branch
        %2180 = sbr.rel (%p2178) target = $region60
      $region59: #{conv_block_bbox.2} parent=51 // pred_region
        %p2181 = scmp.lt.s32.totalorder %s24, 1
        %s2182 = scalar_select %p2181, %s24, 1
        %p2183 = scmp.lt.s32.totalorder %s25, 0
        %s2184 = scalar_select %p2183, %s25, 0
        %s2185 = sadd.s32 %s2184, %s2182
        %s2186 = smul.addr %s2185, 8
        %s2187 = scalar_lea.vmem %s5, %s2186
      $region60: #{conv_block_bbox.2} parent=51 // pred_fallthru
        _
      // Predicated region
      $region61: #{conv_block_bbox.2} parent=51 // pred_check
        %p2188 = pneg %p203
      $region62: #{conv_block_bbox.2} parent=51 // pred_check_branch
        %2190 = sbr.rel (%p2188) target = $region64
      $region63: #{conv_block_bbox.2} parent=51 // pred_region
        %p2191 = scmp.lt.s32.totalorder %s24, 1
        %s2192 = scalar_select %p2191, %s24, 1
        %p2193 = scmp.lt.s32.totalorder %s25, 0
        %s2194 = scalar_select %p2193, %s25, 0
        %s2195 = sadd.s32 %s2194, %s2192
        %s2196 = smul.addr %s2195, 8
        %s2197 = scalar_lea.vmem %s6, %s2196
      $region64: #{conv_block_bbox.2} parent=51 // pred_fallthru
        _
    $region52: #{conv_block_bbox.2} parent=5 // pred_fallthru
      _
  $region6: #{conv_block_bbox.2} parent=0 // loop_footer
    %s17 = sadd.s32 1, %s13
  $region7: #{conv_block_bbox.2} parent=0 // loop_footer_branch
    %12 = sbr.rel target = $region3
  $region8: #{conv_block_bbox.2} parent=0 // loop_exit
    _

</llo_original>
